<compile_context>
chip_gen: v7x
topology: tpu7x:2x2x1
jax: 0.10.0
libtpu: 0.0.40
codegen_flags: <defaults>
</compile_context>

<pallas_src>
import jax
import jax.numpy as jnp
from jax.experimental import pallas as pl
from jax.experimental.pallas import tpu as pltpu

Z_DIM = 100
Z_PAD = 128                      # latent dim padded to a lane multiple
H1, H2, H3, OUT = 256, 512, 1024, 1024
MAX_TB = 256                     # max batch rows per grid step


def _leaky_relu(x, slope=0.2):
    return jnp.where(x > 0, x, slope * x)


def generator_kernel(z_ref,
                     w1_ref, b1_ref,
                     w2_ref, b2_ref,
                     w3_ref, b3_ref,
                     w4_ref, b4_ref,
                     o_ref):
    # Full 4-layer MLP on one (TB, Z_PAD) batch tile. Weights are bf16,
    # VMEM-resident and single-buffered; matmuls run on the MXU in bf16 with
    # f32 accumulation; bias add, LeakyReLU and tanh are done in f32 (VPU/EUP).
    x = z_ref[...].astype(jnp.bfloat16)                                # (TB,128)
    h = jnp.dot(x, w1_ref[...], preferred_element_type=jnp.float32) + b1_ref[...]
    h = _leaky_relu(h)                                                 # (TB,256)
    h = jnp.dot(h.astype(jnp.bfloat16), w2_ref[...],
                preferred_element_type=jnp.float32) + b2_ref[...]
    h = _leaky_relu(h)                                                 # (TB,512)
    h = jnp.dot(h.astype(jnp.bfloat16), w3_ref[...],
                preferred_element_type=jnp.float32) + b3_ref[...]
    h = _leaky_relu(h)                                                 # (TB,1024)
    h = jnp.dot(h.astype(jnp.bfloat16), w4_ref[...],
                preferred_element_type=jnp.float32) + b4_ref[...]
    o_ref[...] = jnp.tanh(h)                                           # (TB,1024)


def _batch_tiling(batch):
    """Pick (tile_rows, padded_batch)."""
    b8 = ((batch + 7) // 8) * 8
    if b8 >= MAX_TB:
        tb = MAX_TB
        b_pad = ((batch + MAX_TB - 1) // MAX_TB) * MAX_TB
    else:
        tb = b8
        b_pad = b8
    return tb, b_pad


@jax.jit
def generator_forward(z, params):
    """z: (B, 100) f32 -> img: (B, 1, 32, 32) f32. `params` from prepare_params()."""
    w1p, b1, w2, b2, w3, b3, w4, b4 = params
    B = z.shape[0]
    tb, b_pad = _batch_tiling(B)

    # Pad latent rows (batch) and cols (100 -> 128); padded cols hit zero
    # rows of the pre-padded w1, padded rows are sliced off below.
    z_pad = jnp.pad(z.astype(jnp.float32), ((0, b_pad - B), (0, Z_PAD - Z_DIM)))

    grid = (b_pad // tb,)

    def batch_map(i):
        return (i, 0)

    def const_map(i):
        return (0, 0)

    # Weights/biases never change across the grid -> single buffer (halves
    # resident weight VMEM vs. the default double-buffer, no redundant DMA).
    def wspec(shape):
        return pl.BlockSpec(shape, const_map, pipeline_mode=pl.Buffered(1))

    out = pl.pallas_call(
        generator_kernel,
        out_shape=jax.ShapeDtypeStruct((b_pad, OUT), jnp.float32),
        grid_spec=pltpu.PrefetchScalarGridSpec(
            num_scalar_prefetch=0,
            grid=grid,
            in_specs=[
                pl.BlockSpec((tb, Z_PAD), batch_map),     # z tile (f32)
                wspec((Z_PAD, H1)), wspec((1, H1)),       # w1 (bf16), b1 (f32)
                wspec((H1, H2)),    wspec((1, H2)),       # w2, b2
                wspec((H2, H3)),    wspec((1, H3)),       # w3, b3
                wspec((H3, OUT)),   wspec((1, OUT)),      # w4, b4
            ],
            out_specs=pl.BlockSpec((tb, OUT), batch_map),
        ),
        compiler_params=pltpu.CompilerParams(
            dimension_semantics=("parallel",),
            vmem_limit_bytes=48 * 1024 * 1024,
        ),
    )(z_pad, w1p, b1, w2, b2, w3, b3, w4, b4)

    return out[:B].reshape(B, 1, 32, 32)   # matches img.view(B, 1, 32, 32)


def init_params_f32(key):
    """Synthetic f32 parameters, same shapes/init scheme as the nn.Linear layers.

    Weights stored as (in_features, out_features) == PyTorch W.T.
    """
    ks = jax.random.split(key, 8)

    def lin(kw, kb, fan_in, fan_out):
        bound = 1.0 / (fan_in ** 0.5)
        w = jax.random.uniform(kw, (fan_in, fan_out), jnp.float32, -bound, bound)
        b = jax.random.uniform(kb, (1, fan_out), jnp.float32, -bound, bound)
        return w, b

    w1, b1 = lin(ks[0], ks[1], Z_DIM, H1)
    w2, b2 = lin(ks[2], ks[3], H1, H2)
    w3, b3 = lin(ks[4], ks[5], H2, H3)
    w4, b4 = lin(ks[6], ks[7], H3, OUT)
    return (w1, b1, w2, b2, w3, b3, w4, b4)


def prepare_params(params_f32):
    """One-time preprocessing: pad w1 rows 100->128 and cast weights to bf16."""
    w1, b1, w2, b2, w3, b3, w4, b4 = params_f32
    w1p = (jnp.zeros((Z_PAD, H1), jnp.bfloat16)
           .at[:Z_DIM, :].set(w1.astype(jnp.bfloat16)))
    return (w1p, b1,
            w2.astype(jnp.bfloat16), b2,
            w3.astype(jnp.bfloat16), b3,
            w4.astype(jnp.bfloat16), b4)


def reference_forward_f32(z, params_f32):
    """Plain-JAX f32 forward == the PyTorch module math."""
    w1, b1, w2, b2, w3, b3, w4, b4 = params_f32
    h = z @ w1 + b1
    h = jnp.where(h > 0, h, 0.2 * h)
    h = h @ w2 + b2
    h = jnp.where(h > 0, h, 0.2 * h)
    h = h @ w3 + b3
    h = jnp.where(h > 0, h, 0.2 * h)
    return jnp.tanh(h @ w4 + b4).reshape(z.shape[0], 1, 32, 32)


def reference_forward_bf16(z, kernel_params):
    """Plain-JAX forward using the exact bf16 weights/casts the kernel uses."""
    w1p, b1, w2, b2, w3, b3, w4, b4 = kernel_params
    zp = jnp.pad(z, ((0, 0), (0, Z_PAD - Z_DIM))).astype(jnp.bfloat16)
    h = jnp.dot(zp, w1p, preferred_element_type=jnp.float32) + b1
    h = jnp.where(h > 0, h, 0.2 * h)
    h = jnp.dot(h.astype(jnp.bfloat16), w2, preferred_element_type=jnp.float32) + b2
    h = jnp.where(h > 0, h, 0.2 * h)
    h = jnp.dot(h.astype(jnp.bfloat16), w3, preferred_element_type=jnp.float32) + b3
    h = jnp.where(h > 0, h, 0.2 * h)
    h = jnp.dot(h.astype(jnp.bfloat16), w4, preferred_element_type=jnp.float32) + b4
    return jnp.tanh(h).reshape(z.shape[0], 1, 32, 32)


if __name__ == "__main__":
    key = jax.random.PRNGKey(0)
    k_param, k_z1, k_z2 = jax.random.split(key, 3)
    params_f32 = init_params_f32(k_param)
    params = prepare_params(params_f32)      # one-time: pad w1 + bf16 cast

    # --- small batch (single grid step) -------------------------------------
    B = 8
    z = jax.random.normal(k_z1, (B, Z_DIM), jnp.float32)
    img = generator_forward(z, params)
    jax.block_until_ready(img)
    assert img.shape == (B, 1, 32, 32), img.shape
    assert img.dtype == jnp.float32

    # Kernel matches a plain-JAX forward with the same bf16 weights ...
    ref_bf16 = reference_forward_bf16(z, params)
    assert jnp.allclose(img, ref_bf16, atol=5e-3, rtol=5e-3), \
        float(jnp.max(jnp.abs(img - ref_bf16)))
    # ... and stays close to the full-f32 PyTorch-equivalent math
    # (loose tolerance because weights are bf16 in the kernel).
    ref_f32 = reference_forward_f32(z, params_f32)
    assert jnp.allclose(img, ref_f32, atol=6e-2, rtol=6e-2), \
        float(jnp.max(jnp.abs(img - ref_f32)))

    # --- larger batch exercises the TB=256 multi-tile grid path --------------
    B2 = 300
    z2 = jax.random.normal(k_z2, (B2, Z_DIM), jnp.float32)
    img2 = generator_forward(z2, params)
    jax.block_until_ready(img2)
    assert img2.shape == (B2, 1, 32, 32), img2.shape
    ref2 = reference_forward_bf16(z2, params)
    assert jnp.allclose(img2, ref2, atol=5e-3, rtol=5e-3), \
        float(jnp.max(jnp.abs(img2 - ref2)))

    print("KERNEL_OK")
</pallas_src>

<mosaic_0001>
module attributes {stable_mosaic.version = 11 : i64} {
  func.func @generator_kernel(%arg0: i32, %arg1: memref<8x128xf32, #tpu.memory_space<vmem>>, %arg2: memref<128x256xbf16, #tpu.memory_space<vmem>>, %arg3: memref<1x256xf32, #tpu.memory_space<vmem>>, %arg4: memref<256x512xbf16, #tpu.memory_space<vmem>>, %arg5: memref<1x512xf32, #tpu.memory_space<vmem>>, %arg6: memref<512x1024xbf16, #tpu.memory_space<vmem>>, %arg7: memref<1x1024xf32, #tpu.memory_space<vmem>>, %arg8: memref<1024x1024xbf16, #tpu.memory_space<vmem>>, %arg9: memref<1x1024xf32, #tpu.memory_space<vmem>>, %arg10: memref<8x1024xf32, #tpu.memory_space<vmem>>) attributes {dimension_semantics = [#tpu.dimension_semantics<parallel>], iteration_bounds = array<i64: 1>, scalar_prefetch = 0 : i64, scratch_operands = 0 : i64, tpu.core_type = #tpu.core_type<tc>, window_params = [{transform_indices = @transform_0, window_bounds = array<i64: 8, 128>}, {pipeline_mode = #tpu.pipeline_mode<synchronous>, transform_indices = @transform_1, window_bounds = array<i64: 128, 256>}, {pipeline_mode = #tpu.pipeline_mode<synchronous>, transform_indices = @transform_2, window_bounds = array<i64: 1, 256>}, {pipeline_mode = #tpu.pipeline_mode<synchronous>, transform_indices = @transform_3, window_bounds = array<i64: 256, 512>}, {pipeline_mode = #tpu.pipeline_mode<synchronous>, transform_indices = @transform_4, window_bounds = array<i64: 1, 512>}, {pipeline_mode = #tpu.pipeline_mode<synchronous>, transform_indices = @transform_5, window_bounds = array<i64: 512, 1024>}, {pipeline_mode = #tpu.pipeline_mode<synchronous>, transform_indices = @transform_6, window_bounds = array<i64: 1, 1024>}, {pipeline_mode = #tpu.pipeline_mode<synchronous>, transform_indices = @transform_7, window_bounds = array<i64: 1024, 1024>}, {pipeline_mode = #tpu.pipeline_mode<synchronous>, transform_indices = @transform_8, window_bounds = array<i64: 1, 1024>}, {transform_indices = @transform_9, window_bounds = array<i64: 8, 1024>}]} {
    %c0 = arith.constant 0 : index
    %c0_0 = arith.constant 0 : index
    %0 = vector.load %arg1[%c0, %c0_0] : memref<8x128xf32, #tpu.memory_space<vmem>>, vector<8x128xf32>
    %1 = arith.truncf %0 : vector<8x128xf32> to vector<8x128xbf16>
    %c0_1 = arith.constant 0 : index
    %c0_2 = arith.constant 0 : index
    %2 = vector.load %arg2[%c0_1, %c0_2] : memref<128x256xbf16, #tpu.memory_space<vmem>>, vector<128x256xbf16>
    %cst = arith.constant dense<0.000000e+00> : vector<8x256xf32>
    %3 = tpu.matmul %1, %2, %cst {dimension_numbers = #tpu.dot_dimension_numbers<[1], [0], [0], [1], [0, 0, 1, 1], [], []>} : vector<8x128xbf16>, vector<128x256xbf16>, vector<8x256xf32> -> vector<8x256xf32>
    %c0_3 = arith.constant 0 : index
    %c0_4 = arith.constant 0 : index
    %4 = vector.load %arg3[%c0_3, %c0_4] : memref<1x256xf32, #tpu.memory_space<vmem>>, vector<1x256xf32>
    %5 = vector.broadcast %4 : vector<1x256xf32> to vector<8x256xf32>
    %6 = arith.addf %3, %5 : vector<8x256xf32>
    %cst_5 = arith.constant 0.000000e+00 : f32
    %7 = vector.broadcast %cst_5 : f32 to vector<8x256xf32>
    %8 = arith.cmpf ogt, %6, %7 : vector<8x256xf32>
    %cst_6 = arith.constant 2.000000e-01 : f32
    %9 = vector.broadcast %cst_6 : f32 to vector<8x256xf32>
    %10 = arith.mulf %9, %6 : vector<8x256xf32>
    %11 = arith.select %8, %6, %10 : vector<8x256xi1>, vector<8x256xf32>
    %12 = arith.truncf %11 : vector<8x256xf32> to vector<8x256xbf16>
    %c0_7 = arith.constant 0 : index
    %c0_8 = arith.constant 0 : index
    %13 = vector.load %arg4[%c0_7, %c0_8] : memref<256x512xbf16, #tpu.memory_space<vmem>>, vector<256x512xbf16>
    %cst_9 = arith.constant dense<0.000000e+00> : vector<8x512xf32>
    %14 = tpu.matmul %12, %13, %cst_9 {dimension_numbers = #tpu.dot_dimension_numbers<[1], [0], [0], [1], [0, 0, 1, 1], [], []>} : vector<8x256xbf16>, vector<256x512xbf16>, vector<8x512xf32> -> vector<8x512xf32>
    %c0_10 = arith.constant 0 : index
    %c0_11 = arith.constant 0 : index
    %15 = vector.load %arg5[%c0_10, %c0_11] : memref<1x512xf32, #tpu.memory_space<vmem>>, vector<1x512xf32>
    %16 = vector.broadcast %15 : vector<1x512xf32> to vector<8x512xf32>
    %17 = arith.addf %14, %16 : vector<8x512xf32>
    %cst_12 = arith.constant 0.000000e+00 : f32
    %18 = vector.broadcast %cst_12 : f32 to vector<8x512xf32>
    %19 = arith.cmpf ogt, %17, %18 : vector<8x512xf32>
    %cst_13 = arith.constant 2.000000e-01 : f32
    %20 = vector.broadcast %cst_13 : f32 to vector<8x512xf32>
    %21 = arith.mulf %20, %17 : vector<8x512xf32>
    %22 = arith.select %19, %17, %21 : vector<8x512xi1>, vector<8x512xf32>
    %23 = arith.truncf %22 : vector<8x512xf32> to vector<8x512xbf16>
    %c0_14 = arith.constant 0 : index
    %c0_15 = arith.constant 0 : index
    %24 = vector.load %arg6[%c0_14, %c0_15] : memref<512x1024xbf16, #tpu.memory_space<vmem>>, vector<512x1024xbf16>
    %cst_16 = arith.constant dense<0.000000e+00> : vector<8x1024xf32>
    %25 = tpu.matmul %23, %24, %cst_16 {dimension_numbers = #tpu.dot_dimension_numbers<[1], [0], [0], [1], [0, 0, 1, 1], [], []>} : vector<8x512xbf16>, vector<512x1024xbf16>, vector<8x1024xf32> -> vector<8x1024xf32>
    %c0_17 = arith.constant 0 : index
    %c0_18 = arith.constant 0 : index
    %26 = vector.load %arg7[%c0_17, %c0_18] : memref<1x1024xf32, #tpu.memory_space<vmem>>, vector<1x1024xf32>
    %27 = vector.broadcast %26 : vector<1x1024xf32> to vector<8x1024xf32>
    %28 = arith.addf %25, %27 : vector<8x1024xf32>
    %cst_19 = arith.constant 0.000000e+00 : f32
    %29 = vector.broadcast %cst_19 : f32 to vector<8x1024xf32>
    %30 = arith.cmpf ogt, %28, %29 : vector<8x1024xf32>
    %cst_20 = arith.constant 2.000000e-01 : f32
    %31 = vector.broadcast %cst_20 : f32 to vector<8x1024xf32>
    %32 = arith.mulf %31, %28 : vector<8x1024xf32>
    %33 = arith.select %30, %28, %32 : vector<8x1024xi1>, vector<8x1024xf32>
    %34 = arith.truncf %33 : vector<8x1024xf32> to vector<8x1024xbf16>
    %c0_21 = arith.constant 0 : index
    %c0_22 = arith.constant 0 : index
    %35 = vector.load %arg8[%c0_21, %c0_22] : memref<1024x1024xbf16, #tpu.memory_space<vmem>>, vector<1024x1024xbf16>
    %cst_23 = arith.constant dense<0.000000e+00> : vector<8x1024xf32>
    %36 = tpu.matmul %34, %35, %cst_23 {dimension_numbers = #tpu.dot_dimension_numbers<[1], [0], [0], [1], [0, 0, 1, 1], [], []>} : vector<8x1024xbf16>, vector<1024x1024xbf16>, vector<8x1024xf32> -> vector<8x1024xf32>
    %c0_24 = arith.constant 0 : index
    %c0_25 = arith.constant 0 : index
    %37 = vector.load %arg9[%c0_24, %c0_25] : memref<1x1024xf32, #tpu.memory_space<vmem>>, vector<1x1024xf32>
    %38 = vector.broadcast %37 : vector<1x1024xf32> to vector<8x1024xf32>
    %39 = arith.addf %36, %38 : vector<8x1024xf32>
    %40 = math.tanh %39 : vector<8x1024xf32>
    %c0_26 = arith.constant 0 : index
    %c0_27 = arith.constant 0 : index
    %41 = vector.load %arg10[%c0_26, %c0_27] : memref<8x1024xf32, #tpu.memory_space<vmem>>, vector<8x1024xf32>
    tpu.vector_store %arg10[%c0_26, %c0_27], %40 {strides = array<i32>} : memref<8x1024xf32, #tpu.memory_space<vmem>>, vector<8x1024xf32>,
    return
  }
  func.func @transform_0(%arg0: i32) -> (i32, i32) {
    %c0_i32 = arith.constant 0 : i32
    %c0_i32_0 = arith.constant 0 : i32
    return %arg0, %c0_i32 : i32, i32
  }
  func.func @transform_1(%arg0: i32) -> (i32, i32) {
    %c0_i32 = arith.constant 0 : i32
    %c0_i32_0 = arith.constant 0 : i32
    %c0_i32_1 = arith.constant 0 : i32
    return %c0_i32, %c0_i32_0 : i32, i32
  }
  func.func @transform_2(%arg0: i32) -> (i32, i32) {
    %c0_i32 = arith.constant 0 : i32
    %c0_i32_0 = arith.constant 0 : i32
    %c0_i32_1 = arith.constant 0 : i32
    return %c0_i32, %c0_i32_0 : i32, i32
  }
  func.func @transform_3(%arg0: i32) -> (i32, i32) {
    %c0_i32 = arith.constant 0 : i32
    %c0_i32_0 = arith.constant 0 : i32
    %c0_i32_1 = arith.constant 0 : i32
    return %c0_i32, %c0_i32_0 : i32, i32
  }
  func.func @transform_4(%arg0: i32) -> (i32, i32) {
    %c0_i32 = arith.constant 0 : i32
    %c0_i32_0 = arith.constant 0 : i32
    %c0_i32_1 = arith.constant 0 : i32
    return %c0_i32, %c0_i32_0 : i32, i32
  }
  func.func @transform_5(%arg0: i32) -> (i32, i32) {
    %c0_i32 = arith.constant 0 : i32
    %c0_i32_0 = arith.constant 0 : i32
    %c0_i32_1 = arith.constant 0 : i32
    return %c0_i32, %c0_i32_0 : i32, i32
  }
  func.func @transform_6(%arg0: i32) -> (i32, i32) {
    %c0_i32 = arith.constant 0 : i32
    %c0_i32_0 = arith.constant 0 : i32
    %c0_i32_1 = arith.constant 0 : i32
    return %c0_i32, %c0_i32_0 : i32, i32
  }
  func.func @transform_7(%arg0: i32) -> (i32, i32) {
    %c0_i32 = arith.constant 0 : i32
    %c0_i32_0 = arith.constant 0 : i32
    %c0_i32_1 = arith.constant 0 : i32
    return %c0_i32, %c0_i32_0 : i32, i32
  }
  func.func @transform_8(%arg0: i32) -> (i32, i32) {
    %c0_i32 = arith.constant 0 : i32
    %c0_i32_0 = arith.constant 0 : i32
    %c0_i32_1 = arith.constant 0 : i32
    return %c0_i32, %c0_i32_0 : i32, i32
  }
  func.func @transform_9(%arg0: i32) -> (i32, i32) {
    %c0_i32 = arith.constant 0 : i32
    %c0_i32_0 = arith.constant 0 : i32
    return %arg0, %c0_i32 : i32, i32
  }
}

</mosaic_0001>

<llo_original>
// kernel: generator_forward.1
$region0: #{generator_forward.1}
  #allocation0 [shape = 'u32[]', space=smem, size = 0x4, offset = 0x4, fixed_abs, tag = 'smem constant byte address 0x4 - core index']
  #allocation1 [shape = 'u32[144,128]{1,0:T(1,128)}', space=vmem, size = 0x12000, scoped, tag = 'internal scratch']
  %s0 = inlined_call_operand.vmem [shape: f32[8,128], index: 0, kind: input, shape index: {}]
  %s1 = inlined_call_operand.hbm [shape: bf16[128,256], index: 1, kind: input, shape index: {}]
  %s2 = inlined_call_operand.hbm [shape: f32[1,256], index: 2, kind: input, shape index: {}]
  %s3 = inlined_call_operand.hbm [shape: bf16[256,512], index: 3, kind: input, shape index: {}]
  %s4 = inlined_call_operand.hbm [shape: f32[1,512], index: 4, kind: input, shape index: {}]
  %s5 = inlined_call_operand.hbm [shape: bf16[512,1024], index: 5, kind: input, shape index: {}]
  %s6 = inlined_call_operand.hbm [shape: f32[1,1024], index: 6, kind: input, shape index: {}]
  %s7 = inlined_call_operand.hbm [shape: bf16[1024,1024], index: 7, kind: input, shape index: {}]
  %s8 = inlined_call_operand.hbm [shape: f32[1,1024], index: 8, kind: input, shape index: {}]
  %s9 = inlined_call_operand.vmem [shape: f32[8,1024], index: 9, kind: output, shape index: {}]
  %s10 = sld [smem:[#allocation0]]
  $region78: #{generator_forward.1} parent=0
    _
  %s12 = ssub.s32 1, %s10
  %s13 = scalar_select 0, %s12, %s10
  $region1: #{generator_forward.1} parent=0
    #allocation2 [shape = 'u8[65536]{0}', space=vmem, size = 0x10000, scoped, tag = 'input window, operand 1, single buffered']
    #allocation3 [shape = 's32[1]{0}', space=sflag, size = 0x4, scoped, tag = 'scoped memory for generator_forward.1']
    #allocation4 [shape = 'u8[1024]{0}', space=vmem, size = 0x400, scoped, tag = 'input window, operand 2, single buffered']
    #allocation5 [shape = 's32[1]{0}', space=sflag, size = 0x4, scoped, tag = 'scoped memory for generator_forward.1']
    #allocation6 [shape = 'u8[262144]{0}', space=vmem, size = 0x40000, scoped, tag = 'input window, operand 3, single buffered']
    #allocation7 [shape = 'u8[2048]{0}', space=vmem, size = 0x800, scoped, tag = 'input window, operand 4, single buffered']
    #allocation8 [shape = 's32[1]{0}', space=sflag, size = 0x4, scoped, tag = 'scoped memory for generator_forward.1']
    #allocation9 [shape = 'u8[1048576]{0}', space=vmem, size = 0x100000, scoped, tag = 'input window, operand 5, single buffered']
    #allocation10 [shape = 'u8[4096]{0}', space=vmem, size = 0x1000, scoped, tag = 'input window, operand 6, single buffered']
    #allocation11 [shape = 's32[1]{0}', space=sflag, size = 0x4, scoped, tag = 'scoped memory for generator_forward.1']
    #allocation12 [shape = 'u8[2097152]{0}', space=vmem, size = 0x200000, scoped, tag = 'input window, operand 7, single buffered']
    #allocation13 [shape = 'u8[4096]{0}', space=vmem, size = 0x1000, scoped, tag = 'input window, operand 8, single buffered']
    #allocation14 [shape = 's32[1]{0}', space=sflag, size = 0x4, scoped, tag = 'scoped memory for generator_forward.1']
    %14 = vsyncpa [#allocation3], 0
    %15 = vsyncpa [#allocation5], 0
    %16 = vsyncpa [#allocation8], 0
    %17 = vsyncpa [#allocation11], 0
    %18 = vsyncpa [#allocation14], 0
    // Predicated region
    $region2: #{generator_forward.1} parent=1 // pred_check
      _
    $region3: #{generator_forward.1} parent=1 // pred_check_branch
      %20 = sbr.rel (0) target = $region5
    $region4: #{generator_forward.1} parent=1 // pred_region
      _
    $region5: #{generator_forward.1} parent=1 // pred_fallthru
      _
    // Predicated region
    $region6: #{generator_forward.1} parent=1 // pred_check
      _
    $region7: #{generator_forward.1} parent=1 // pred_check_branch
      %22 = sbr.rel (0) target = $region9
    $region8: #{generator_forward.1} parent=1 // pred_region
      %s24 = ssub.s32 2048, 2048
      %25 = vsyncadd [#allocation3], %s24
      %s26 = sshll.u32 [#allocation2], 4
      %s27 = int_to_ptr.vmem [resolvable:$true] %s26
      %32 = dma.hbm_to_vmem [thread:$0]  %s1, 2048, %s27, [#allocation3], 128, 128, 8
    $region9: #{generator_forward.1} parent=1 // pred_fallthru
      _
    // Predicated region
    $region10: #{generator_forward.1} parent=1 // pred_check
      _
    $region11: #{generator_forward.1} parent=1 // pred_check_branch
      %34 = sbr.rel (0) target = $region13
    $region12: #{generator_forward.1} parent=1 // pred_region
      %s36 = ssub.s32 32, 32
      %37 = vsyncadd [#allocation5], %s36
      %s39 = sshll.u32 [#allocation4], 4
      %s40 = int_to_ptr.vmem [resolvable:$true] %s39
      %42 = dma.hbm_to_vmem [thread:$0]  %s2, 32, %s40, [#allocation5]
    $region13: #{generator_forward.1} parent=1 // pred_fallthru
      _
    // Predicated region
    $region14: #{generator_forward.1} parent=1 // pred_check
      _
    $region15: #{generator_forward.1} parent=1 // pred_check_branch
      %44 = sbr.rel (0) target = $region17
    $region16: #{generator_forward.1} parent=1 // pred_region
      %s46 = ssub.s32 8192, 8192
      %47 = vsyncadd [#allocation5], %s46
      %s48 = sshll.u32 [#allocation6], 4
      %s49 = int_to_ptr.vmem [resolvable:$true] %s48
      %54 = dma.hbm_to_vmem [thread:$0]  %s3, 8192, %s49, [#allocation5], 256, 256, 16
    $region17: #{generator_forward.1} parent=1 // pred_fallthru
      _
    // Predicated region
    $region18: #{generator_forward.1} parent=1 // pred_check
      _
    $region19: #{generator_forward.1} parent=1 // pred_check_branch
      %56 = sbr.rel (0) target = $region21
    $region20: #{generator_forward.1} parent=1 // pred_region
      %s58 = ssub.s32 64, 64
      %59 = vsyncadd [#allocation8], %s58
      %s61 = sshll.u32 [#allocation7], 4
      %s62 = int_to_ptr.vmem [resolvable:$true] %s61
      %64 = dma.hbm_to_vmem [thread:$0]  %s4, 64, %s62, [#allocation8]
    $region21: #{generator_forward.1} parent=1 // pred_fallthru
      _
    // Predicated region
    $region22: #{generator_forward.1} parent=1 // pred_check
      _
    $region23: #{generator_forward.1} parent=1 // pred_check_branch
      %66 = sbr.rel (0) target = $region25
    $region24: #{generator_forward.1} parent=1 // pred_region
      %s68 = ssub.s32 32768, 32768
      %69 = vsyncadd [#allocation8], %s68
      %s70 = sshll.u32 [#allocation9], 4
      %s71 = int_to_ptr.vmem [resolvable:$true] %s70
      %76 = dma.hbm_to_vmem [thread:$0]  %s5, 32768, %s71, [#allocation8], 512, 512, 32
    $region25: #{generator_forward.1} parent=1 // pred_fallthru
      _
    // Predicated region
    $region26: #{generator_forward.1} parent=1 // pred_check
      _
    $region27: #{generator_forward.1} parent=1 // pred_check_branch
      %78 = sbr.rel (0) target = $region29
    $region28: #{generator_forward.1} parent=1 // pred_region
      %s80 = ssub.s32 128, 128
      %81 = vsyncadd [#allocation11], %s80
      %s83 = sshll.u32 [#allocation10], 4
      %s84 = int_to_ptr.vmem [resolvable:$true] %s83
      %86 = dma.hbm_to_vmem [thread:$0]  %s6, 128, %s84, [#allocation11]
    $region29: #{generator_forward.1} parent=1 // pred_fallthru
      _
    // Predicated region
    $region30: #{generator_forward.1} parent=1 // pred_check
      _
    $region31: #{generator_forward.1} parent=1 // pred_check_branch
      %88 = sbr.rel (0) target = $region33
    $region32: #{generator_forward.1} parent=1 // pred_region
      %s90 = ssub.s32 65536, 65536
      %91 = vsyncadd [#allocation11], %s90
      %s92 = sshll.u32 [#allocation12], 4
      %s93 = int_to_ptr.vmem [resolvable:$true] %s92
      %98 = dma.hbm_to_vmem [thread:$0]  %s7, 65536, %s93, [#allocation11], 512, 512, 32
    $region33: #{generator_forward.1} parent=1 // pred_fallthru
      _
    // Predicated region
    $region34: #{generator_forward.1} parent=1 // pred_check
      _
    $region35: #{generator_forward.1} parent=1 // pred_check_branch
      %100 = sbr.rel (0) target = $region37
    $region36: #{generator_forward.1} parent=1 // pred_region
      %s102 = ssub.s32 128, 128
      %103 = vsyncadd [#allocation14], %s102
      %s105 = sshll.u32 [#allocation13], 4
      %s106 = int_to_ptr.vmem [resolvable:$true] %s105
      %108 = dma.hbm_to_vmem [thread:$0]  %s8, 128, %s106, [#allocation14]
    $region37: #{generator_forward.1} parent=1 // pred_fallthru
      _
    // Predicated region
    $region38: #{generator_forward.1} parent=1 // pred_check
      _
    $region39: #{generator_forward.1} parent=1 // pred_check_branch
      %110 = sbr.rel (0) target = $region41
    $region40: #{generator_forward.1} parent=1 // pred_region
      %111 = dma.done [#allocation3], 2048
    $region41: #{generator_forward.1} parent=1 // pred_fallthru
      _
    // Predicated region
    $region42: #{generator_forward.1} parent=1 // pred_check
      _
    $region43: #{generator_forward.1} parent=1 // pred_check_branch
      %113 = sbr.rel (0) target = $region45
    $region44: #{generator_forward.1} parent=1 // pred_region
      %114 = dma.done [#allocation5], 32
    $region45: #{generator_forward.1} parent=1 // pred_fallthru
      _
    // Predicated region
    $region46: #{generator_forward.1} parent=1 // pred_check
      _
    $region47: #{generator_forward.1} parent=1 // pred_check_branch
      %116 = sbr.rel (0) target = $region49
    $region48: #{generator_forward.1} parent=1 // pred_region
      %117 = dma.done [#allocation5], 8192
    $region49: #{generator_forward.1} parent=1 // pred_fallthru
      _
    // Predicated region
    $region50: #{generator_forward.1} parent=1 // pred_check
      _
    $region51: #{generator_forward.1} parent=1 // pred_check_branch
      %119 = sbr.rel (0) target = $region53
    $region52: #{generator_forward.1} parent=1 // pred_region
      %120 = dma.done [#allocation8], 64
    $region53: #{generator_forward.1} parent=1 // pred_fallthru
      _
    // Predicated region
    $region54: #{generator_forward.1} parent=1 // pred_check
      _
    $region55: #{generator_forward.1} parent=1 // pred_check_branch
      %122 = sbr.rel (0) target = $region57
    $region56: #{generator_forward.1} parent=1 // pred_region
      %123 = dma.done [#allocation8], 32768
    $region57: #{generator_forward.1} parent=1 // pred_fallthru
      _
    // Predicated region
    $region58: #{generator_forward.1} parent=1 // pred_check
      _
    $region59: #{generator_forward.1} parent=1 // pred_check_branch
      %125 = sbr.rel (0) target = $region61
    $region60: #{generator_forward.1} parent=1 // pred_region
      %126 = dma.done [#allocation11], 128
    $region61: #{generator_forward.1} parent=1 // pred_fallthru
      _
    // Predicated region
    $region62: #{generator_forward.1} parent=1 // pred_check
      _
    $region63: #{generator_forward.1} parent=1 // pred_check_branch
      %128 = sbr.rel (0) target = $region65
    $region64: #{generator_forward.1} parent=1 // pred_region
      %129 = dma.done [#allocation11], 65536
    $region65: #{generator_forward.1} parent=1 // pred_fallthru
      _
    // Predicated region
    $region66: #{generator_forward.1} parent=1 // pred_check
      _
    $region67: #{generator_forward.1} parent=1 // pred_check_branch
      %131 = sbr.rel (0) target = $region69
    $region68: #{generator_forward.1} parent=1 // pred_region
      %132 = dma.done [#allocation14], 128
    $region69: #{generator_forward.1} parent=1 // pred_fallthru
      _
    %v134 = vld [vmem:[%s0] sm:$0xff]
    %v135 = vpack.c.bf16 %v134, %v134
    %v136 = vld [vmem:[#allocation2] sm:$0xff]
    %v137 = vld [vmem:[#allocation2 + $0x8] sm:$0xff]
    %v138 = vld [vmem:[#allocation2 + $0x10] sm:$0xff]
    %v139 = vld [vmem:[#allocation2 + $0x18] sm:$0xff]
    %v140 = vld [vmem:[#allocation2 + $0x20] sm:$0xff]
    %v141 = vld [vmem:[#allocation2 + $0x28] sm:$0xff]
    %v142 = vld [vmem:[#allocation2 + $0x30] sm:$0xff]
    %v143 = vld [vmem:[#allocation2 + $0x38] sm:$0xff]
    %v144 = vld [vmem:[#allocation2 + $0x40] sm:$0xff]
    %v145 = vld [vmem:[#allocation2 + $0x48] sm:$0xff]
    %v146 = vld [vmem:[#allocation2 + $0x50] sm:$0xff]
    %v147 = vld [vmem:[#allocation2 + $0x58] sm:$0xff]
    %v148 = vld [vmem:[#allocation2 + $0x60] sm:$0xff]
    %v149 = vld [vmem:[#allocation2 + $0x68] sm:$0xff]
    %v150 = vld [vmem:[#allocation2 + $0x70] sm:$0xff]
    %v151 = vld [vmem:[#allocation2 + $0x78] sm:$0xff]
    %v152 = vld [vmem:[#allocation4] sm:$0x3]
    %v154 = vlaneseq
    %v155 = vshrl.u32 %v154, 7
    %v156 = vsub.s32 0, %v155
    %v157 = vrot.slane %v152, %v156
    %v158 = vlaneseq
    %v159 = vshrl.u32 %v158, 7
    %v160 = vsub.s32 1, %v159
    %v161 = vrot.slane %v152, %v160
    %v180 = vunpack.c.l.b16 %v136
    %v181 = vunpack.c.h.b16 %v136
    %v182 = vunpack.c.l.b16 %v137
    %v183 = vunpack.c.h.b16 %v137
    %v184 = vunpack.c.l.b16 %v138
    %v185 = vunpack.c.h.b16 %v138
    %v186 = vunpack.c.l.b16 %v139
    %v187 = vunpack.c.h.b16 %v139
    %v188 = vunpack.c.l.b16 %v140
    %v189 = vunpack.c.h.b16 %v140
    %v190 = vunpack.c.l.b16 %v141
    %v191 = vunpack.c.h.b16 %v141
    %v192 = vunpack.c.l.b16 %v142
    %v193 = vunpack.c.h.b16 %v142
    %v194 = vunpack.c.l.b16 %v143
    %v195 = vunpack.c.h.b16 %v143
    %v196 = vunpack.c.l.b16 %v144
    %v197 = vunpack.c.h.b16 %v144
    %v198 = vunpack.c.l.b16 %v145
    %v199 = vunpack.c.h.b16 %v145
    %v200 = vunpack.c.l.b16 %v146
    %v201 = vunpack.c.h.b16 %v146
    %v202 = vunpack.c.l.b16 %v147
    %v203 = vunpack.c.h.b16 %v147
    %v204 = vunpack.c.l.b16 %v148
    %v205 = vunpack.c.h.b16 %v148
    %v206 = vunpack.c.l.b16 %v149
    %v207 = vunpack.c.h.b16 %v149
    %v208 = vunpack.c.l.b16 %v150
    %v209 = vunpack.c.h.b16 %v150
    %v210 = vunpack.c.l.b16 %v151
    %v211 = vunpack.c.h.b16 %v151
    %v212 = vpack.c.b16 %v182, %v180
    %v213 = vpack.c.b16 %v183, %v181
    %v214 = vpack.c.b16 %v186, %v184
    %v215 = vpack.c.b16 %v187, %v185
    %v216 = vpack.c.b16 %v190, %v188
    %v217 = vpack.c.b16 %v191, %v189
    %v218 = vpack.c.b16 %v194, %v192
    %v219 = vpack.c.b16 %v195, %v193
    %v220 = vpack.c.b16 %v198, %v196
    %v221 = vpack.c.b16 %v199, %v197
    %v222 = vpack.c.b16 %v202, %v200
    %v223 = vpack.c.b16 %v203, %v201
    %v224 = vpack.c.b16 %v206, %v204
    %v225 = vpack.c.b16 %v207, %v205
    %v226 = vpack.c.b16 %v210, %v208
    %v227 = vpack.c.b16 %v211, %v209
    %244 = vmatprep.subr.bf16.mxu0 %v213
    %245 = vmatpush1.bf16.msra.mxu0 %v212
    %246 = vmatprep.subr.bf16.mxu0 %v215
    %247 = vmatpush1.bf16.msra.mxu0 %v214
    %248 = vmatprep.subr.bf16.mxu0 %v217
    %249 = vmatpush1.bf16.msra.mxu0 %v216
    %250 = vmatprep.subr.bf16.mxu0 %v219
    %251 = vmatpush1.bf16.msra.mxu0 %v218
    %252 = vmatprep.subr.bf16.mxu0 %v221
    %253 = vmatpush1.bf16.msra.mxu0 %v220
    %254 = vmatprep.subr.bf16.mxu0 %v223
    %255 = vmatpush1.bf16.msra.mxu0 %v222
    %256 = vmatprep.subr.bf16.mxu0 %v225
    %257 = vmatpush1.bf16.msra.mxu0 %v224
    %258 = vmatprep.subr.bf16.mxu0 %v227
    %259 = vmatpush1.bf16.msra.mxu0 %v226
    %260 = vmatprep.subr.bf16.mxu0 0
    %261 = vmatpush1.bf16.msra.mxu0 0
    %262 = vmatprep.subr.bf16.mxu0 0
    %263 = vmatpush1.bf16.msra.mxu0 0
    %264 = vmatprep.subr.bf16.mxu0 0
    %265 = vmatpush1.bf16.msra.mxu0 0
    %266 = vmatprep.subr.bf16.mxu0 0
    %267 = vmatpush1.bf16.msra.mxu0 0
    %268 = vmatprep.subr.bf16.mxu0 0
    %269 = vmatpush1.bf16.msra.mxu0 0
    %270 = vmatprep.subr.bf16.mxu0 0
    %271 = vmatpush1.bf16.msra.mxu0 0
    %272 = vmatprep.subr.bf16.mxu0 0
    %273 = vmatpush1.bf16.msra.mxu0 0
    %274 = vmatprep.subr.bf16.mxu0 0
    %275 = vmatpush1.bf16.msra.mxu0 0
    %276 = vmatprep.mubr.bf16.mxu0 0
    %277 = vmatmul.mubr.bf16.gmra.mrb[0].mxu0 %v135
    %v278 = vpop.f32.mrb[0].mxu0
    %v279 = vadd.f32 %v157, %v278
    %v280 = vpop.f32.mrb[0].mxu0
    %v281 = vadd.f32 %v161, %v280
    %v282 = vpop.f32.mrb[0].mxu0
    %v283 = vpop.f32.mrb[0].mxu0
    %284 = vdwg.mxu0
    %vm285 = vcmp.gt.f32.partialorder %v279, 0.0
    %vm286 = vcmp.gt.f32.partialorder %v281, 0.0
    %v287 = vmul.f32 %v279, 0.2
    %v288 = vmul.f32 %v281, 0.2
    %v289 = vsel %vm285, %v279, %v287
    %v290 = vsel %vm286, %v281, %v288
    %v291 = vpack.c.bf16 %v289, %v289
    %v292 = vpack.c.bf16 %v290, %v290
    %v293 = vld [vmem:[#allocation6] sm:$0xff]
    %v294 = vld [vmem:[#allocation6 + $0x8] sm:$0xff]
    %v295 = vld [vmem:[#allocation6 + $0x10] sm:$0xff]
    %v296 = vld [vmem:[#allocation6 + $0x18] sm:$0xff]
    %v297 = vld [vmem:[#allocation6 + $0x20] sm:$0xff]
    %v298 = vld [vmem:[#allocation6 + $0x28] sm:$0xff]
    %v299 = vld [vmem:[#allocation6 + $0x30] sm:$0xff]
    %v300 = vld [vmem:[#allocation6 + $0x38] sm:$0xff]
    %v301 = vld [vmem:[#allocation6 + $0x40] sm:$0xff]
    %v302 = vld [vmem:[#allocation6 + $0x48] sm:$0xff]
    %v303 = vld [vmem:[#allocation6 + $0x50] sm:$0xff]
    %v304 = vld [vmem:[#allocation6 + $0x58] sm:$0xff]
    %v305 = vld [vmem:[#allocation6 + $0x60] sm:$0xff]
    %v306 = vld [vmem:[#allocation6 + $0x68] sm:$0xff]
    %v307 = vld [vmem:[#allocation6 + $0x70] sm:$0xff]
    %v308 = vld [vmem:[#allocation6 + $0x78] sm:$0xff]
    %v309 = vld [vmem:[#allocation6 + $0x80] sm:$0xff]
    %v310 = vld [vmem:[#allocation6 + $0x88] sm:$0xff]
    %v311 = vld [vmem:[#allocation6 + $0x90] sm:$0xff]
    %v312 = vld [vmem:[#allocation6 + $0x98] sm:$0xff]
    %v313 = vld [vmem:[#allocation6 + $0xa0] sm:$0xff]
    %v314 = vld [vmem:[#allocation6 + $0xa8] sm:$0xff]
    %v315 = vld [vmem:[#allocation6 + $0xb0] sm:$0xff]
    %v316 = vld [vmem:[#allocation6 + $0xb8] sm:$0xff]
    %v317 = vld [vmem:[#allocation6 + $0xc0] sm:$0xff]
    %v318 = vld [vmem:[#allocation6 + $0xc8] sm:$0xff]
    %v319 = vld [vmem:[#allocation6 + $0xd0] sm:$0xff]
    %v320 = vld [vmem:[#allocation6 + $0xd8] sm:$0xff]
    %v321 = vld [vmem:[#allocation6 + $0xe0] sm:$0xff]
    %v322 = vld [vmem:[#allocation6 + $0xe8] sm:$0xff]
    %v323 = vld [vmem:[#allocation6 + $0xf0] sm:$0xff]
    %v324 = vld [vmem:[#allocation6 + $0xf8] sm:$0xff]
    %v325 = vld [vmem:[#allocation6 + $0x100] sm:$0xff]
    %v326 = vld [vmem:[#allocation6 + $0x108] sm:$0xff]
    %v327 = vld [vmem:[#allocation6 + $0x110] sm:$0xff]
    %v328 = vld [vmem:[#allocation6 + $0x118] sm:$0xff]
    %v329 = vld [vmem:[#allocation6 + $0x120] sm:$0xff]
    %v330 = vld [vmem:[#allocation6 + $0x128] sm:$0xff]
    %v331 = vld [vmem:[#allocation6 + $0x130] sm:$0xff]
    %v332 = vld [vmem:[#allocation6 + $0x138] sm:$0xff]
    %v333 = vld [vmem:[#allocation6 + $0x140] sm:$0xff]
    %v334 = vld [vmem:[#allocation6 + $0x148] sm:$0xff]
    %v335 = vld [vmem:[#allocation6 + $0x150] sm:$0xff]
    %v336 = vld [vmem:[#allocation6 + $0x158] sm:$0xff]
    %v337 = vld [vmem:[#allocation6 + $0x160] sm:$0xff]
    %v338 = vld [vmem:[#allocation6 + $0x168] sm:$0xff]
    %v339 = vld [vmem:[#allocation6 + $0x170] sm:$0xff]
    %v340 = vld [vmem:[#allocation6 + $0x178] sm:$0xff]
    %v341 = vld [vmem:[#allocation6 + $0x180] sm:$0xff]
    %v342 = vld [vmem:[#allocation6 + $0x188] sm:$0xff]
    %v343 = vld [vmem:[#allocation6 + $0x190] sm:$0xff]
    %v344 = vld [vmem:[#allocation6 + $0x198] sm:$0xff]
    %v345 = vld [vmem:[#allocation6 + $0x1a0] sm:$0xff]
    %v346 = vld [vmem:[#allocation6 + $0x1a8] sm:$0xff]
    %v347 = vld [vmem:[#allocation6 + $0x1b0] sm:$0xff]
    %v348 = vld [vmem:[#allocation6 + $0x1b8] sm:$0xff]
    %v349 = vld [vmem:[#allocation6 + $0x1c0] sm:$0xff]
    %v350 = vld [vmem:[#allocation6 + $0x1c8] sm:$0xff]
    %v351 = vld [vmem:[#allocation6 + $0x1d0] sm:$0xff]
    %v352 = vld [vmem:[#allocation6 + $0x1d8] sm:$0xff]
    %v353 = vld [vmem:[#allocation6 + $0x1e0] sm:$0xff]
    %v354 = vld [vmem:[#allocation6 + $0x1e8] sm:$0xff]
    %v355 = vld [vmem:[#allocation6 + $0x1f0] sm:$0xff]
    %v356 = vld [vmem:[#allocation6 + $0x1f8] sm:$0xff]
    %v357 = vld [vmem:[#allocation7] sm:$0xf]
    %v359 = vlaneseq
    %v360 = vshrl.u32 %v359, 7
    %v361 = vsub.s32 0, %v360
    %v362 = vrot.slane %v357, %v361
    %v363 = vlaneseq
    %v364 = vshrl.u32 %v363, 7
    %v365 = vsub.s32 1, %v364
    %v366 = vrot.slane %v357, %v365
    %v367 = vlaneseq
    %v368 = vshrl.u32 %v367, 7
    %v369 = vsub.s32 2, %v368
    %v370 = vrot.slane %v357, %v369
    %v371 = vlaneseq
    %v372 = vshrl.u32 %v371, 7
    %v373 = vsub.s32 3, %v372
    %v374 = vrot.slane %v357, %v373
    %v443 = vunpack.c.l.b16 %v293
    %v444 = vunpack.c.h.b16 %v293
    %v445 = vunpack.c.l.b16 %v294
    %v446 = vunpack.c.h.b16 %v294
    %v447 = vunpack.c.l.b16 %v295
    %v448 = vunpack.c.h.b16 %v295
    %v449 = vunpack.c.l.b16 %v296
    %v450 = vunpack.c.h.b16 %v296
    %v451 = vunpack.c.l.b16 %v297
    %v452 = vunpack.c.h.b16 %v297
    %v453 = vunpack.c.l.b16 %v298
    %v454 = vunpack.c.h.b16 %v298
    %v455 = vunpack.c.l.b16 %v299
    %v456 = vunpack.c.h.b16 %v299
    %v457 = vunpack.c.l.b16 %v300
    %v458 = vunpack.c.h.b16 %v300
    %v459 = vunpack.c.l.b16 %v301
    %v460 = vunpack.c.h.b16 %v301
    %v461 = vunpack.c.l.b16 %v302
    %v462 = vunpack.c.h.b16 %v302
    %v463 = vunpack.c.l.b16 %v303
    %v464 = vunpack.c.h.b16 %v303
    %v465 = vunpack.c.l.b16 %v304
    %v466 = vunpack.c.h.b16 %v304
    %v467 = vunpack.c.l.b16 %v305
    %v468 = vunpack.c.h.b16 %v305
    %v469 = vunpack.c.l.b16 %v306
    %v470 = vunpack.c.h.b16 %v306
    %v471 = vunpack.c.l.b16 %v307
    %v472 = vunpack.c.h.b16 %v307
    %v473 = vunpack.c.l.b16 %v308
    %v474 = vunpack.c.h.b16 %v308
    %v475 = vunpack.c.l.b16 %v309
    %v476 = vunpack.c.h.b16 %v309
    %v477 = vunpack.c.l.b16 %v310
    %v478 = vunpack.c.h.b16 %v310
    %v479 = vunpack.c.l.b16 %v311
    %v480 = vunpack.c.h.b16 %v311
    %v481 = vunpack.c.l.b16 %v312
    %v482 = vunpack.c.h.b16 %v312
    %v483 = vunpack.c.l.b16 %v313
    %v484 = vunpack.c.h.b16 %v313
    %v485 = vunpack.c.l.b16 %v314
    %v486 = vunpack.c.h.b16 %v314
    %v487 = vunpack.c.l.b16 %v315
    %v488 = vunpack.c.h.b16 %v315
    %v489 = vunpack.c.l.b16 %v316
    %v490 = vunpack.c.h.b16 %v316
    %v491 = vunpack.c.l.b16 %v317
    %v492 = vunpack.c.h.b16 %v317
    %v493 = vunpack.c.l.b16 %v318
    %v494 = vunpack.c.h.b16 %v318
    %v495 = vunpack.c.l.b16 %v319
    %v496 = vunpack.c.h.b16 %v319
    %v497 = vunpack.c.l.b16 %v320
    %v498 = vunpack.c.h.b16 %v320
    %v499 = vunpack.c.l.b16 %v321
    %v500 = vunpack.c.h.b16 %v321
    %v501 = vunpack.c.l.b16 %v322
    %v502 = vunpack.c.h.b16 %v322
    %v503 = vunpack.c.l.b16 %v323
    %v504 = vunpack.c.h.b16 %v323
    %v505 = vunpack.c.l.b16 %v324
    %v506 = vunpack.c.h.b16 %v324
    %v507 = vunpack.c.l.b16 %v325
    %v508 = vunpack.c.h.b16 %v325
    %v509 = vunpack.c.l.b16 %v326
    %v510 = vunpack.c.h.b16 %v326
    %v511 = vunpack.c.l.b16 %v327
    %v512 = vunpack.c.h.b16 %v327
    %v513 = vunpack.c.l.b16 %v328
    %v514 = vunpack.c.h.b16 %v328
    %v515 = vunpack.c.l.b16 %v329
    %v516 = vunpack.c.h.b16 %v329
    %v517 = vunpack.c.l.b16 %v330
    %v518 = vunpack.c.h.b16 %v330
    %v519 = vunpack.c.l.b16 %v331
    %v520 = vunpack.c.h.b16 %v331
    %v521 = vunpack.c.l.b16 %v332
    %v522 = vunpack.c.h.b16 %v332
    %v523 = vunpack.c.l.b16 %v333
    %v524 = vunpack.c.h.b16 %v333
    %v525 = vunpack.c.l.b16 %v334
    %v526 = vunpack.c.h.b16 %v334
    %v527 = vunpack.c.l.b16 %v335
    %v528 = vunpack.c.h.b16 %v335
    %v529 = vunpack.c.l.b16 %v336
    %v530 = vunpack.c.h.b16 %v336
    %v531 = vunpack.c.l.b16 %v337
    %v532 = vunpack.c.h.b16 %v337
    %v533 = vunpack.c.l.b16 %v338
    %v534 = vunpack.c.h.b16 %v338
    %v535 = vunpack.c.l.b16 %v339
    %v536 = vunpack.c.h.b16 %v339
    %v537 = vunpack.c.l.b16 %v340
    %v538 = vunpack.c.h.b16 %v340
    %v539 = vunpack.c.l.b16 %v341
    %v540 = vunpack.c.h.b16 %v341
    %v541 = vunpack.c.l.b16 %v342
    %v542 = vunpack.c.h.b16 %v342
    %v543 = vunpack.c.l.b16 %v343
    %v544 = vunpack.c.h.b16 %v343
    %v545 = vunpack.c.l.b16 %v344
    %v546 = vunpack.c.h.b16 %v344
    %v547 = vunpack.c.l.b16 %v345
    %v548 = vunpack.c.h.b16 %v345
    %v549 = vunpack.c.l.b16 %v346
    %v550 = vunpack.c.h.b16 %v346
    %v551 = vunpack.c.l.b16 %v347
    %v552 = vunpack.c.h.b16 %v347
    %v553 = vunpack.c.l.b16 %v348
    %v554 = vunpack.c.h.b16 %v348
    %v555 = vunpack.c.l.b16 %v349
    %v556 = vunpack.c.h.b16 %v349
    %v557 = vunpack.c.l.b16 %v350
    %v558 = vunpack.c.h.b16 %v350
    %v559 = vunpack.c.l.b16 %v351
    %v560 = vunpack.c.h.b16 %v351
    %v561 = vunpack.c.l.b16 %v352
    %v562 = vunpack.c.h.b16 %v352
    %v563 = vunpack.c.l.b16 %v353
    %v564 = vunpack.c.h.b16 %v353
    %v565 = vunpack.c.l.b16 %v354
    %v566 = vunpack.c.h.b16 %v354
    %v567 = vunpack.c.l.b16 %v355
    %v568 = vunpack.c.h.b16 %v355
    %v569 = vunpack.c.l.b16 %v356
    %v570 = vunpack.c.h.b16 %v356
    %v571 = vpack.c.b16 %v447, %v443
    %v572 = vpack.c.b16 %v448, %v444
    %v573 = vpack.c.b16 %v449, %v445
    %v574 = vpack.c.b16 %v450, %v446
    %v575 = vpack.c.b16 %v455, %v451
    %v576 = vpack.c.b16 %v456, %v452
    %v577 = vpack.c.b16 %v457, %v453
    %v578 = vpack.c.b16 %v458, %v454
    %v579 = vpack.c.b16 %v463, %v459
    %v580 = vpack.c.b16 %v464, %v460
    %v581 = vpack.c.b16 %v465, %v461
    %v582 = vpack.c.b16 %v466, %v462
    %v583 = vpack.c.b16 %v471, %v467
    %v584 = vpack.c.b16 %v472, %v468
    %v585 = vpack.c.b16 %v473, %v469
    %v586 = vpack.c.b16 %v474, %v470
    %v587 = vpack.c.b16 %v479, %v475
    %v588 = vpack.c.b16 %v480, %v476
    %v589 = vpack.c.b16 %v481, %v477
    %v590 = vpack.c.b16 %v482, %v478
    %v591 = vpack.c.b16 %v487, %v483
    %v592 = vpack.c.b16 %v488, %v484
    %v593 = vpack.c.b16 %v489, %v485
    %v594 = vpack.c.b16 %v490, %v486
    %v595 = vpack.c.b16 %v495, %v491
    %v596 = vpack.c.b16 %v496, %v492
    %v597 = vpack.c.b16 %v497, %v493
    %v598 = vpack.c.b16 %v498, %v494
    %v599 = vpack.c.b16 %v503, %v499
    %v600 = vpack.c.b16 %v504, %v500
    %v601 = vpack.c.b16 %v505, %v501
    %v602 = vpack.c.b16 %v506, %v502
    %v603 = vpack.c.b16 %v511, %v507
    %v604 = vpack.c.b16 %v512, %v508
    %v605 = vpack.c.b16 %v513, %v509
    %v606 = vpack.c.b16 %v514, %v510
    %v607 = vpack.c.b16 %v519, %v515
    %v608 = vpack.c.b16 %v520, %v516
    %v609 = vpack.c.b16 %v521, %v517
    %v610 = vpack.c.b16 %v522, %v518
    %v611 = vpack.c.b16 %v527, %v523
    %v612 = vpack.c.b16 %v528, %v524
    %v613 = vpack.c.b16 %v529, %v525
    %v614 = vpack.c.b16 %v530, %v526
    %v615 = vpack.c.b16 %v535, %v531
    %v616 = vpack.c.b16 %v536, %v532
    %v617 = vpack.c.b16 %v537, %v533
    %v618 = vpack.c.b16 %v538, %v534
    %v619 = vpack.c.b16 %v543, %v539
    %v620 = vpack.c.b16 %v544, %v540
    %v621 = vpack.c.b16 %v545, %v541
    %v622 = vpack.c.b16 %v546, %v542
    %v623 = vpack.c.b16 %v551, %v547
    %v624 = vpack.c.b16 %v552, %v548
    %v625 = vpack.c.b16 %v553, %v549
    %v626 = vpack.c.b16 %v554, %v550
    %v627 = vpack.c.b16 %v559, %v555
    %v628 = vpack.c.b16 %v560, %v556
    %v629 = vpack.c.b16 %v561, %v557
    %v630 = vpack.c.b16 %v562, %v558
    %v631 = vpack.c.b16 %v567, %v563
    %v632 = vpack.c.b16 %v568, %v564
    %v633 = vpack.c.b16 %v569, %v565
    %v634 = vpack.c.b16 %v570, %v566
    %699 = vmatprep.subr.bf16.mxu0 %v572
    %700 = vmatpush1.bf16.msra.mxu0 %v571
    %701 = vmatprep.subr.bf16.mxu0 %v576
    %702 = vmatpush1.bf16.msra.mxu0 %v575
    %703 = vmatprep.subr.bf16.mxu0 %v580
    %704 = vmatpush1.bf16.msra.mxu0 %v579
    %705 = vmatprep.subr.bf16.mxu0 %v584
    %706 = vmatpush1.bf16.msra.mxu0 %v583
    %707 = vmatprep.subr.bf16.mxu0 %v588
    %708 = vmatpush1.bf16.msra.mxu0 %v587
    %709 = vmatprep.subr.bf16.mxu0 %v592
    %710 = vmatpush1.bf16.msra.mxu0 %v591
    %711 = vmatprep.subr.bf16.mxu0 %v596
    %712 = vmatpush1.bf16.msra.mxu0 %v595
    %713 = vmatprep.subr.bf16.mxu0 %v600
    %714 = vmatpush1.bf16.msra.mxu0 %v599
    %715 = vmatprep.subr.bf16.mxu0 %v604
    %716 = vmatpush1.bf16.msra.mxu0 %v603
    %717 = vmatprep.subr.bf16.mxu0 %v608
    %718 = vmatpush1.bf16.msra.mxu0 %v607
    %719 = vmatprep.subr.bf16.mxu0 %v612
    %720 = vmatpush1.bf16.msra.mxu0 %v611
    %721 = vmatprep.subr.bf16.mxu0 %v616
    %722 = vmatpush1.bf16.msra.mxu0 %v615
    %723 = vmatprep.subr.bf16.mxu0 %v620
    %724 = vmatpush1.bf16.msra.mxu0 %v619
    %725 = vmatprep.subr.bf16.mxu0 %v624
    %726 = vmatpush1.bf16.msra.mxu0 %v623
    %727 = vmatprep.subr.bf16.mxu0 %v628
    %728 = vmatpush1.bf16.msra.mxu0 %v627
    %729 = vmatprep.subr.bf16.mxu0 %v632
    %730 = vmatpush1.bf16.msra.mxu0 %v631
    %731 = vmatprep.mubr.bf16.mxu0 %v292
    %732 = vmatmul.mubr.bf16.gmra.mrb[0].mxu0 %v291
    %v733 = vpop.f32.mrb[0].mxu0
    %v734 = vadd.f32 %v362, %v733
    %v735 = vpop.f32.mrb[0].mxu0
    %v736 = vadd.f32 %v366, %v735
    %v737 = vpop.f32.mrb[0].mxu0
    %v738 = vpop.f32.mrb[0].mxu0
    %739 = vdwg.mxu0
    %740 = vmatprep.subr.bf16.mxu0 %v574
    %741 = vmatpush1.bf16.msra.mxu0 %v573
    %742 = vmatprep.subr.bf16.mxu0 %v578
    %743 = vmatpush1.bf16.msra.mxu0 %v577
    %744 = vmatprep.subr.bf16.mxu0 %v582
    %745 = vmatpush1.bf16.msra.mxu0 %v581
    %746 = vmatprep.subr.bf16.mxu0 %v586
    %747 = vmatpush1.bf16.msra.mxu0 %v585
    %748 = vmatprep.subr.bf16.mxu0 %v590
    %749 = vmatpush1.bf16.msra.mxu0 %v589
    %750 = vmatprep.subr.bf16.mxu0 %v594
    %751 = vmatpush1.bf16.msra.mxu0 %v593
    %752 = vmatprep.subr.bf16.mxu0 %v598
    %753 = vmatpush1.bf16.msra.mxu0 %v597
    %754 = vmatprep.subr.bf16.mxu0 %v602
    %755 = vmatpush1.bf16.msra.mxu0 %v601
    %756 = vmatprep.subr.bf16.mxu0 %v606
    %757 = vmatpush1.bf16.msra.mxu0 %v605
    %758 = vmatprep.subr.bf16.mxu0 %v610
    %759 = vmatpush1.bf16.msra.mxu0 %v609
    %760 = vmatprep.subr.bf16.mxu0 %v614
    %761 = vmatpush1.bf16.msra.mxu0 %v613
    %762 = vmatprep.subr.bf16.mxu0 %v618
    %763 = vmatpush1.bf16.msra.mxu0 %v617
    %764 = vmatprep.subr.bf16.mxu0 %v622
    %765 = vmatpush1.bf16.msra.mxu0 %v621
    %766 = vmatprep.subr.bf16.mxu0 %v626
    %767 = vmatpush1.bf16.msra.mxu0 %v625
    %768 = vmatprep.subr.bf16.mxu0 %v630
    %769 = vmatpush1.bf16.msra.mxu0 %v629
    %770 = vmatprep.subr.bf16.mxu0 %v634
    %771 = vmatpush1.bf16.msra.mxu0 %v633
    %772 = vmatprep.mubr.bf16.mxu0 %v292
    %773 = vmatmul.mubr.bf16.gmra.mrb[0].mxu0 %v291
    %v774 = vpop.f32.mrb[0].mxu0
    %v775 = vadd.f32 %v370, %v774
    %v776 = vpop.f32.mrb[0].mxu0
    %v777 = vadd.f32 %v374, %v776
    %v778 = vpop.f32.mrb[0].mxu0
    %v779 = vpop.f32.mrb[0].mxu0
    %780 = vdwg.mxu0
    %vm781 = vcmp.gt.f32.partialorder %v734, 0.0
    %vm782 = vcmp.gt.f32.partialorder %v736, 0.0
    %vm783 = vcmp.gt.f32.partialorder %v775, 0.0
    %vm784 = vcmp.gt.f32.partialorder %v777, 0.0
    %v785 = vmul.f32 %v734, 0.2
    %v786 = vmul.f32 %v736, 0.2
    %v787 = vmul.f32 %v775, 0.2
    %v788 = vmul.f32 %v777, 0.2
    %v789 = vsel %vm781, %v734, %v785
    %v790 = vsel %vm782, %v736, %v786
    %v791 = vsel %vm783, %v775, %v787
    %v792 = vsel %vm784, %v777, %v788
    %v793 = vpack.c.bf16 %v789, %v789
    %v794 = vpack.c.bf16 %v790, %v790
    %v795 = vpack.c.bf16 %v791, %v791
    %v796 = vpack.c.bf16 %v792, %v792
    %v797 = vld [vmem:[#allocation9] sm:$0xff]
    %v798 = vld [vmem:[#allocation9 + $0x8] sm:$0xff]
    %v799 = vld [vmem:[#allocation9 + $0x10] sm:$0xff]
    %v800 = vld [vmem:[#allocation9 + $0x18] sm:$0xff]
    %v801 = vld [vmem:[#allocation9 + $0x20] sm:$0xff]
    %v802 = vld [vmem:[#allocation9 + $0x28] sm:$0xff]
    %v803 = vld [vmem:[#allocation9 + $0x30] sm:$0xff]
    %v804 = vld [vmem:[#allocation9 + $0x38] sm:$0xff]
    %v805 = vld [vmem:[#allocation9 + $0x40] sm:$0xff]
    %v806 = vld [vmem:[#allocation9 + $0x48] sm:$0xff]
    %v807 = vld [vmem:[#allocation9 + $0x50] sm:$0xff]
    %v808 = vld [vmem:[#allocation9 + $0x58] sm:$0xff]
    %v809 = vld [vmem:[#allocation9 + $0x60] sm:$0xff]
    %v810 = vld [vmem:[#allocation9 + $0x68] sm:$0xff]
    %v811 = vld [vmem:[#allocation9 + $0x70] sm:$0xff]
    %v812 = vld [vmem:[#allocation9 + $0x78] sm:$0xff]
    %v813 = vld [vmem:[#allocation9 + $0x80] sm:$0xff]
    %v814 = vld [vmem:[#allocation9 + $0x88] sm:$0xff]
    %v815 = vld [vmem:[#allocation9 + $0x90] sm:$0xff]
    %v816 = vld [vmem:[#allocation9 + $0x98] sm:$0xff]
    %v817 = vld [vmem:[#allocation9 + $0xa0] sm:$0xff]
    %v818 = vld [vmem:[#allocation9 + $0xa8] sm:$0xff]
    %v819 = vld [vmem:[#allocation9 + $0xb0] sm:$0xff]
    %v820 = vld [vmem:[#allocation9 + $0xb8] sm:$0xff]
    %v821 = vld [vmem:[#allocation9 + $0xc0] sm:$0xff]
    %v822 = vld [vmem:[#allocation9 + $0xc8] sm:$0xff]
    %v823 = vld [vmem:[#allocation9 + $0xd0] sm:$0xff]
    %v824 = vld [vmem:[#allocation9 + $0xd8] sm:$0xff]
    %v825 = vld [vmem:[#allocation9 + $0xe0] sm:$0xff]
    %v826 = vld [vmem:[#allocation9 + $0xe8] sm:$0xff]
    %v827 = vld [vmem:[#allocation9 + $0xf0] sm:$0xff]
    %v828 = vld [vmem:[#allocation9 + $0xf8] sm:$0xff]
    %v829 = vld [vmem:[#allocation9 + $0x100] sm:$0xff]
    %v830 = vld [vmem:[#allocation9 + $0x108] sm:$0xff]
    %v831 = vld [vmem:[#allocation9 + $0x110] sm:$0xff]
    %v832 = vld [vmem:[#allocation9 + $0x118] sm:$0xff]
    %v833 = vld [vmem:[#allocation9 + $0x120] sm:$0xff]
    %v834 = vld [vmem:[#allocation9 + $0x128] sm:$0xff]
    %v835 = vld [vmem:[#allocation9 + $0x130] sm:$0xff]
    %v836 = vld [vmem:[#allocation9 + $0x138] sm:$0xff]
    %v837 = vld [vmem:[#allocation9 + $0x140] sm:$0xff]
    %v838 = vld [vmem:[#allocation9 + $0x148] sm:$0xff]
    %v839 = vld [vmem:[#allocation9 + $0x150] sm:$0xff]
    %v840 = vld [vmem:[#allocation9 + $0x158] sm:$0xff]
    %v841 = vld [vmem:[#allocation9 + $0x160] sm:$0xff]
    %v842 = vld [vmem:[#allocation9 + $0x168] sm:$0xff]
    %v843 = vld [vmem:[#allocation9 + $0x170] sm:$0xff]
    %v844 = vld [vmem:[#allocation9 + $0x178] sm:$0xff]
    %v845 = vld [vmem:[#allocation9 + $0x180] sm:$0xff]
    %v846 = vld [vmem:[#allocation9 + $0x188] sm:$0xff]
    %v847 = vld [vmem:[#allocation9 + $0x190] sm:$0xff]
    %v848 = vld [vmem:[#allocation9 + $0x198] sm:$0xff]
    %v849 = vld [vmem:[#allocation9 + $0x1a0] sm:$0xff]
    %v850 = vld [vmem:[#allocation9 + $0x1a8] sm:$0xff]
    %v851 = vld [vmem:[#allocation9 + $0x1b0] sm:$0xff]
    %v852 = vld [vmem:[#allocation9 + $0x1b8] sm:$0xff]
    %v853 = vld [vmem:[#allocation9 + $0x1c0] sm:$0xff]
    %v854 = vld [vmem:[#allocation9 + $0x1c8] sm:$0xff]
    %v855 = vld [vmem:[#allocation9 + $0x1d0] sm:$0xff]
    %v856 = vld [vmem:[#allocation9 + $0x1d8] sm:$0xff]
    %v857 = vld [vmem:[#allocation9 + $0x1e0] sm:$0xff]
    %v858 = vld [vmem:[#allocation9 + $0x1e8] sm:$0xff]
    %v859 = vld [vmem:[#allocation9 + $0x1f0] sm:$0xff]
    %v860 = vld [vmem:[#allocation9 + $0x1f8] sm:$0xff]
    %v861 = vld [vmem:[#allocation9 + $0x200] sm:$0xff]
    %v862 = vld [vmem:[#allocation9 + $0x208] sm:$0xff]
    %v863 = vld [vmem:[#allocation9 + $0x210] sm:$0xff]
    %v864 = vld [vmem:[#allocation9 + $0x218] sm:$0xff]
    %v865 = vld [vmem:[#allocation9 + $0x220] sm:$0xff]
    %v866 = vld [vmem:[#allocation9 + $0x228] sm:$0xff]
    %v867 = vld [vmem:[#allocation9 + $0x230] sm:$0xff]
    %v868 = vld [vmem:[#allocation9 + $0x238] sm:$0xff]
    %v869 = vld [vmem:[#allocation9 + $0x240] sm:$0xff]
    %v870 = vld [vmem:[#allocation9 + $0x248] sm:$0xff]
    %v871 = vld [vmem:[#allocation9 + $0x250] sm:$0xff]
    %v872 = vld [vmem:[#allocation9 + $0x258] sm:$0xff]
    %v873 = vld [vmem:[#allocation9 + $0x260] sm:$0xff]
    %v874 = vld [vmem:[#allocation9 + $0x268] sm:$0xff]
    %v875 = vld [vmem:[#allocation9 + $0x270] sm:$0xff]
    %v876 = vld [vmem:[#allocation9 + $0x278] sm:$0xff]
    %v877 = vld [vmem:[#allocation9 + $0x280] sm:$0xff]
    %v878 = vld [vmem:[#allocation9 + $0x288] sm:$0xff]
    %v879 = vld [vmem:[#allocation9 + $0x290] sm:$0xff]
    %v880 = vld [vmem:[#allocation9 + $0x298] sm:$0xff]
    %v881 = vld [vmem:[#allocation9 + $0x2a0] sm:$0xff]
    %v882 = vld [vmem:[#allocation9 + $0x2a8] sm:$0xff]
    %v883 = vld [vmem:[#allocation9 + $0x2b0] sm:$0xff]
    %v884 = vld [vmem:[#allocation9 + $0x2b8] sm:$0xff]
    %v885 = vld [vmem:[#allocation9 + $0x2c0] sm:$0xff]
    %v886 = vld [vmem:[#allocation9 + $0x2c8] sm:$0xff]
    %v887 = vld [vmem:[#allocation9 + $0x2d0] sm:$0xff]
    %v888 = vld [vmem:[#allocation9 + $0x2d8] sm:$0xff]
    %v889 = vld [vmem:[#allocation9 + $0x2e0] sm:$0xff]
    %v890 = vld [vmem:[#allocation9 + $0x2e8] sm:$0xff]
    %v891 = vld [vmem:[#allocation9 + $0x2f0] sm:$0xff]
    %v892 = vld [vmem:[#allocation9 + $0x2f8] sm:$0xff]
    %v893 = vld [vmem:[#allocation9 + $0x300] sm:$0xff]
    %v894 = vld [vmem:[#allocation9 + $0x308] sm:$0xff]
    %v895 = vld [vmem:[#allocation9 + $0x310] sm:$0xff]
    %v896 = vld [vmem:[#allocation9 + $0x318] sm:$0xff]
    %v897 = vld [vmem:[#allocation9 + $0x320] sm:$0xff]
    %v898 = vld [vmem:[#allocation9 + $0x328] sm:$0xff]
    %v899 = vld [vmem:[#allocation9 + $0x330] sm:$0xff]
    %v900 = vld [vmem:[#allocation9 + $0x338] sm:$0xff]
    %v901 = vld [vmem:[#allocation9 + $0x340] sm:$0xff]
    %v902 = vld [vmem:[#allocation9 + $0x348] sm:$0xff]
    %v903 = vld [vmem:[#allocation9 + $0x350] sm:$0xff]
    %v904 = vld [vmem:[#allocation9 + $0x358] sm:$0xff]
    %v905 = vld [vmem:[#allocation9 + $0x360] sm:$0xff]
    %v906 = vld [vmem:[#allocation9 + $0x368] sm:$0xff]
    %v907 = vld [vmem:[#allocation9 + $0x370] sm:$0xff]
    %v908 = vld [vmem:[#allocation9 + $0x378] sm:$0xff]
    %v909 = vld [vmem:[#allocation9 + $0x380] sm:$0xff]
    %v910 = vld [vmem:[#allocation9 + $0x388] sm:$0xff]
    %v911 = vld [vmem:[#allocation9 + $0x390] sm:$0xff]
    %v912 = vld [vmem:[#allocation9 + $0x398] sm:$0xff]
    %v913 = vld [vmem:[#allocation9 + $0x3a0] sm:$0xff]
    %v914 = vld [vmem:[#allocation9 + $0x3a8] sm:$0xff]
    %v915 = vld [vmem:[#allocation9 + $0x3b0] sm:$0xff]
    %v916 = vld [vmem:[#allocation9 + $0x3b8] sm:$0xff]
    %v917 = vld [vmem:[#allocation9 + $0x3c0] sm:$0xff]
    %v918 = vld [vmem:[#allocation9 + $0x3c8] sm:$0xff]
    %v919 = vld [vmem:[#allocation9 + $0x3d0] sm:$0xff]
    %v920 = vld [vmem:[#allocation9 + $0x3d8] sm:$0xff]
    %v921 = vld [vmem:[#allocation9 + $0x3e0] sm:$0xff]
    %v922 = vld [vmem:[#allocation9 + $0x3e8] sm:$0xff]
    %v923 = vld [vmem:[#allocation9 + $0x3f0] sm:$0xff]
    %v924 = vld [vmem:[#allocation9 + $0x3f8] sm:$0xff]
    %v925 = vld [vmem:[#allocation9 + $0x400] sm:$0xff]
    %v926 = vld [vmem:[#allocation9 + $0x408] sm:$0xff]
    %v927 = vld [vmem:[#allocation9 + $0x410] sm:$0xff]
    %v928 = vld [vmem:[#allocation9 + $0x418] sm:$0xff]
    %v929 = vld [vmem:[#allocation9 + $0x420] sm:$0xff]
    %v930 = vld [vmem:[#allocation9 + $0x428] sm:$0xff]
    %v931 = vld [vmem:[#allocation9 + $0x430] sm:$0xff]
    %v932 = vld [vmem:[#allocation9 + $0x438] sm:$0xff]
    %v933 = vld [vmem:[#allocation9 + $0x440] sm:$0xff]
    %v934 = vld [vmem:[#allocation9 + $0x448] sm:$0xff]
    %v935 = vld [vmem:[#allocation9 + $0x450] sm:$0xff]
    %v936 = vld [vmem:[#allocation9 + $0x458] sm:$0xff]
    %v937 = vld [vmem:[#allocation9 + $0x460] sm:$0xff]
    %v938 = vld [vmem:[#allocation9 + $0x468] sm:$0xff]
    %v939 = vld [vmem:[#allocation9 + $0x470] sm:$0xff]
    %v940 = vld [vmem:[#allocation9 + $0x478] sm:$0xff]
    %v941 = vld [vmem:[#allocation9 + $0x480] sm:$0xff]
    %v942 = vld [vmem:[#allocation9 + $0x488] sm:$0xff]
    %v943 = vld [vmem:[#allocation9 + $0x490] sm:$0xff]
    %v944 = vld [vmem:[#allocation9 + $0x498] sm:$0xff]
    %v945 = vld [vmem:[#allocation9 + $0x4a0] sm:$0xff]
    %v946 = vld [vmem:[#allocation9 + $0x4a8] sm:$0xff]
    %v947 = vld [vmem:[#allocation9 + $0x4b0] sm:$0xff]
    %v948 = vld [vmem:[#allocation9 + $0x4b8] sm:$0xff]
    %v949 = vld [vmem:[#allocation9 + $0x4c0] sm:$0xff]
    %v950 = vld [vmem:[#allocation9 + $0x4c8] sm:$0xff]
    %v951 = vld [vmem:[#allocation9 + $0x4d0] sm:$0xff]
    %v952 = vld [vmem:[#allocation9 + $0x4d8] sm:$0xff]
    %v953 = vld [vmem:[#allocation9 + $0x4e0] sm:$0xff]
    %v954 = vld [vmem:[#allocation9 + $0x4e8] sm:$0xff]
    %v955 = vld [vmem:[#allocation9 + $0x4f0] sm:$0xff]
    %v956 = vld [vmem:[#allocation9 + $0x4f8] sm:$0xff]
    %v957 = vld [vmem:[#allocation9 + $0x500] sm:$0xff]
    %v958 = vld [vmem:[#allocation9 + $0x508] sm:$0xff]
    %v959 = vld [vmem:[#allocation9 + $0x510] sm:$0xff]
    %v960 = vld [vmem:[#allocation9 + $0x518] sm:$0xff]
    %v961 = vld [vmem:[#allocation9 + $0x520] sm:$0xff]
    %v962 = vld [vmem:[#allocation9 + $0x528] sm:$0xff]
    %v963 = vld [vmem:[#allocation9 + $0x530] sm:$0xff]
    %v964 = vld [vmem:[#allocation9 + $0x538] sm:$0xff]
    %v965 = vld [vmem:[#allocation9 + $0x540] sm:$0xff]
    %v966 = vld [vmem:[#allocation9 + $0x548] sm:$0xff]
    %v967 = vld [vmem:[#allocation9 + $0x550] sm:$0xff]
    %v968 = vld [vmem:[#allocation9 + $0x558] sm:$0xff]
    %v969 = vld [vmem:[#allocation9 + $0x560] sm:$0xff]
    %v970 = vld [vmem:[#allocation9 + $0x568] sm:$0xff]
    %v971 = vld [vmem:[#allocation9 + $0x570] sm:$0xff]
    %v972 = vld [vmem:[#allocation9 + $0x578] sm:$0xff]
    %v973 = vld [vmem:[#allocation9 + $0x580] sm:$0xff]
    %v974 = vld [vmem:[#allocation9 + $0x588] sm:$0xff]
    %v975 = vld [vmem:[#allocation9 + $0x590] sm:$0xff]
    %v976 = vld [vmem:[#allocation9 + $0x598] sm:$0xff]
    %v977 = vld [vmem:[#allocation9 + $0x5a0] sm:$0xff]
    %v978 = vld [vmem:[#allocation9 + $0x5a8] sm:$0xff]
    %v979 = vld [vmem:[#allocation9 + $0x5b0] sm:$0xff]
    %v980 = vld [vmem:[#allocation9 + $0x5b8] sm:$0xff]
    %v981 = vld [vmem:[#allocation9 + $0x5c0] sm:$0xff]
    %v982 = vld [vmem:[#allocation9 + $0x5c8] sm:$0xff]
    %v983 = vld [vmem:[#allocation9 + $0x5d0] sm:$0xff]
    %v984 = vld [vmem:[#allocation9 + $0x5d8] sm:$0xff]
    %v985 = vld [vmem:[#allocation9 + $0x5e0] sm:$0xff]
    %v986 = vld [vmem:[#allocation9 + $0x5e8] sm:$0xff]
    %v987 = vld [vmem:[#allocation9 + $0x5f0] sm:$0xff]
    %v988 = vld [vmem:[#allocation9 + $0x5f8] sm:$0xff]
    %v989 = vld [vmem:[#allocation9 + $0x600] sm:$0xff]
    %v990 = vld [vmem:[#allocation9 + $0x608] sm:$0xff]
    %v991 = vld [vmem:[#allocation9 + $0x610] sm:$0xff]
    %v992 = vld [vmem:[#allocation9 + $0x618] sm:$0xff]
    %v993 = vld [vmem:[#allocation9 + $0x620] sm:$0xff]
    %v994 = vld [vmem:[#allocation9 + $0x628] sm:$0xff]
    %v995 = vld [vmem:[#allocation9 + $0x630] sm:$0xff]
    %v996 = vld [vmem:[#allocation9 + $0x638] sm:$0xff]
    %v997 = vld [vmem:[#allocation9 + $0x640] sm:$0xff]
    %v998 = vld [vmem:[#allocation9 + $0x648] sm:$0xff]
    %v999 = vld [vmem:[#allocation9 + $0x650] sm:$0xff]
    %v1000 = vld [vmem:[#allocation9 + $0x658] sm:$0xff]
    %v1001 = vld [vmem:[#allocation9 + $0x660] sm:$0xff]
    %v1002 = vld [vmem:[#allocation9 + $0x668] sm:$0xff]
    %v1003 = vld [vmem:[#allocation9 + $0x670] sm:$0xff]
    %v1004 = vld [vmem:[#allocation9 + $0x678] sm:$0xff]
    %v1005 = vld [vmem:[#allocation9 + $0x680] sm:$0xff]
    %v1006 = vld [vmem:[#allocation9 + $0x688] sm:$0xff]
    %v1007 = vld [vmem:[#allocation9 + $0x690] sm:$0xff]
    %v1008 = vld [vmem:[#allocation9 + $0x698] sm:$0xff]
    %v1009 = vld [vmem:[#allocation9 + $0x6a0] sm:$0xff]
    %v1010 = vld [vmem:[#allocation9 + $0x6a8] sm:$0xff]
    %v1011 = vld [vmem:[#allocation9 + $0x6b0] sm:$0xff]
    %v1012 = vld [vmem:[#allocation9 + $0x6b8] sm:$0xff]
    %v1013 = vld [vmem:[#allocation9 + $0x6c0] sm:$0xff]
    %v1014 = vld [vmem:[#allocation9 + $0x6c8] sm:$0xff]
    %v1015 = vld [vmem:[#allocation9 + $0x6d0] sm:$0xff]
    %v1016 = vld [vmem:[#allocation9 + $0x6d8] sm:$0xff]
    %v1017 = vld [vmem:[#allocation9 + $0x6e0] sm:$0xff]
    %v1018 = vld [vmem:[#allocation9 + $0x6e8] sm:$0xff]
    %v1019 = vld [vmem:[#allocation9 + $0x6f0] sm:$0xff]
    %v1020 = vld [vmem:[#allocation9 + $0x6f8] sm:$0xff]
    %v1021 = vld [vmem:[#allocation9 + $0x700] sm:$0xff]
    %v1022 = vld [vmem:[#allocation9 + $0x708] sm:$0xff]
    %v1023 = vld [vmem:[#allocation9 + $0x710] sm:$0xff]
    %v1024 = vld [vmem:[#allocation9 + $0x718] sm:$0xff]
    %v1025 = vld [vmem:[#allocation9 + $0x720] sm:$0xff]
    %v1026 = vld [vmem:[#allocation9 + $0x728] sm:$0xff]
    %v1027 = vld [vmem:[#allocation9 + $0x730] sm:$0xff]
    %v1028 = vld [vmem:[#allocation9 + $0x738] sm:$0xff]
    %v1029 = vld [vmem:[#allocation9 + $0x740] sm:$0xff]
    %v1030 = vld [vmem:[#allocation9 + $0x748] sm:$0xff]
    %v1031 = vld [vmem:[#allocation9 + $0x750] sm:$0xff]
    %v1032 = vld [vmem:[#allocation9 + $0x758] sm:$0xff]
    %v1033 = vld [vmem:[#allocation9 + $0x760] sm:$0xff]
    %v1034 = vld [vmem:[#allocation9 + $0x768] sm:$0xff]
    %v1035 = vld [vmem:[#allocation9 + $0x770] sm:$0xff]
    %v1036 = vld [vmem:[#allocation9 + $0x778] sm:$0xff]
    %v1037 = vld [vmem:[#allocation9 + $0x780] sm:$0xff]
    %v1038 = vld [vmem:[#allocation9 + $0x788] sm:$0xff]
    %v1039 = vld [vmem:[#allocation9 + $0x790] sm:$0xff]
    %v1040 = vld [vmem:[#allocation9 + $0x798] sm:$0xff]
    %v1041 = vld [vmem:[#allocation9 + $0x7a0] sm:$0xff]
    %v1042 = vld [vmem:[#allocation9 + $0x7a8] sm:$0xff]
    %v1043 = vld [vmem:[#allocation9 + $0x7b0] sm:$0xff]
    %v1044 = vld [vmem:[#allocation9 + $0x7b8] sm:$0xff]
    %v1045 = vld [vmem:[#allocation9 + $0x7c0] sm:$0xff]
    %v1046 = vld [vmem:[#allocation9 + $0x7c8] sm:$0xff]
    %v1047 = vld [vmem:[#allocation9 + $0x7d0] sm:$0xff]
    %v1048 = vld [vmem:[#allocation9 + $0x7d8] sm:$0xff]
    %v1049 = vld [vmem:[#allocation9 + $0x7e0] sm:$0xff]
    %v1050 = vld [vmem:[#allocation9 + $0x7e8] sm:$0xff]
    %v1051 = vld [vmem:[#allocation9 + $0x7f0] sm:$0xff]
    %v1052 = vld [vmem:[#allocation9 + $0x7f8] sm:$0xff]
    %v1053 = vld [vmem:[#allocation10] sm:$0xff]
    %v1055 = vlaneseq
    %v1056 = vshrl.u32 %v1055, 7
    %v1057 = vsub.s32 0, %v1056
    %v1058 = vrot.slane %v1053, %v1057
    %v1059 = vlaneseq
    %v1060 = vshrl.u32 %v1059, 7
    %v1061 = vsub.s32 1, %v1060
    %v1062 = vrot.slane %v1053, %v1061
    %v1063 = vlaneseq
    %v1064 = vshrl.u32 %v1063, 7
    %v1065 = vsub.s32 2, %v1064
    %v1066 = vrot.slane %v1053, %v1065
    %v1067 = vlaneseq
    %v1068 = vshrl.u32 %v1067, 7
    %v1069 = vsub.s32 3, %v1068
    %v1070 = vrot.slane %v1053, %v1069
    %v1071 = vlaneseq
    %v1072 = vshrl.u32 %v1071, 7
    %v1073 = vsub.s32 4, %v1072
    %v1074 = vrot.slane %v1053, %v1073
    %v1075 = vlaneseq
    %v1076 = vshrl.u32 %v1075, 7
    %v1077 = vsub.s32 5, %v1076
    %v1078 = vrot.slane %v1053, %v1077
    %v1079 = vlaneseq
    %v1080 = vshrl.u32 %v1079, 7
    %v1081 = vsub.s32 6, %v1080
    %v1082 = vrot.slane %v1053, %v1081
    %v1083 = vlaneseq
    %v1084 = vshrl.u32 %v1083, 7
    %v1085 = vsub.s32 7, %v1084
    %v1086 = vrot.slane %v1053, %v1085
    %v1351 = vunpack.c.l.b16 %v797
    %v1352 = vunpack.c.h.b16 %v797
    %v1353 = vunpack.c.l.b16 %v798
    %v1354 = vunpack.c.h.b16 %v798
    %v1355 = vunpack.c.l.b16 %v799
    %v1356 = vunpack.c.h.b16 %v799
    %v1357 = vunpack.c.l.b16 %v800
    %v1358 = vunpack.c.h.b16 %v800
    %v1359 = vunpack.c.l.b16 %v801
    %v1360 = vunpack.c.h.b16 %v801
    %v1361 = vunpack.c.l.b16 %v802
    %v1362 = vunpack.c.h.b16 %v802
    %v1363 = vunpack.c.l.b16 %v803
    %v1364 = vunpack.c.h.b16 %v803
    %v1365 = vunpack.c.l.b16 %v804
    %v1366 = vunpack.c.h.b16 %v804
    %v1367 = vunpack.c.l.b16 %v805
    %v1368 = vunpack.c.h.b16 %v805
    %v1369 = vunpack.c.l.b16 %v806
    %v1370 = vunpack.c.h.b16 %v806
    %v1371 = vunpack.c.l.b16 %v807
    %v1372 = vunpack.c.h.b16 %v807
    %v1373 = vunpack.c.l.b16 %v808
    %v1374 = vunpack.c.h.b16 %v808
    %v1375 = vunpack.c.l.b16 %v809
    %v1376 = vunpack.c.h.b16 %v809
    %v1377 = vunpack.c.l.b16 %v810
    %v1378 = vunpack.c.h.b16 %v810
    %v1379 = vunpack.c.l.b16 %v811
    %v1380 = vunpack.c.h.b16 %v811
    %v1381 = vunpack.c.l.b16 %v812
    %v1382 = vunpack.c.h.b16 %v812
    %v1383 = vunpack.c.l.b16 %v813
    %v1384 = vunpack.c.h.b16 %v813
    %v1385 = vunpack.c.l.b16 %v814
    %v1386 = vunpack.c.h.b16 %v814
    %v1387 = vunpack.c.l.b16 %v815
    %v1388 = vunpack.c.h.b16 %v815
    %v1389 = vunpack.c.l.b16 %v816
    %v1390 = vunpack.c.h.b16 %v816
    %v1391 = vunpack.c.l.b16 %v817
    %v1392 = vunpack.c.h.b16 %v817
    %v1393 = vunpack.c.l.b16 %v818
    %v1394 = vunpack.c.h.b16 %v818
    %v1395 = vunpack.c.l.b16 %v819
    %v1396 = vunpack.c.h.b16 %v819
    %v1397 = vunpack.c.l.b16 %v820
    %v1398 = vunpack.c.h.b16 %v820
    %v1399 = vunpack.c.l.b16 %v821
    %v1400 = vunpack.c.h.b16 %v821
    %v1401 = vunpack.c.l.b16 %v822
    %v1402 = vunpack.c.h.b16 %v822
    %v1403 = vunpack.c.l.b16 %v823
    %v1404 = vunpack.c.h.b16 %v823
    %v1405 = vunpack.c.l.b16 %v824
    %v1406 = vunpack.c.h.b16 %v824
    %v1407 = vunpack.c.l.b16 %v825
    %v1408 = vunpack.c.h.b16 %v825
    %v1409 = vunpack.c.l.b16 %v826
    %v1410 = vunpack.c.h.b16 %v826
    %v1411 = vunpack.c.l.b16 %v827
    %v1412 = vunpack.c.h.b16 %v827
    %v1413 = vunpack.c.l.b16 %v828
    %v1414 = vunpack.c.h.b16 %v828
    %v1415 = vunpack.c.l.b16 %v829
    %v1416 = vunpack.c.h.b16 %v829
    %v1417 = vunpack.c.l.b16 %v830
    %v1418 = vunpack.c.h.b16 %v830
    %v1419 = vunpack.c.l.b16 %v831
    %v1420 = vunpack.c.h.b16 %v831
    %v1421 = vunpack.c.l.b16 %v832
    %v1422 = vunpack.c.h.b16 %v832
    %v1423 = vunpack.c.l.b16 %v833
    %v1424 = vunpack.c.h.b16 %v833
    %v1425 = vunpack.c.l.b16 %v834
    %v1426 = vunpack.c.h.b16 %v834
    %v1427 = vunpack.c.l.b16 %v835
    %v1428 = vunpack.c.h.b16 %v835
    %v1429 = vunpack.c.l.b16 %v836
    %v1430 = vunpack.c.h.b16 %v836
    %v1431 = vunpack.c.l.b16 %v837
    %v1432 = vunpack.c.h.b16 %v837
    %v1433 = vunpack.c.l.b16 %v838
    %v1434 = vunpack.c.h.b16 %v838
    %v1435 = vunpack.c.l.b16 %v839
    %v1436 = vunpack.c.h.b16 %v839
    %v1437 = vunpack.c.l.b16 %v840
    %v1438 = vunpack.c.h.b16 %v840
    %v1439 = vunpack.c.l.b16 %v841
    %v1440 = vunpack.c.h.b16 %v841
    %v1441 = vunpack.c.l.b16 %v842
    %v1442 = vunpack.c.h.b16 %v842
    %v1443 = vunpack.c.l.b16 %v843
    %v1444 = vunpack.c.h.b16 %v843
    %v1445 = vunpack.c.l.b16 %v844
    %v1446 = vunpack.c.h.b16 %v844
    %v1447 = vunpack.c.l.b16 %v845
    %v1448 = vunpack.c.h.b16 %v845
    %v1449 = vunpack.c.l.b16 %v846
    %v1450 = vunpack.c.h.b16 %v846
    %v1451 = vunpack.c.l.b16 %v847
    %v1452 = vunpack.c.h.b16 %v847
    %v1453 = vunpack.c.l.b16 %v848
    %v1454 = vunpack.c.h.b16 %v848
    %v1455 = vunpack.c.l.b16 %v849
    %v1456 = vunpack.c.h.b16 %v849
    %v1457 = vunpack.c.l.b16 %v850
    %v1458 = vunpack.c.h.b16 %v850
    %v1459 = vunpack.c.l.b16 %v851
    %v1460 = vunpack.c.h.b16 %v851
    %v1461 = vunpack.c.l.b16 %v852
    %v1462 = vunpack.c.h.b16 %v852
    %v1463 = vunpack.c.l.b16 %v853
    %v1464 = vunpack.c.h.b16 %v853
    %v1465 = vunpack.c.l.b16 %v854
    %v1466 = vunpack.c.h.b16 %v854
    %v1467 = vunpack.c.l.b16 %v855
    %v1468 = vunpack.c.h.b16 %v855
    %v1469 = vunpack.c.l.b16 %v856
    %v1470 = vunpack.c.h.b16 %v856
    %v1471 = vunpack.c.l.b16 %v857
    %v1472 = vunpack.c.h.b16 %v857
    %v1473 = vunpack.c.l.b16 %v858
    %v1474 = vunpack.c.h.b16 %v858
    %v1475 = vunpack.c.l.b16 %v859
    %v1476 = vunpack.c.h.b16 %v859
    %v1477 = vunpack.c.l.b16 %v860
    %v1478 = vunpack.c.h.b16 %v860
    %v1479 = vunpack.c.l.b16 %v861
    %v1480 = vunpack.c.h.b16 %v861
    %v1481 = vunpack.c.l.b16 %v862
    %v1482 = vunpack.c.h.b16 %v862
    %v1483 = vunpack.c.l.b16 %v863
    %v1484 = vunpack.c.h.b16 %v863
    %v1485 = vunpack.c.l.b16 %v864
    %v1486 = vunpack.c.h.b16 %v864
    %v1487 = vunpack.c.l.b16 %v865
    %v1488 = vunpack.c.h.b16 %v865
    %v1489 = vunpack.c.l.b16 %v866
    %v1490 = vunpack.c.h.b16 %v866
    %v1491 = vunpack.c.l.b16 %v867
    %v1492 = vunpack.c.h.b16 %v867
    %v1493 = vunpack.c.l.b16 %v868
    %v1494 = vunpack.c.h.b16 %v868
    %v1495 = vunpack.c.l.b16 %v869
    %v1496 = vunpack.c.h.b16 %v869
    %v1497 = vunpack.c.l.b16 %v870
    %v1498 = vunpack.c.h.b16 %v870
    %v1499 = vunpack.c.l.b16 %v871
    %v1500 = vunpack.c.h.b16 %v871
    %v1501 = vunpack.c.l.b16 %v872
    %v1502 = vunpack.c.h.b16 %v872
    %v1503 = vunpack.c.l.b16 %v873
    %v1504 = vunpack.c.h.b16 %v873
    %v1505 = vunpack.c.l.b16 %v874
    %v1506 = vunpack.c.h.b16 %v874
    %v1507 = vunpack.c.l.b16 %v875
    %v1508 = vunpack.c.h.b16 %v875
    %v1509 = vunpack.c.l.b16 %v876
    %v1510 = vunpack.c.h.b16 %v876
    %v1511 = vunpack.c.l.b16 %v877
    %v1512 = vunpack.c.h.b16 %v877
    %v1513 = vunpack.c.l.b16 %v878
    %v1514 = vunpack.c.h.b16 %v878
    %v1515 = vunpack.c.l.b16 %v879
    %v1516 = vunpack.c.h.b16 %v879
    %v1517 = vunpack.c.l.b16 %v880
    %v1518 = vunpack.c.h.b16 %v880
    %v1519 = vunpack.c.l.b16 %v881
    %v1520 = vunpack.c.h.b16 %v881
    %v1521 = vunpack.c.l.b16 %v882
    %v1522 = vunpack.c.h.b16 %v882
    %v1523 = vunpack.c.l.b16 %v883
    %v1524 = vunpack.c.h.b16 %v883
    %v1525 = vunpack.c.l.b16 %v884
    %v1526 = vunpack.c.h.b16 %v884
    %v1527 = vunpack.c.l.b16 %v885
    %v1528 = vunpack.c.h.b16 %v885
    %v1529 = vunpack.c.l.b16 %v886
    %v1530 = vunpack.c.h.b16 %v886
    %v1531 = vunpack.c.l.b16 %v887
    %v1532 = vunpack.c.h.b16 %v887
    %v1533 = vunpack.c.l.b16 %v888
    %v1534 = vunpack.c.h.b16 %v888
    %v1535 = vunpack.c.l.b16 %v889
    %v1536 = vunpack.c.h.b16 %v889
    %v1537 = vunpack.c.l.b16 %v890
    %v1538 = vunpack.c.h.b16 %v890
    %v1539 = vunpack.c.l.b16 %v891
    %v1540 = vunpack.c.h.b16 %v891
    %v1541 = vunpack.c.l.b16 %v892
    %v1542 = vunpack.c.h.b16 %v892
    %v1543 = vunpack.c.l.b16 %v893
    %v1544 = vunpack.c.h.b16 %v893
    %v1545 = vunpack.c.l.b16 %v894
    %v1546 = vunpack.c.h.b16 %v894
    %v1547 = vunpack.c.l.b16 %v895
    %v1548 = vunpack.c.h.b16 %v895
    %v1549 = vunpack.c.l.b16 %v896
    %v1550 = vunpack.c.h.b16 %v896
    %v1551 = vunpack.c.l.b16 %v897
    %v1552 = vunpack.c.h.b16 %v897
    %v1553 = vunpack.c.l.b16 %v898
    %v1554 = vunpack.c.h.b16 %v898
    %v1555 = vunpack.c.l.b16 %v899
    %v1556 = vunpack.c.h.b16 %v899
    %v1557 = vunpack.c.l.b16 %v900
    %v1558 = vunpack.c.h.b16 %v900
    %v1559 = vunpack.c.l.b16 %v901
    %v1560 = vunpack.c.h.b16 %v901
    %v1561 = vunpack.c.l.b16 %v902
    %v1562 = vunpack.c.h.b16 %v902
    %v1563 = vunpack.c.l.b16 %v903
    %v1564 = vunpack.c.h.b16 %v903
    %v1565 = vunpack.c.l.b16 %v904
    %v1566 = vunpack.c.h.b16 %v904
    %v1567 = vunpack.c.l.b16 %v905
    %v1568 = vunpack.c.h.b16 %v905
    %v1569 = vunpack.c.l.b16 %v906
    %v1570 = vunpack.c.h.b16 %v906
    %v1571 = vunpack.c.l.b16 %v907
    %v1572 = vunpack.c.h.b16 %v907
    %v1573 = vunpack.c.l.b16 %v908
    %v1574 = vunpack.c.h.b16 %v908
    %v1575 = vunpack.c.l.b16 %v909
    %v1576 = vunpack.c.h.b16 %v909
    %v1577 = vunpack.c.l.b16 %v910
    %v1578 = vunpack.c.h.b16 %v910
    %v1579 = vunpack.c.l.b16 %v911
    %v1580 = vunpack.c.h.b16 %v911
    %v1581 = vunpack.c.l.b16 %v912
    %v1582 = vunpack.c.h.b16 %v912
    %v1583 = vunpack.c.l.b16 %v913
    %v1584 = vunpack.c.h.b16 %v913
    %v1585 = vunpack.c.l.b16 %v914
    %v1586 = vunpack.c.h.b16 %v914
    %v1587 = vunpack.c.l.b16 %v915
    %v1588 = vunpack.c.h.b16 %v915
    %v1589 = vunpack.c.l.b16 %v916
    %v1590 = vunpack.c.h.b16 %v916
    %v1591 = vunpack.c.l.b16 %v917
    %v1592 = vunpack.c.h.b16 %v917
    %v1593 = vunpack.c.l.b16 %v918
    %v1594 = vunpack.c.h.b16 %v918
    %v1595 = vunpack.c.l.b16 %v919
    %v1596 = vunpack.c.h.b16 %v919
    %v1597 = vunpack.c.l.b16 %v920
    %v1598 = vunpack.c.h.b16 %v920
    %v1599 = vunpack.c.l.b16 %v921
    %v1600 = vunpack.c.h.b16 %v921
    %v1601 = vunpack.c.l.b16 %v922
    %v1602 = vunpack.c.h.b16 %v922
    %v1603 = vunpack.c.l.b16 %v923
    %v1604 = vunpack.c.h.b16 %v923
    %v1605 = vunpack.c.l.b16 %v924
    %v1606 = vunpack.c.h.b16 %v924
    %v1607 = vunpack.c.l.b16 %v925
    %v1608 = vunpack.c.h.b16 %v925
    %v1609 = vunpack.c.l.b16 %v926
    %v1610 = vunpack.c.h.b16 %v926
    %v1611 = vunpack.c.l.b16 %v927
    %v1612 = vunpack.c.h.b16 %v927
    %v1613 = vunpack.c.l.b16 %v928
    %v1614 = vunpack.c.h.b16 %v928
    %v1615 = vunpack.c.l.b16 %v929
    %v1616 = vunpack.c.h.b16 %v929
    %v1617 = vunpack.c.l.b16 %v930
    %v1618 = vunpack.c.h.b16 %v930
    %v1619 = vunpack.c.l.b16 %v931
    %v1620 = vunpack.c.h.b16 %v931
    %v1621 = vunpack.c.l.b16 %v932
    %v1622 = vunpack.c.h.b16 %v932
    %v1623 = vunpack.c.l.b16 %v933
    %v1624 = vunpack.c.h.b16 %v933
    %v1625 = vunpack.c.l.b16 %v934
    %v1626 = vunpack.c.h.b16 %v934
    %v1627 = vunpack.c.l.b16 %v935
    %v1628 = vunpack.c.h.b16 %v935
    %v1629 = vunpack.c.l.b16 %v936
    %v1630 = vunpack.c.h.b16 %v936
    %v1631 = vunpack.c.l.b16 %v937
    %v1632 = vunpack.c.h.b16 %v937
    %v1633 = vunpack.c.l.b16 %v938
    %v1634 = vunpack.c.h.b16 %v938
    %v1635 = vunpack.c.l.b16 %v939
    %v1636 = vunpack.c.h.b16 %v939
    %v1637 = vunpack.c.l.b16 %v940
    %v1638 = vunpack.c.h.b16 %v940
    %v1639 = vunpack.c.l.b16 %v941
    %v1640 = vunpack.c.h.b16 %v941
    %v1641 = vunpack.c.l.b16 %v942
    %v1642 = vunpack.c.h.b16 %v942
    %v1643 = vunpack.c.l.b16 %v943
    %v1644 = vunpack.c.h.b16 %v943
    %v1645 = vunpack.c.l.b16 %v944
    %v1646 = vunpack.c.h.b16 %v944
    %v1647 = vunpack.c.l.b16 %v945
    %v1648 = vunpack.c.h.b16 %v945
    %v1649 = vunpack.c.l.b16 %v946
    %v1650 = vunpack.c.h.b16 %v946
    %v1651 = vunpack.c.l.b16 %v947
    %v1652 = vunpack.c.h.b16 %v947
    %v1653 = vunpack.c.l.b16 %v948
    %v1654 = vunpack.c.h.b16 %v948
    %v1655 = vunpack.c.l.b16 %v949
    %v1656 = vunpack.c.h.b16 %v949
    %v1657 = vunpack.c.l.b16 %v950
    %v1658 = vunpack.c.h.b16 %v950
    %v1659 = vunpack.c.l.b16 %v951
    %v1660 = vunpack.c.h.b16 %v951
    %v1661 = vunpack.c.l.b16 %v952
    %v1662 = vunpack.c.h.b16 %v952
    %v1663 = vunpack.c.l.b16 %v953
    %v1664 = vunpack.c.h.b16 %v953
    %v1665 = vunpack.c.l.b16 %v954
    %v1666 = vunpack.c.h.b16 %v954
    %v1667 = vunpack.c.l.b16 %v955
    %v1668 = vunpack.c.h.b16 %v955
    %v1669 = vunpack.c.l.b16 %v956
    %v1670 = vunpack.c.h.b16 %v956
    %v1671 = vunpack.c.l.b16 %v957
    %v1672 = vunpack.c.h.b16 %v957
    %v1673 = vunpack.c.l.b16 %v958
    %v1674 = vunpack.c.h.b16 %v958
    %v1675 = vunpack.c.l.b16 %v959
    %v1676 = vunpack.c.h.b16 %v959
    %v1677 = vunpack.c.l.b16 %v960
    %v1678 = vunpack.c.h.b16 %v960
    %v1679 = vunpack.c.l.b16 %v961
    %v1680 = vunpack.c.h.b16 %v961
    %v1681 = vunpack.c.l.b16 %v962
    %v1682 = vunpack.c.h.b16 %v962
    %v1683 = vunpack.c.l.b16 %v963
    %v1684 = vunpack.c.h.b16 %v963
    %v1685 = vunpack.c.l.b16 %v964
    %v1686 = vunpack.c.h.b16 %v964
    %v1687 = vunpack.c.l.b16 %v965
    %v1688 = vunpack.c.h.b16 %v965
    %v1689 = vunpack.c.l.b16 %v966
    %v1690 = vunpack.c.h.b16 %v966
    %v1691 = vunpack.c.l.b16 %v967
    %v1692 = vunpack.c.h.b16 %v967
    %v1693 = vunpack.c.l.b16 %v968
    %v1694 = vunpack.c.h.b16 %v968
    %v1695 = vunpack.c.l.b16 %v969
    %v1696 = vunpack.c.h.b16 %v969
    %v1697 = vunpack.c.l.b16 %v970
    %v1698 = vunpack.c.h.b16 %v970
    %v1699 = vunpack.c.l.b16 %v971
    %v1700 = vunpack.c.h.b16 %v971
    %v1701 = vunpack.c.l.b16 %v972
    %v1702 = vunpack.c.h.b16 %v972
    %v1703 = vunpack.c.l.b16 %v973
    %v1704 = vunpack.c.h.b16 %v973
    %v1705 = vunpack.c.l.b16 %v974
    %v1706 = vunpack.c.h.b16 %v974
    %v1707 = vunpack.c.l.b16 %v975
    %v1708 = vunpack.c.h.b16 %v975
    %v1709 = vunpack.c.l.b16 %v976
    %v1710 = vunpack.c.h.b16 %v976
    %v1711 = vunpack.c.l.b16 %v977
    %v1712 = vunpack.c.h.b16 %v977
    %v1713 = vunpack.c.l.b16 %v978
    %v1714 = vunpack.c.h.b16 %v978
    %v1715 = vunpack.c.l.b16 %v979
    %v1716 = vunpack.c.h.b16 %v979
    %v1717 = vunpack.c.l.b16 %v980
    %v1718 = vunpack.c.h.b16 %v980
    %v1719 = vunpack.c.l.b16 %v981
    %v1720 = vunpack.c.h.b16 %v981
    %v1721 = vunpack.c.l.b16 %v982
    %v1722 = vunpack.c.h.b16 %v982
    %v1723 = vunpack.c.l.b16 %v983
    %v1724 = vunpack.c.h.b16 %v983
    %v1725 = vunpack.c.l.b16 %v984
    %v1726 = vunpack.c.h.b16 %v984
    %v1727 = vunpack.c.l.b16 %v985
    %v1728 = vunpack.c.h.b16 %v985
    %v1729 = vunpack.c.l.b16 %v986
    %v1730 = vunpack.c.h.b16 %v986
    %v1731 = vunpack.c.l.b16 %v987
    %v1732 = vunpack.c.h.b16 %v987
    %v1733 = vunpack.c.l.b16 %v988
    %v1734 = vunpack.c.h.b16 %v988
    %v1735 = vunpack.c.l.b16 %v989
    %v1736 = vunpack.c.h.b16 %v989
    %v1737 = vunpack.c.l.b16 %v990
    %v1738 = vunpack.c.h.b16 %v990
    %v1739 = vunpack.c.l.b16 %v991
    %v1740 = vunpack.c.h.b16 %v991
    %v1741 = vunpack.c.l.b16 %v992
    %v1742 = vunpack.c.h.b16 %v992
    %v1743 = vunpack.c.l.b16 %v993
    %v1744 = vunpack.c.h.b16 %v993
    %v1745 = vunpack.c.l.b16 %v994
    %v1746 = vunpack.c.h.b16 %v994
    %v1747 = vunpack.c.l.b16 %v995
    %v1748 = vunpack.c.h.b16 %v995
    %v1749 = vunpack.c.l.b16 %v996
    %v1750 = vunpack.c.h.b16 %v996
    %v1751 = vunpack.c.l.b16 %v997
    %v1752 = vunpack.c.h.b16 %v997
    %v1753 = vunpack.c.l.b16 %v998
    %v1754 = vunpack.c.h.b16 %v998
    %v1755 = vunpack.c.l.b16 %v999
    %v1756 = vunpack.c.h.b16 %v999
    %v1757 = vunpack.c.l.b16 %v1000
    %v1758 = vunpack.c.h.b16 %v1000
    %v1759 = vunpack.c.l.b16 %v1001
    %v1760 = vunpack.c.h.b16 %v1001
    %v1761 = vunpack.c.l.b16 %v1002
    %v1762 = vunpack.c.h.b16 %v1002
    %v1763 = vunpack.c.l.b16 %v1003
    %v1764 = vunpack.c.h.b16 %v1003
    %v1765 = vunpack.c.l.b16 %v1004
    %v1766 = vunpack.c.h.b16 %v1004
    %v1767 = vunpack.c.l.b16 %v1005
    %v1768 = vunpack.c.h.b16 %v1005
    %v1769 = vunpack.c.l.b16 %v1006
    %v1770 = vunpack.c.h.b16 %v1006
    %v1771 = vunpack.c.l.b16 %v1007
    %v1772 = vunpack.c.h.b16 %v1007
    %v1773 = vunpack.c.l.b16 %v1008
    %v1774 = vunpack.c.h.b16 %v1008
    %v1775 = vunpack.c.l.b16 %v1009
    %v1776 = vunpack.c.h.b16 %v1009
    %v1777 = vunpack.c.l.b16 %v1010
    %v1778 = vunpack.c.h.b16 %v1010
    %v1779 = vunpack.c.l.b16 %v1011
    %v1780 = vunpack.c.h.b16 %v1011
    %v1781 = vunpack.c.l.b16 %v1012
    %v1782 = vunpack.c.h.b16 %v1012
    %v1783 = vunpack.c.l.b16 %v1013
    %v1784 = vunpack.c.h.b16 %v1013
    %v1785 = vunpack.c.l.b16 %v1014
    %v1786 = vunpack.c.h.b16 %v1014
    %v1787 = vunpack.c.l.b16 %v1015
    %v1788 = vunpack.c.h.b16 %v1015
    %v1789 = vunpack.c.l.b16 %v1016
    %v1790 = vunpack.c.h.b16 %v1016
    %v1791 = vunpack.c.l.b16 %v1017
    %v1792 = vunpack.c.h.b16 %v1017
    %v1793 = vunpack.c.l.b16 %v1018
    %v1794 = vunpack.c.h.b16 %v1018
    %v1795 = vunpack.c.l.b16 %v1019
    %v1796 = vunpack.c.h.b16 %v1019
    %v1797 = vunpack.c.l.b16 %v1020
    %v1798 = vunpack.c.h.b16 %v1020
    %v1799 = vunpack.c.l.b16 %v1021
    %v1800 = vunpack.c.h.b16 %v1021
    %v1801 = vunpack.c.l.b16 %v1022
    %v1802 = vunpack.c.h.b16 %v1022
    %v1803 = vunpack.c.l.b16 %v1023
    %v1804 = vunpack.c.h.b16 %v1023
    %v1805 = vunpack.c.l.b16 %v1024
    %v1806 = vunpack.c.h.b16 %v1024
    %v1807 = vunpack.c.l.b16 %v1025
    %v1808 = vunpack.c.h.b16 %v1025
    %v1809 = vunpack.c.l.b16 %v1026
    %v1810 = vunpack.c.h.b16 %v1026
    %v1811 = vunpack.c.l.b16 %v1027
    %v1812 = vunpack.c.h.b16 %v1027
    %v1813 = vunpack.c.l.b16 %v1028
    %v1814 = vunpack.c.h.b16 %v1028
    %v1815 = vunpack.c.l.b16 %v1029
    %v1816 = vunpack.c.h.b16 %v1029
    %v1817 = vunpack.c.l.b16 %v1030
    %v1818 = vunpack.c.h.b16 %v1030
    %v1819 = vunpack.c.l.b16 %v1031
    %v1820 = vunpack.c.h.b16 %v1031
    %v1821 = vunpack.c.l.b16 %v1032
    %v1822 = vunpack.c.h.b16 %v1032
    %v1823 = vunpack.c.l.b16 %v1033
    %v1824 = vunpack.c.h.b16 %v1033
    %v1825 = vunpack.c.l.b16 %v1034
    %v1826 = vunpack.c.h.b16 %v1034
    %v1827 = vunpack.c.l.b16 %v1035
    %v1828 = vunpack.c.h.b16 %v1035
    %v1829 = vunpack.c.l.b16 %v1036
    %v1830 = vunpack.c.h.b16 %v1036
    %v1831 = vunpack.c.l.b16 %v1037
    %v1832 = vunpack.c.h.b16 %v1037
    %v1833 = vunpack.c.l.b16 %v1038
    %v1834 = vunpack.c.h.b16 %v1038
    %v1835 = vunpack.c.l.b16 %v1039
    %v1836 = vunpack.c.h.b16 %v1039
    %v1837 = vunpack.c.l.b16 %v1040
    %v1838 = vunpack.c.h.b16 %v1040
    %v1839 = vunpack.c.l.b16 %v1041
    %v1840 = vunpack.c.h.b16 %v1041
    %v1841 = vunpack.c.l.b16 %v1042
    %v1842 = vunpack.c.h.b16 %v1042
    %v1843 = vunpack.c.l.b16 %v1043
    %v1844 = vunpack.c.h.b16 %v1043
    %v1845 = vunpack.c.l.b16 %v1044
    %v1846 = vunpack.c.h.b16 %v1044
    %v1847 = vunpack.c.l.b16 %v1045
    %v1848 = vunpack.c.h.b16 %v1045
    %v1849 = vunpack.c.l.b16 %v1046
    %v1850 = vunpack.c.h.b16 %v1046
    %v1851 = vunpack.c.l.b16 %v1047
    %v1852 = vunpack.c.h.b16 %v1047
    %v1853 = vunpack.c.l.b16 %v1048
    %v1854 = vunpack.c.h.b16 %v1048
    %v1855 = vunpack.c.l.b16 %v1049
    %v1856 = vunpack.c.h.b16 %v1049
    %v1857 = vunpack.c.l.b16 %v1050
    %v1858 = vunpack.c.h.b16 %v1050
    %v1859 = vunpack.c.l.b16 %v1051
    %v1860 = vunpack.c.h.b16 %v1051
    %v1861 = vunpack.c.l.b16 %v1052
    %v1862 = vunpack.c.h.b16 %v1052
    %v1863 = vpack.c.b16 %v1359, %v1351
    %v1864 = vpack.c.b16 %v1360, %v1352
    %v1865 = vpack.c.b16 %v1361, %v1353
    %v1866 = vpack.c.b16 %v1362, %v1354
    %v1867 = vpack.c.b16 %v1363, %v1355
    %v1868 = vpack.c.b16 %v1364, %v1356
    %v1869 = vpack.c.b16 %v1365, %v1357
    %v1870 = vpack.c.b16 %v1366, %v1358
    %v1871 = vpack.c.b16 %v1375, %v1367
    %v1872 = vpack.c.b16 %v1376, %v1368
    %v1873 = vpack.c.b16 %v1377, %v1369
    %v1874 = vpack.c.b16 %v1378, %v1370
    %v1875 = vpack.c.b16 %v1379, %v1371
    %v1876 = vpack.c.b16 %v1380, %v1372
    %v1877 = vpack.c.b16 %v1381, %v1373
    %v1878 = vpack.c.b16 %v1382, %v1374
    %v1879 = vpack.c.b16 %v1391, %v1383
    %v1880 = vpack.c.b16 %v1392, %v1384
    %v1881 = vpack.c.b16 %v1393, %v1385
    %v1882 = vpack.c.b16 %v1394, %v1386
    %v1883 = vpack.c.b16 %v1395, %v1387
    %v1884 = vpack.c.b16 %v1396, %v1388
    %v1885 = vpack.c.b16 %v1397, %v1389
    %v1886 = vpack.c.b16 %v1398, %v1390
    %v1887 = vpack.c.b16 %v1407, %v1399
    %v1888 = vpack.c.b16 %v1408, %v1400
    %v1889 = vpack.c.b16 %v1409, %v1401
    %v1890 = vpack.c.b16 %v1410, %v1402
    %v1891 = vpack.c.b16 %v1411, %v1403
    %v1892 = vpack.c.b16 %v1412, %v1404
    %v1893 = vpack.c.b16 %v1413, %v1405
    %v1894 = vpack.c.b16 %v1414, %v1406
    %v1895 = vpack.c.b16 %v1423, %v1415
    %v1896 = vpack.c.b16 %v1424, %v1416
    %v1897 = vpack.c.b16 %v1425, %v1417
    %v1898 = vpack.c.b16 %v1426, %v1418
    %v1899 = vpack.c.b16 %v1427, %v1419
    %v1900 = vpack.c.b16 %v1428, %v1420
    %v1901 = vpack.c.b16 %v1429, %v1421
    %v1902 = vpack.c.b16 %v1430, %v1422
    %v1903 = vpack.c.b16 %v1439, %v1431
    %v1904 = vpack.c.b16 %v1440, %v1432
    %v1905 = vpack.c.b16 %v1441, %v1433
    %v1906 = vpack.c.b16 %v1442, %v1434
    %v1907 = vpack.c.b16 %v1443, %v1435
    %v1908 = vpack.c.b16 %v1444, %v1436
    %v1909 = vpack.c.b16 %v1445, %v1437
    %v1910 = vpack.c.b16 %v1446, %v1438
    %v1911 = vpack.c.b16 %v1455, %v1447
    %v1912 = vpack.c.b16 %v1456, %v1448
    %v1913 = vpack.c.b16 %v1457, %v1449
    %v1914 = vpack.c.b16 %v1458, %v1450
    %v1915 = vpack.c.b16 %v1459, %v1451
    %v1916 = vpack.c.b16 %v1460, %v1452
    %v1917 = vpack.c.b16 %v1461, %v1453
    %v1918 = vpack.c.b16 %v1462, %v1454
    %v1919 = vpack.c.b16 %v1471, %v1463
    %v1920 = vpack.c.b16 %v1472, %v1464
    %v1921 = vpack.c.b16 %v1473, %v1465
    %v1922 = vpack.c.b16 %v1474, %v1466
    %v1923 = vpack.c.b16 %v1475, %v1467
    %v1924 = vpack.c.b16 %v1476, %v1468
    %v1925 = vpack.c.b16 %v1477, %v1469
    %v1926 = vpack.c.b16 %v1478, %v1470
    %v1927 = vpack.c.b16 %v1487, %v1479
    %v1928 = vpack.c.b16 %v1488, %v1480
    %v1929 = vpack.c.b16 %v1489, %v1481
    %v1930 = vpack.c.b16 %v1490, %v1482
    %v1931 = vpack.c.b16 %v1491, %v1483
    %v1932 = vpack.c.b16 %v1492, %v1484
    %v1933 = vpack.c.b16 %v1493, %v1485
    %v1934 = vpack.c.b16 %v1494, %v1486
    %v1935 = vpack.c.b16 %v1503, %v1495
    %v1936 = vpack.c.b16 %v1504, %v1496
    %v1937 = vpack.c.b16 %v1505, %v1497
    %v1938 = vpack.c.b16 %v1506, %v1498
    %v1939 = vpack.c.b16 %v1507, %v1499
    %v1940 = vpack.c.b16 %v1508, %v1500
    %v1941 = vpack.c.b16 %v1509, %v1501
    %v1942 = vpack.c.b16 %v1510, %v1502
    %v1943 = vpack.c.b16 %v1519, %v1511
    %v1944 = vpack.c.b16 %v1520, %v1512
    %v1945 = vpack.c.b16 %v1521, %v1513
    %v1946 = vpack.c.b16 %v1522, %v1514
    %v1947 = vpack.c.b16 %v1523, %v1515
    %v1948 = vpack.c.b16 %v1524, %v1516
    %v1949 = vpack.c.b16 %v1525, %v1517
    %v1950 = vpack.c.b16 %v1526, %v1518
    %v1951 = vpack.c.b16 %v1535, %v1527
    %v1952 = vpack.c.b16 %v1536, %v1528
    %v1953 = vpack.c.b16 %v1537, %v1529
    %v1954 = vpack.c.b16 %v1538, %v1530
    %v1955 = vpack.c.b16 %v1539, %v1531
    %v1956 = vpack.c.b16 %v1540, %v1532
    %v1957 = vpack.c.b16 %v1541, %v1533
    %v1958 = vpack.c.b16 %v1542, %v1534
    %v1959 = vpack.c.b16 %v1551, %v1543
    %v1960 = vpack.c.b16 %v1552, %v1544
    %v1961 = vpack.c.b16 %v1553, %v1545
    %v1962 = vpack.c.b16 %v1554, %v1546
    %v1963 = vpack.c.b16 %v1555, %v1547
    %v1964 = vpack.c.b16 %v1556, %v1548
    %v1965 = vpack.c.b16 %v1557, %v1549
    %v1966 = vpack.c.b16 %v1558, %v1550
    %v1967 = vpack.c.b16 %v1567, %v1559
    %v1968 = vpack.c.b16 %v1568, %v1560
    %v1969 = vpack.c.b16 %v1569, %v1561
    %v1970 = vpack.c.b16 %v1570, %v1562
    %v1971 = vpack.c.b16 %v1571, %v1563
    %v1972 = vpack.c.b16 %v1572, %v1564
    %v1973 = vpack.c.b16 %v1573, %v1565
    %v1974 = vpack.c.b16 %v1574, %v1566
    %v1975 = vpack.c.b16 %v1583, %v1575
    %v1976 = vpack.c.b16 %v1584, %v1576
    %v1977 = vpack.c.b16 %v1585, %v1577
    %v1978 = vpack.c.b16 %v1586, %v1578
    %v1979 = vpack.c.b16 %v1587, %v1579
    %v1980 = vpack.c.b16 %v1588, %v1580
    %v1981 = vpack.c.b16 %v1589, %v1581
    %v1982 = vpack.c.b16 %v1590, %v1582
    %v1983 = vpack.c.b16 %v1599, %v1591
    %v1984 = vpack.c.b16 %v1600, %v1592
    %v1985 = vpack.c.b16 %v1601, %v1593
    %v1986 = vpack.c.b16 %v1602, %v1594
    %v1987 = vpack.c.b16 %v1603, %v1595
    %v1988 = vpack.c.b16 %v1604, %v1596
    %v1989 = vpack.c.b16 %v1605, %v1597
    %v1990 = vpack.c.b16 %v1606, %v1598
    %v1991 = vpack.c.b16 %v1615, %v1607
    %v1992 = vpack.c.b16 %v1616, %v1608
    %v1993 = vpack.c.b16 %v1617, %v1609
    %v1994 = vpack.c.b16 %v1618, %v1610
    %v1995 = vpack.c.b16 %v1619, %v1611
    %v1996 = vpack.c.b16 %v1620, %v1612
    %v1997 = vpack.c.b16 %v1621, %v1613
    %v1998 = vpack.c.b16 %v1622, %v1614
    %v1999 = vpack.c.b16 %v1631, %v1623
    %v2000 = vpack.c.b16 %v1632, %v1624
    %v2001 = vpack.c.b16 %v1633, %v1625
    %v2002 = vpack.c.b16 %v1634, %v1626
    %v2003 = vpack.c.b16 %v1635, %v1627
    %v2004 = vpack.c.b16 %v1636, %v1628
    %v2005 = vpack.c.b16 %v1637, %v1629
    %v2006 = vpack.c.b16 %v1638, %v1630
    %v2007 = vpack.c.b16 %v1647, %v1639
    %v2008 = vpack.c.b16 %v1648, %v1640
    %v2009 = vpack.c.b16 %v1649, %v1641
    %v2010 = vpack.c.b16 %v1650, %v1642
    %v2011 = vpack.c.b16 %v1651, %v1643
    %v2012 = vpack.c.b16 %v1652, %v1644
    %v2013 = vpack.c.b16 %v1653, %v1645
    %v2014 = vpack.c.b16 %v1654, %v1646
    %v2015 = vpack.c.b16 %v1663, %v1655
    %v2016 = vpack.c.b16 %v1664, %v1656
    %v2017 = vpack.c.b16 %v1665, %v1657
    %v2018 = vpack.c.b16 %v1666, %v1658
    %v2019 = vpack.c.b16 %v1667, %v1659
    %v2020 = vpack.c.b16 %v1668, %v1660
    %v2021 = vpack.c.b16 %v1669, %v1661
    %v2022 = vpack.c.b16 %v1670, %v1662
    %v2023 = vpack.c.b16 %v1679, %v1671
    %v2024 = vpack.c.b16 %v1680, %v1672
    %v2025 = vpack.c.b16 %v1681, %v1673
    %v2026 = vpack.c.b16 %v1682, %v1674
    %v2027 = vpack.c.b16 %v1683, %v1675
    %v2028 = vpack.c.b16 %v1684, %v1676
    %v2029 = vpack.c.b16 %v1685, %v1677
    %v2030 = vpack.c.b16 %v1686, %v1678
    %v2031 = vpack.c.b16 %v1695, %v1687
    %v2032 = vpack.c.b16 %v1696, %v1688
    %v2033 = vpack.c.b16 %v1697, %v1689
    %v2034 = vpack.c.b16 %v1698, %v1690
    %v2035 = vpack.c.b16 %v1699, %v1691
    %v2036 = vpack.c.b16 %v1700, %v1692
    %v2037 = vpack.c.b16 %v1701, %v1693
    %v2038 = vpack.c.b16 %v1702, %v1694
    %v2039 = vpack.c.b16 %v1711, %v1703
    %v2040 = vpack.c.b16 %v1712, %v1704
    %v2041 = vpack.c.b16 %v1713, %v1705
    %v2042 = vpack.c.b16 %v1714, %v1706
    %v2043 = vpack.c.b16 %v1715, %v1707
    %v2044 = vpack.c.b16 %v1716, %v1708
    %v2045 = vpack.c.b16 %v1717, %v1709
    %v2046 = vpack.c.b16 %v1718, %v1710
    %v2047 = vpack.c.b16 %v1727, %v1719
    %v2048 = vpack.c.b16 %v1728, %v1720
    %v2049 = vpack.c.b16 %v1729, %v1721
    %v2050 = vpack.c.b16 %v1730, %v1722
    %v2051 = vpack.c.b16 %v1731, %v1723
    %v2052 = vpack.c.b16 %v1732, %v1724
    %v2053 = vpack.c.b16 %v1733, %v1725
    %v2054 = vpack.c.b16 %v1734, %v1726
    %v2055 = vpack.c.b16 %v1743, %v1735
    %v2056 = vpack.c.b16 %v1744, %v1736
    %v2057 = vpack.c.b16 %v1745, %v1737
    %v2058 = vpack.c.b16 %v1746, %v1738
    %v2059 = vpack.c.b16 %v1747, %v1739
    %v2060 = vpack.c.b16 %v1748, %v1740
    %v2061 = vpack.c.b16 %v1749, %v1741
    %v2062 = vpack.c.b16 %v1750, %v1742
    %v2063 = vpack.c.b16 %v1759, %v1751
    %v2064 = vpack.c.b16 %v1760, %v1752
    %v2065 = vpack.c.b16 %v1761, %v1753
    %v2066 = vpack.c.b16 %v1762, %v1754
    %v2067 = vpack.c.b16 %v1763, %v1755
    %v2068 = vpack.c.b16 %v1764, %v1756
    %v2069 = vpack.c.b16 %v1765, %v1757
    %v2070 = vpack.c.b16 %v1766, %v1758
    %v2071 = vpack.c.b16 %v1775, %v1767
    %v2072 = vpack.c.b16 %v1776, %v1768
    %v2073 = vpack.c.b16 %v1777, %v1769
    %v2074 = vpack.c.b16 %v1778, %v1770
    %v2075 = vpack.c.b16 %v1779, %v1771
    %v2076 = vpack.c.b16 %v1780, %v1772
    %v2077 = vpack.c.b16 %v1781, %v1773
    %v2078 = vpack.c.b16 %v1782, %v1774
    %v2079 = vpack.c.b16 %v1791, %v1783
    %v2080 = vpack.c.b16 %v1792, %v1784
    %v2081 = vpack.c.b16 %v1793, %v1785
    %v2082 = vpack.c.b16 %v1794, %v1786
    %v2083 = vpack.c.b16 %v1795, %v1787
    %v2084 = vpack.c.b16 %v1796, %v1788
    %v2085 = vpack.c.b16 %v1797, %v1789
    %v2086 = vpack.c.b16 %v1798, %v1790
    %v2087 = vpack.c.b16 %v1807, %v1799
    %v2088 = vpack.c.b16 %v1808, %v1800
    %v2089 = vpack.c.b16 %v1809, %v1801
    %v2090 = vpack.c.b16 %v1810, %v1802
    %v2091 = vpack.c.b16 %v1811, %v1803
    %v2092 = vpack.c.b16 %v1812, %v1804
    %v2093 = vpack.c.b16 %v1813, %v1805
    %v2094 = vpack.c.b16 %v1814, %v1806
    %v2095 = vpack.c.b16 %v1823, %v1815
    %v2096 = vpack.c.b16 %v1824, %v1816
    %v2097 = vpack.c.b16 %v1825, %v1817
    %v2098 = vpack.c.b16 %v1826, %v1818
    %v2099 = vpack.c.b16 %v1827, %v1819
    %v2100 = vpack.c.b16 %v1828, %v1820
    %v2101 = vpack.c.b16 %v1829, %v1821
    %v2102 = vpack.c.b16 %v1830, %v1822
    %v2103 = vpack.c.b16 %v1839, %v1831
    %v2104 = vpack.c.b16 %v1840, %v1832
    %v2105 = vpack.c.b16 %v1841, %v1833
    %v2106 = vpack.c.b16 %v1842, %v1834
    %v2107 = vpack.c.b16 %v1843, %v1835
    %v2108 = vpack.c.b16 %v1844, %v1836
    %v2109 = vpack.c.b16 %v1845, %v1837
    %v2110 = vpack.c.b16 %v1846, %v1838
    %v2111 = vpack.c.b16 %v1855, %v1847
    %v2112 = vpack.c.b16 %v1856, %v1848
    %v2113 = vpack.c.b16 %v1857, %v1849
    %v2114 = vpack.c.b16 %v1858, %v1850
    %v2115 = vpack.c.b16 %v1859, %v1851
    %v2116 = vpack.c.b16 %v1860, %v1852
    %v2117 = vpack.c.b16 %v1861, %v1853
    %v2118 = vpack.c.b16 %v1862, %v1854
    %2375 = vmatprep.subr.bf16.mxu0 %v1864
    %2376 = vmatpush1.bf16.msra.mxu0 %v1863
    %2377 = vmatprep.subr.bf16.mxu0 %v1872
    %2378 = vmatpush1.bf16.msra.mxu0 %v1871
    %2379 = vmatprep.subr.bf16.mxu0 %v1880
    %2380 = vmatpush1.bf16.msra.mxu0 %v1879
    %2381 = vmatprep.subr.bf16.mxu0 %v1888
    %2382 = vmatpush1.bf16.msra.mxu0 %v1887
    %2383 = vmatprep.subr.bf16.mxu0 %v1896
    %2384 = vmatpush1.bf16.msra.mxu0 %v1895
    %2385 = vmatprep.subr.bf16.mxu0 %v1904
    %2386 = vmatpush1.bf16.msra.mxu0 %v1903
    %2387 = vmatprep.subr.bf16.mxu0 %v1912
    %2388 = vmatpush1.bf16.msra.mxu0 %v1911
    %2389 = vmatprep.subr.bf16.mxu0 %v1920
    %2390 = vmatpush1.bf16.msra.mxu0 %v1919
    %2391 = vmatprep.subr.bf16.mxu0 %v1928
    %2392 = vmatpush1.bf16.msra.mxu0 %v1927
    %2393 = vmatprep.subr.bf16.mxu0 %v1936
    %2394 = vmatpush1.bf16.msra.mxu0 %v1935
    %2395 = vmatprep.subr.bf16.mxu0 %v1944
    %2396 = vmatpush1.bf16.msra.mxu0 %v1943
    %2397 = vmatprep.subr.bf16.mxu0 %v1952
    %2398 = vmatpush1.bf16.msra.mxu0 %v1951
    %2399 = vmatprep.subr.bf16.mxu0 %v1960
    %2400 = vmatpush1.bf16.msra.mxu0 %v1959
    %2401 = vmatprep.subr.bf16.mxu0 %v1968
    %2402 = vmatpush1.bf16.msra.mxu0 %v1967
    %2403 = vmatprep.subr.bf16.mxu0 %v1976
    %2404 = vmatpush1.bf16.msra.mxu0 %v1975
    %2405 = vmatprep.subr.bf16.mxu0 %v1984
    %2406 = vmatpush1.bf16.msra.mxu0 %v1983
    %2407 = vmatprep.mubr.bf16.mxu0 %v794
    %2408 = vmatmul.mubr.bf16.gmra.mrb[0].mxu0 %v793
    %v2409 = vpop.f32.mrb[0].mxu0
    %v2410 = vadd.f32 %v1058, %v2409
    %v2411 = vpop.f32.mrb[0].mxu0
    %v2412 = vadd.f32 %v1062, %v2411
    %v2413 = vpop.f32.mrb[0].mxu0
    %v2414 = vpop.f32.mrb[0].mxu0
    %2415 = vdwg.mxu0
    %2416 = vmatprep.subr.bf16.mxu0 %v1992
    %2417 = vmatpush1.bf16.msra.mxu0 %v1991
    %2418 = vmatprep.subr.bf16.mxu0 %v2000
    %2419 = vmatpush1.bf16.msra.mxu0 %v1999
    %2420 = vmatprep.subr.bf16.mxu0 %v2008
    %2421 = vmatpush1.bf16.msra.mxu0 %v2007
    %2422 = vmatprep.subr.bf16.mxu0 %v2016
    %2423 = vmatpush1.bf16.msra.mxu0 %v2015
    %2424 = vmatprep.subr.bf16.mxu0 %v2024
    %2425 = vmatpush1.bf16.msra.mxu0 %v2023
    %2426 = vmatprep.subr.bf16.mxu0 %v2032
    %2427 = vmatpush1.bf16.msra.mxu0 %v2031
    %2428 = vmatprep.subr.bf16.mxu0 %v2040
    %2429 = vmatpush1.bf16.msra.mxu0 %v2039
    %2430 = vmatprep.subr.bf16.mxu0 %v2048
    %2431 = vmatpush1.bf16.msra.mxu0 %v2047
    %2432 = vmatprep.subr.bf16.mxu0 %v2056
    %2433 = vmatpush1.bf16.msra.mxu0 %v2055
    %2434 = vmatprep.subr.bf16.mxu0 %v2064
    %2435 = vmatpush1.bf16.msra.mxu0 %v2063
    %2436 = vmatprep.subr.bf16.mxu0 %v2072
    %2437 = vmatpush1.bf16.msra.mxu0 %v2071
    %2438 = vmatprep.subr.bf16.mxu0 %v2080
    %2439 = vmatpush1.bf16.msra.mxu0 %v2079
    %2440 = vmatprep.subr.bf16.mxu0 %v2088
    %2441 = vmatpush1.bf16.msra.mxu0 %v2087
    %2442 = vmatprep.subr.bf16.mxu0 %v2096
    %2443 = vmatpush1.bf16.msra.mxu0 %v2095
    %2444 = vmatprep.subr.bf16.mxu0 %v2104
    %2445 = vmatpush1.bf16.msra.mxu0 %v2103
    %2446 = vmatprep.subr.bf16.mxu0 %v2112
    %2447 = vmatpush1.bf16.msra.mxu0 %v2111
    %2448 = vmatprep.mubr.bf16.mxu0 %v796
    %2449 = vmatmul.mubr.bf16.gmra.mrb[0].mxu0 %v795
    %v2450 = vpop.f32.mrb[0].mxu0
    %v2451 = vadd.f32 %v2410, %v2450
    %v2452 = vpop.f32.mrb[0].mxu0
    %v2453 = vadd.f32 %v2412, %v2452
    %v2454 = vpop.f32.mrb[0].mxu0
    %v2455 = vpop.f32.mrb[0].mxu0
    %2456 = vdwg.mxu0
    %2457 = vmatprep.subr.bf16.mxu0 %v1866
    %2458 = vmatpush1.bf16.msra.mxu0 %v1865
    %2459 = vmatprep.subr.bf16.mxu0 %v1874
    %2460 = vmatpush1.bf16.msra.mxu0 %v1873
    %2461 = vmatprep.subr.bf16.mxu0 %v1882
    %2462 = vmatpush1.bf16.msra.mxu0 %v1881
    %2463 = vmatprep.subr.bf16.mxu0 %v1890
    %2464 = vmatpush1.bf16.msra.mxu0 %v1889
    %2465 = vmatprep.subr.bf16.mxu0 %v1898
    %2466 = vmatpush1.bf16.msra.mxu0 %v1897
    %2467 = vmatprep.subr.bf16.mxu0 %v1906
    %2468 = vmatpush1.bf16.msra.mxu0 %v1905
    %2469 = vmatprep.subr.bf16.mxu0 %v1914
    %2470 = vmatpush1.bf16.msra.mxu0 %v1913
    %2471 = vmatprep.subr.bf16.mxu0 %v1922
    %2472 = vmatpush1.bf16.msra.mxu0 %v1921
    %2473 = vmatprep.subr.bf16.mxu0 %v1930
    %2474 = vmatpush1.bf16.msra.mxu0 %v1929
    %2475 = vmatprep.subr.bf16.mxu0 %v1938
    %2476 = vmatpush1.bf16.msra.mxu0 %v1937
    %2477 = vmatprep.subr.bf16.mxu0 %v1946
    %2478 = vmatpush1.bf16.msra.mxu0 %v1945
    %2479 = vmatprep.subr.bf16.mxu0 %v1954
    %2480 = vmatpush1.bf16.msra.mxu0 %v1953
    %2481 = vmatprep.subr.bf16.mxu0 %v1962
    %2482 = vmatpush1.bf16.msra.mxu0 %v1961
    %2483 = vmatprep.subr.bf16.mxu0 %v1970
    %2484 = vmatpush1.bf16.msra.mxu0 %v1969
    %2485 = vmatprep.subr.bf16.mxu0 %v1978
    %2486 = vmatpush1.bf16.msra.mxu0 %v1977
    %2487 = vmatprep.subr.bf16.mxu0 %v1986
    %2488 = vmatpush1.bf16.msra.mxu0 %v1985
    %2489 = vmatprep.mubr.bf16.mxu0 %v794
    %2490 = vmatmul.mubr.bf16.gmra.mrb[0].mxu0 %v793
    %v2491 = vpop.f32.mrb[0].mxu0
    %v2492 = vadd.f32 %v1066, %v2491
    %v2493 = vpop.f32.mrb[0].mxu0
    %v2494 = vadd.f32 %v1070, %v2493
    %v2495 = vpop.f32.mrb[0].mxu0
    %v2496 = vpop.f32.mrb[0].mxu0
    %2497 = vdwg.mxu0
    %2498 = vmatprep.subr.bf16.mxu0 %v1994
    %2499 = vmatpush1.bf16.msra.mxu0 %v1993
    %2500 = vmatprep.subr.bf16.mxu0 %v2002
    %2501 = vmatpush1.bf16.msra.mxu0 %v2001
    %2502 = vmatprep.subr.bf16.mxu0 %v2010
    %2503 = vmatpush1.bf16.msra.mxu0 %v2009
    %2504 = vmatprep.subr.bf16.mxu0 %v2018
    %2505 = vmatpush1.bf16.msra.mxu0 %v2017
    %2506 = vmatprep.subr.bf16.mxu0 %v2026
    %2507 = vmatpush1.bf16.msra.mxu0 %v2025
    %2508 = vmatprep.subr.bf16.mxu0 %v2034
    %2509 = vmatpush1.bf16.msra.mxu0 %v2033
    %2510 = vmatprep.subr.bf16.mxu0 %v2042
    %2511 = vmatpush1.bf16.msra.mxu0 %v2041
    %2512 = vmatprep.subr.bf16.mxu0 %v2050
    %2513 = vmatpush1.bf16.msra.mxu0 %v2049
    %2514 = vmatprep.subr.bf16.mxu0 %v2058
    %2515 = vmatpush1.bf16.msra.mxu0 %v2057
    %2516 = vmatprep.subr.bf16.mxu0 %v2066
    %2517 = vmatpush1.bf16.msra.mxu0 %v2065
    %2518 = vmatprep.subr.bf16.mxu0 %v2074
    %2519 = vmatpush1.bf16.msra.mxu0 %v2073
    %2520 = vmatprep.subr.bf16.mxu0 %v2082
    %2521 = vmatpush1.bf16.msra.mxu0 %v2081
    %2522 = vmatprep.subr.bf16.mxu0 %v2090
    %2523 = vmatpush1.bf16.msra.mxu0 %v2089
    %2524 = vmatprep.subr.bf16.mxu0 %v2098
    %2525 = vmatpush1.bf16.msra.mxu0 %v2097
    %2526 = vmatprep.subr.bf16.mxu0 %v2106
    %2527 = vmatpush1.bf16.msra.mxu0 %v2105
    %2528 = vmatprep.subr.bf16.mxu0 %v2114
    %2529 = vmatpush1.bf16.msra.mxu0 %v2113
    %2530 = vmatprep.mubr.bf16.mxu0 %v796
    %2531 = vmatmul.mubr.bf16.gmra.mrb[0].mxu0 %v795
    %v2532 = vpop.f32.mrb[0].mxu0
    %v2533 = vadd.f32 %v2492, %v2532
    %v2534 = vpop.f32.mrb[0].mxu0
    %v2535 = vadd.f32 %v2494, %v2534
    %v2536 = vpop.f32.mrb[0].mxu0
    %v2537 = vpop.f32.mrb[0].mxu0
    %2538 = vdwg.mxu0
    %2539 = vmatprep.subr.bf16.mxu0 %v1868
    %2540 = vmatpush1.bf16.msra.mxu0 %v1867
    %2541 = vmatprep.subr.bf16.mxu0 %v1876
    %2542 = vmatpush1.bf16.msra.mxu0 %v1875
    %2543 = vmatprep.subr.bf16.mxu0 %v1884
    %2544 = vmatpush1.bf16.msra.mxu0 %v1883
    %2545 = vmatprep.subr.bf16.mxu0 %v1892
    %2546 = vmatpush1.bf16.msra.mxu0 %v1891
    %2547 = vmatprep.subr.bf16.mxu0 %v1900
    %2548 = vmatpush1.bf16.msra.mxu0 %v1899
    %2549 = vmatprep.subr.bf16.mxu0 %v1908
    %2550 = vmatpush1.bf16.msra.mxu0 %v1907
    %2551 = vmatprep.subr.bf16.mxu0 %v1916
    %2552 = vmatpush1.bf16.msra.mxu0 %v1915
    %2553 = vmatprep.subr.bf16.mxu0 %v1924
    %2554 = vmatpush1.bf16.msra.mxu0 %v1923
    %2555 = vmatprep.subr.bf16.mxu0 %v1932
    %2556 = vmatpush1.bf16.msra.mxu0 %v1931
    %2557 = vmatprep.subr.bf16.mxu0 %v1940
    %2558 = vmatpush1.bf16.msra.mxu0 %v1939
    %2559 = vmatprep.subr.bf16.mxu0 %v1948
    %2560 = vmatpush1.bf16.msra.mxu0 %v1947
    %2561 = vmatprep.subr.bf16.mxu0 %v1956
    %2562 = vmatpush1.bf16.msra.mxu0 %v1955
    %2563 = vmatprep.subr.bf16.mxu0 %v1964
    %2564 = vmatpush1.bf16.msra.mxu0 %v1963
    %2565 = vmatprep.subr.bf16.mxu0 %v1972
    %2566 = vmatpush1.bf16.msra.mxu0 %v1971
    %2567 = vmatprep.subr.bf16.mxu0 %v1980
    %2568 = vmatpush1.bf16.msra.mxu0 %v1979
    %2569 = vmatprep.subr.bf16.mxu0 %v1988
    %2570 = vmatpush1.bf16.msra.mxu0 %v1987
    %2571 = vmatprep.mubr.bf16.mxu0 %v794
    %2572 = vmatmul.mubr.bf16.gmra.mrb[0].mxu0 %v793
    %v2573 = vpop.f32.mrb[0].mxu0
    %v2574 = vadd.f32 %v1074, %v2573
    %v2575 = vpop.f32.mrb[0].mxu0
    %v2576 = vadd.f32 %v1078, %v2575
    %v2577 = vpop.f32.mrb[0].mxu0
    %v2578 = vpop.f32.mrb[0].mxu0
    %2579 = vdwg.mxu0
    %2580 = vmatprep.subr.bf16.mxu0 %v1996
    %2581 = vmatpush1.bf16.msra.mxu0 %v1995
    %2582 = vmatprep.subr.bf16.mxu0 %v2004
    %2583 = vmatpush1.bf16.msra.mxu0 %v2003
    %2584 = vmatprep.subr.bf16.mxu0 %v2012
    %2585 = vmatpush1.bf16.msra.mxu0 %v2011
    %2586 = vmatprep.subr.bf16.mxu0 %v2020
    %2587 = vmatpush1.bf16.msra.mxu0 %v2019
    %2588 = vmatprep.subr.bf16.mxu0 %v2028
    %2589 = vmatpush1.bf16.msra.mxu0 %v2027
    %2590 = vmatprep.subr.bf16.mxu0 %v2036
    %2591 = vmatpush1.bf16.msra.mxu0 %v2035
    %2592 = vmatprep.subr.bf16.mxu0 %v2044
    %2593 = vmatpush1.bf16.msra.mxu0 %v2043
    %2594 = vmatprep.subr.bf16.mxu0 %v2052
    %2595 = vmatpush1.bf16.msra.mxu0 %v2051
    %2596 = vmatprep.subr.bf16.mxu0 %v2060
    %2597 = vmatpush1.bf16.msra.mxu0 %v2059
    %2598 = vmatprep.subr.bf16.mxu0 %v2068
    %2599 = vmatpush1.bf16.msra.mxu0 %v2067
    %2600 = vmatprep.subr.bf16.mxu0 %v2076
    %2601 = vmatpush1.bf16.msra.mxu0 %v2075
    %2602 = vmatprep.subr.bf16.mxu0 %v2084
    %2603 = vmatpush1.bf16.msra.mxu0 %v2083
    %2604 = vmatprep.subr.bf16.mxu0 %v2092
    %2605 = vmatpush1.bf16.msra.mxu0 %v2091
    %2606 = vmatprep.subr.bf16.mxu0 %v2100
    %2607 = vmatpush1.bf16.msra.mxu0 %v2099
    %2608 = vmatprep.subr.bf16.mxu0 %v2108
    %2609 = vmatpush1.bf16.msra.mxu0 %v2107
    %2610 = vmatprep.subr.bf16.mxu0 %v2116
    %2611 = vmatpush1.bf16.msra.mxu0 %v2115
    %2612 = vmatprep.mubr.bf16.mxu0 %v796
    %2613 = vmatmul.mubr.bf16.gmra.mrb[0].mxu0 %v795
    %v2614 = vpop.f32.mrb[0].mxu0
    %v2615 = vadd.f32 %v2574, %v2614
    %v2616 = vpop.f32.mrb[0].mxu0
    %v2617 = vadd.f32 %v2576, %v2616
    %v2618 = vpop.f32.mrb[0].mxu0
    %v2619 = vpop.f32.mrb[0].mxu0
    %2620 = vdwg.mxu0
    %2621 = vmatprep.subr.bf16.mxu0 %v1870
    %2622 = vmatpush1.bf16.msra.mxu0 %v1869
    %2623 = vmatprep.subr.bf16.mxu0 %v1878
    %2624 = vmatpush1.bf16.msra.mxu0 %v1877
    %2625 = vmatprep.subr.bf16.mxu0 %v1886
    %2626 = vmatpush1.bf16.msra.mxu0 %v1885
    %2627 = vmatprep.subr.bf16.mxu0 %v1894
    %2628 = vmatpush1.bf16.msra.mxu0 %v1893
    %2629 = vmatprep.subr.bf16.mxu0 %v1902
    %2630 = vmatpush1.bf16.msra.mxu0 %v1901
    %2631 = vmatprep.subr.bf16.mxu0 %v1910
    %2632 = vmatpush1.bf16.msra.mxu0 %v1909
    %2633 = vmatprep.subr.bf16.mxu0 %v1918
    %2634 = vmatpush1.bf16.msra.mxu0 %v1917
    %2635 = vmatprep.subr.bf16.mxu0 %v1926
    %2636 = vmatpush1.bf16.msra.mxu0 %v1925
    %2637 = vmatprep.subr.bf16.mxu0 %v1934
    %2638 = vmatpush1.bf16.msra.mxu0 %v1933
    %2639 = vmatprep.subr.bf16.mxu0 %v1942
    %2640 = vmatpush1.bf16.msra.mxu0 %v1941
    %2641 = vmatprep.subr.bf16.mxu0 %v1950
    %2642 = vmatpush1.bf16.msra.mxu0 %v1949
    %2643 = vmatprep.subr.bf16.mxu0 %v1958
    %2644 = vmatpush1.bf16.msra.mxu0 %v1957
    %2645 = vmatprep.subr.bf16.mxu0 %v1966
    %2646 = vmatpush1.bf16.msra.mxu0 %v1965
    %2647 = vmatprep.subr.bf16.mxu0 %v1974
    %2648 = vmatpush1.bf16.msra.mxu0 %v1973
    %2649 = vmatprep.subr.bf16.mxu0 %v1982
    %2650 = vmatpush1.bf16.msra.mxu0 %v1981
    %2651 = vmatprep.subr.bf16.mxu0 %v1990
    %2652 = vmatpush1.bf16.msra.mxu0 %v1989
    %2653 = vmatprep.mubr.bf16.mxu0 %v794
    %2654 = vmatmul.mubr.bf16.gmra.mrb[0].mxu0 %v793
    %v2655 = vpop.f32.mrb[0].mxu0
    %v2656 = vadd.f32 %v1082, %v2655
    %v2657 = vpop.f32.mrb[0].mxu0
    %v2658 = vadd.f32 %v1086, %v2657
    %v2659 = vpop.f32.mrb[0].mxu0
    %v2660 = vpop.f32.mrb[0].mxu0
    %2661 = vdwg.mxu0
    %2662 = vmatprep.subr.bf16.mxu0 %v1998
    %2663 = vmatpush1.bf16.msra.mxu0 %v1997
    %2664 = vmatprep.subr.bf16.mxu0 %v2006
    %2665 = vmatpush1.bf16.msra.mxu0 %v2005
    %2666 = vmatprep.subr.bf16.mxu0 %v2014
    %2667 = vmatpush1.bf16.msra.mxu0 %v2013
    %2668 = vmatprep.subr.bf16.mxu0 %v2022
    %2669 = vmatpush1.bf16.msra.mxu0 %v2021
    %2670 = vmatprep.subr.bf16.mxu0 %v2030
    %2671 = vmatpush1.bf16.msra.mxu0 %v2029
    %2672 = vmatprep.subr.bf16.mxu0 %v2038
    %2673 = vmatpush1.bf16.msra.mxu0 %v2037
    %2674 = vmatprep.subr.bf16.mxu0 %v2046
    %2675 = vmatpush1.bf16.msra.mxu0 %v2045
    %2676 = vmatprep.subr.bf16.mxu0 %v2054
    %2677 = vmatpush1.bf16.msra.mxu0 %v2053
    %2678 = vmatprep.subr.bf16.mxu0 %v2062
    %2679 = vmatpush1.bf16.msra.mxu0 %v2061
    %2680 = vmatprep.subr.bf16.mxu0 %v2070
    %2681 = vmatpush1.bf16.msra.mxu0 %v2069
    %2682 = vmatprep.subr.bf16.mxu0 %v2078
    %2683 = vmatpush1.bf16.msra.mxu0 %v2077
    %2684 = vmatprep.subr.bf16.mxu0 %v2086
    %2685 = vmatpush1.bf16.msra.mxu0 %v2085
    %2686 = vmatprep.subr.bf16.mxu0 %v2094
    %2687 = vmatpush1.bf16.msra.mxu0 %v2093
    %2688 = vmatprep.subr.bf16.mxu0 %v2102
    %2689 = vmatpush1.bf16.msra.mxu0 %v2101
    %2690 = vmatprep.subr.bf16.mxu0 %v2110
    %2691 = vmatpush1.bf16.msra.mxu0 %v2109
    %2692 = vmatprep.subr.bf16.mxu0 %v2118
    %2693 = vmatpush1.bf16.msra.mxu0 %v2117
    %2694 = vmatprep.mubr.bf16.mxu0 %v796
    %2695 = vmatmul.mubr.bf16.gmra.mrb[0].mxu0 %v795
    %v2696 = vpop.f32.mrb[0].mxu0
    %v2697 = vadd.f32 %v2656, %v2696
    %v2698 = vpop.f32.mrb[0].mxu0
    %v2699 = vadd.f32 %v2658, %v2698
    %v2700 = vpop.f32.mrb[0].mxu0
    %v2701 = vpop.f32.mrb[0].mxu0
    %2702 = vdwg.mxu0
    %vm2703 = vcmp.gt.f32.partialorder %v2451, 0.0
    %vm2704 = vcmp.gt.f32.partialorder %v2453, 0.0
    %vm2705 = vcmp.gt.f32.partialorder %v2533, 0.0
    %vm2706 = vcmp.gt.f32.partialorder %v2535, 0.0
    %vm2707 = vcmp.gt.f32.partialorder %v2615, 0.0
    %vm2708 = vcmp.gt.f32.partialorder %v2617, 0.0
    %vm2709 = vcmp.gt.f32.partialorder %v2697, 0.0
    %vm2710 = vcmp.gt.f32.partialorder %v2699, 0.0
    %v2711 = vmul.f32 %v2451, 0.2
    %v2712 = vmul.f32 %v2453, 0.2
    %v2713 = vmul.f32 %v2533, 0.2
    %v2714 = vmul.f32 %v2535, 0.2
    %v2715 = vmul.f32 %v2615, 0.2
    %v2716 = vmul.f32 %v2617, 0.2
    %v2717 = vmul.f32 %v2697, 0.2
    %v2718 = vmul.f32 %v2699, 0.2
    %v2719 = vsel %vm2703, %v2451, %v2711
    %v2720 = vsel %vm2704, %v2453, %v2712
    %v2721 = vsel %vm2705, %v2533, %v2713
    %v2722 = vsel %vm2706, %v2535, %v2714
    %v2723 = vsel %vm2707, %v2615, %v2715
    %v2724 = vsel %vm2708, %v2617, %v2716
    %v2725 = vsel %vm2709, %v2697, %v2717
    %v2726 = vsel %vm2710, %v2699, %v2718
    %v2727 = vpack.c.bf16 %v2719, %v2719
    %v2728 = vpack.c.bf16 %v2720, %v2720
    %v2729 = vpack.c.bf16 %v2721, %v2721
    %v2730 = vpack.c.bf16 %v2722, %v2722
    %v2731 = vpack.c.bf16 %v2723, %v2723
    %v2732 = vpack.c.bf16 %v2724, %v2724
    %v2733 = vpack.c.bf16 %v2725, %v2725
    %v2734 = vpack.c.bf16 %v2726, %v2726
    %v2735 = vld [vmem:[#allocation12] sm:$0xff]
    %v2736 = vld [vmem:[#allocation12 + $0x8] sm:$0xff]
    %v2737 = vld [vmem:[#allocation12 + $0x10] sm:$0xff]
    %v2738 = vld [vmem:[#allocation12 + $0x18] sm:$0xff]
    %v2739 = vld [vmem:[#allocation12 + $0x20] sm:$0xff]
    %v2740 = vld [vmem:[#allocation12 + $0x28] sm:$0xff]
    %v2741 = vld [vmem:[#allocation12 + $0x30] sm:$0xff]
    %v2742 = vld [vmem:[#allocation12 + $0x38] sm:$0xff]
    %v2743 = vld [vmem:[#allocation12 + $0x40] sm:$0xff]
    %v2744 = vld [vmem:[#allocation12 + $0x48] sm:$0xff]
    %v2745 = vld [vmem:[#allocation12 + $0x50] sm:$0xff]
    %v2746 = vld [vmem:[#allocation12 + $0x58] sm:$0xff]
    %v2747 = vld [vmem:[#allocation12 + $0x60] sm:$0xff]
    %v2748 = vld [vmem:[#allocation12 + $0x68] sm:$0xff]
    %v2749 = vld [vmem:[#allocation12 + $0x70] sm:$0xff]
    %v2750 = vld [vmem:[#allocation12 + $0x78] sm:$0xff]
    %v2751 = vld [vmem:[#allocation12 + $0x80] sm:$0xff]
    %v2752 = vld [vmem:[#allocation12 + $0x88] sm:$0xff]
    %v2753 = vld [vmem:[#allocation12 + $0x90] sm:$0xff]
    %v2754 = vld [vmem:[#allocation12 + $0x98] sm:$0xff]
    %v2755 = vld [vmem:[#allocation12 + $0xa0] sm:$0xff]
    %v2756 = vld [vmem:[#allocation12 + $0xa8] sm:$0xff]
    %v2757 = vld [vmem:[#allocation12 + $0xb0] sm:$0xff]
    %v2758 = vld [vmem:[#allocation12 + $0xb8] sm:$0xff]
    %v2759 = vld [vmem:[#allocation12 + $0xc0] sm:$0xff]
    %v2760 = vld [vmem:[#allocation12 + $0xc8] sm:$0xff]
    %v2761 = vld [vmem:[#allocation12 + $0xd0] sm:$0xff]
    %v2762 = vld [vmem:[#allocation12 + $0xd8] sm:$0xff]
    %v2763 = vld [vmem:[#allocation12 + $0xe0] sm:$0xff]
    %v2764 = vld [vmem:[#allocation12 + $0xe8] sm:$0xff]
    %v2765 = vld [vmem:[#allocation12 + $0xf0] sm:$0xff]
    %v2766 = vld [vmem:[#allocation12 + $0xf8] sm:$0xff]
    %v2767 = vld [vmem:[#allocation12 + $0x100] sm:$0xff]
    %v2768 = vld [vmem:[#allocation12 + $0x108] sm:$0xff]
    %v2769 = vld [vmem:[#allocation12 + $0x110] sm:$0xff]
    %v2770 = vld [vmem:[#allocation12 + $0x118] sm:$0xff]
    %v2771 = vld [vmem:[#allocation12 + $0x120] sm:$0xff]
    %v2772 = vld [vmem:[#allocation12 + $0x128] sm:$0xff]
    %v2773 = vld [vmem:[#allocation12 + $0x130] sm:$0xff]
    %v2774 = vld [vmem:[#allocation12 + $0x138] sm:$0xff]
    %v2775 = vld [vmem:[#allocation12 + $0x140] sm:$0xff]
    %v2776 = vld [vmem:[#allocation12 + $0x148] sm:$0xff]
    %v2777 = vld [vmem:[#allocation12 + $0x150] sm:$0xff]
    %v2778 = vld [vmem:[#allocation12 + $0x158] sm:$0xff]
    %v2779 = vld [vmem:[#allocation12 + $0x160] sm:$0xff]
    %v2780 = vld [vmem:[#allocation12 + $0x168] sm:$0xff]
    %v2781 = vld [vmem:[#allocation12 + $0x170] sm:$0xff]
    %v2782 = vld [vmem:[#allocation12 + $0x178] sm:$0xff]
    %v2783 = vld [vmem:[#allocation12 + $0x180] sm:$0xff]
    %v2784 = vld [vmem:[#allocation12 + $0x188] sm:$0xff]
    %v2785 = vld [vmem:[#allocation12 + $0x190] sm:$0xff]
    %v2786 = vld [vmem:[#allocation12 + $0x198] sm:$0xff]
    %v2787 = vld [vmem:[#allocation12 + $0x1a0] sm:$0xff]
    %v2788 = vld [vmem:[#allocation12 + $0x1a8] sm:$0xff]
    %v2789 = vld [vmem:[#allocation12 + $0x1b0] sm:$0xff]
    %v2790 = vld [vmem:[#allocation12 + $0x1b8] sm:$0xff]
    %v2791 = vld [vmem:[#allocation12 + $0x1c0] sm:$0xff]
    %v2792 = vld [vmem:[#allocation12 + $0x1c8] sm:$0xff]
    %v2793 = vld [vmem:[#allocation12 + $0x1d0] sm:$0xff]
    %v2794 = vld [vmem:[#allocation12 + $0x1d8] sm:$0xff]
    %v2795 = vld [vmem:[#allocation12 + $0x1e0] sm:$0xff]
    %v2796 = vld [vmem:[#allocation12 + $0x1e8] sm:$0xff]
    %v2797 = vld [vmem:[#allocation12 + $0x1f0] sm:$0xff]
    %v2798 = vld [vmem:[#allocation12 + $0x1f8] sm:$0xff]
    %v2799 = vld [vmem:[#allocation12 + $0x200] sm:$0xff]
    %v2800 = vld [vmem:[#allocation12 + $0x208] sm:$0xff]
    %v2801 = vld [vmem:[#allocation12 + $0x210] sm:$0xff]
    %v2802 = vld [vmem:[#allocation12 + $0x218] sm:$0xff]
    %v2803 = vld [vmem:[#allocation12 + $0x220] sm:$0xff]
    %v2804 = vld [vmem:[#allocation12 + $0x228] sm:$0xff]
    %v2805 = vld [vmem:[#allocation12 + $0x230] sm:$0xff]
    %v2806 = vld [vmem:[#allocation12 + $0x238] sm:$0xff]
    %v2807 = vld [vmem:[#allocation12 + $0x240] sm:$0xff]
    %v2808 = vld [vmem:[#allocation12 + $0x248] sm:$0xff]
    %v2809 = vld [vmem:[#allocation12 + $0x250] sm:$0xff]
    %v2810 = vld [vmem:[#allocation12 + $0x258] sm:$0xff]
    %v2811 = vld [vmem:[#allocation12 + $0x260] sm:$0xff]
    %v2812 = vld [vmem:[#allocation12 + $0x268] sm:$0xff]
    %v2813 = vld [vmem:[#allocation12 + $0x270] sm:$0xff]
    %v2814 = vld [vmem:[#allocation12 + $0x278] sm:$0xff]
    %v2815 = vld [vmem:[#allocation12 + $0x280] sm:$0xff]
    %v2816 = vld [vmem:[#allocation12 + $0x288] sm:$0xff]
    %v2817 = vld [vmem:[#allocation12 + $0x290] sm:$0xff]
    %v2818 = vld [vmem:[#allocation12 + $0x298] sm:$0xff]
    %v2819 = vld [vmem:[#allocation12 + $0x2a0] sm:$0xff]
    %v2820 = vld [vmem:[#allocation12 + $0x2a8] sm:$0xff]
    %v2821 = vld [vmem:[#allocation12 + $0x2b0] sm:$0xff]
    %v2822 = vld [vmem:[#allocation12 + $0x2b8] sm:$0xff]
    %v2823 = vld [vmem:[#allocation12 + $0x2c0] sm:$0xff]
    %v2824 = vld [vmem:[#allocation12 + $0x2c8] sm:$0xff]
    %v2825 = vld [vmem:[#allocation12 + $0x2d0] sm:$0xff]
    %v2826 = vld [vmem:[#allocation12 + $0x2d8] sm:$0xff]
    %v2827 = vld [vmem:[#allocation12 + $0x2e0] sm:$0xff]
    %v2828 = vld [vmem:[#allocation12 + $0x2e8] sm:$0xff]
    %v2829 = vld [vmem:[#allocation12 + $0x2f0] sm:$0xff]
    %v2830 = vld [vmem:[#allocation12 + $0x2f8] sm:$0xff]
    %v2831 = vld [vmem:[#allocation12 + $0x300] sm:$0xff]
    %v2832 = vld [vmem:[#allocation12 + $0x308] sm:$0xff]
    %v2833 = vld [vmem:[#allocation12 + $0x310] sm:$0xff]
    %v2834 = vld [vmem:[#allocation12 + $0x318] sm:$0xff]
    %v2835 = vld [vmem:[#allocation12 + $0x320] sm:$0xff]
    %v2836 = vld [vmem:[#allocation12 + $0x328] sm:$0xff]
    %v2837 = vld [vmem:[#allocation12 + $0x330] sm:$0xff]
    %v2838 = vld [vmem:[#allocation12 + $0x338] sm:$0xff]
    %v2839 = vld [vmem:[#allocation12 + $0x340] sm:$0xff]
    %v2840 = vld [vmem:[#allocation12 + $0x348] sm:$0xff]
    %v2841 = vld [vmem:[#allocation12 + $0x350] sm:$0xff]
    %v2842 = vld [vmem:[#allocation12 + $0x358] sm:$0xff]
    %v2843 = vld [vmem:[#allocation12 + $0x360] sm:$0xff]
    %v2844 = vld [vmem:[#allocation12 + $0x368] sm:$0xff]
    %v2845 = vld [vmem:[#allocation12 + $0x370] sm:$0xff]
    %v2846 = vld [vmem:[#allocation12 + $0x378] sm:$0xff]
    %v2847 = vld [vmem:[#allocation12 + $0x380] sm:$0xff]
    %v2848 = vld [vmem:[#allocation12 + $0x388] sm:$0xff]
    %v2849 = vld [vmem:[#allocation12 + $0x390] sm:$0xff]
    %v2850 = vld [vmem:[#allocation12 + $0x398] sm:$0xff]
    %v2851 = vld [vmem:[#allocation12 + $0x3a0] sm:$0xff]
    %v2852 = vld [vmem:[#allocation12 + $0x3a8] sm:$0xff]
    %v2853 = vld [vmem:[#allocation12 + $0x3b0] sm:$0xff]
    %v2854 = vld [vmem:[#allocation12 + $0x3b8] sm:$0xff]
    %v2855 = vld [vmem:[#allocation12 + $0x3c0] sm:$0xff]
    %v2856 = vld [vmem:[#allocation12 + $0x3c8] sm:$0xff]
    %v2857 = vld [vmem:[#allocation12 + $0x3d0] sm:$0xff]
    %v2858 = vld [vmem:[#allocation12 + $0x3d8] sm:$0xff]
    %v2859 = vld [vmem:[#allocation12 + $0x3e0] sm:$0xff]
    %v2860 = vld [vmem:[#allocation12 + $0x3e8] sm:$0xff]
    %v2861 = vld [vmem:[#allocation12 + $0x3f0] sm:$0xff]
    %v2862 = vld [vmem:[#allocation12 + $0x3f8] sm:$0xff]
    %v2863 = vld [vmem:[#allocation12 + $0x400] sm:$0xff]
    %v2864 = vld [vmem:[#allocation12 + $0x408] sm:$0xff]
    %v2865 = vld [vmem:[#allocation12 + $0x410] sm:$0xff]
    %v2866 = vld [vmem:[#allocation12 + $0x418] sm:$0xff]
    %v2867 = vld [vmem:[#allocation12 + $0x420] sm:$0xff]
    %v2868 = vld [vmem:[#allocation12 + $0x428] sm:$0xff]
    %v2869 = vld [vmem:[#allocation12 + $0x430] sm:$0xff]
    %v2870 = vld [vmem:[#allocation12 + $0x438] sm:$0xff]
    %v2871 = vld [vmem:[#allocation12 + $0x440] sm:$0xff]
    %v2872 = vld [vmem:[#allocation12 + $0x448] sm:$0xff]
    %v2873 = vld [vmem:[#allocation12 + $0x450] sm:$0xff]
    %v2874 = vld [vmem:[#allocation12 + $0x458] sm:$0xff]
    %v2875 = vld [vmem:[#allocation12 + $0x460] sm:$0xff]
    %v2876 = vld [vmem:[#allocation12 + $0x468] sm:$0xff]
    %v2877 = vld [vmem:[#allocation12 + $0x470] sm:$0xff]
    %v2878 = vld [vmem:[#allocation12 + $0x478] sm:$0xff]
    %v2879 = vld [vmem:[#allocation12 + $0x480] sm:$0xff]
    %v2880 = vld [vmem:[#allocation12 + $0x488] sm:$0xff]
    %v2881 = vld [vmem:[#allocation12 + $0x490] sm:$0xff]
    %v2882 = vld [vmem:[#allocation12 + $0x498] sm:$0xff]
    %v2883 = vld [vmem:[#allocation12 + $0x4a0] sm:$0xff]
    %v2884 = vld [vmem:[#allocation12 + $0x4a8] sm:$0xff]
    %v2885 = vld [vmem:[#allocation12 + $0x4b0] sm:$0xff]
    %v2886 = vld [vmem:[#allocation12 + $0x4b8] sm:$0xff]
    %v2887 = vld [vmem:[#allocation12 + $0x4c0] sm:$0xff]
    %v2888 = vld [vmem:[#allocation12 + $0x4c8] sm:$0xff]
    %v2889 = vld [vmem:[#allocation12 + $0x4d0] sm:$0xff]
    %v2890 = vld [vmem:[#allocation12 + $0x4d8] sm:$0xff]
    %v2891 = vld [vmem:[#allocation12 + $0x4e0] sm:$0xff]
    %v2892 = vld [vmem:[#allocation12 + $0x4e8] sm:$0xff]
    %v2893 = vld [vmem:[#allocation12 + $0x4f0] sm:$0xff]
    %v2894 = vld [vmem:[#allocation12 + $0x4f8] sm:$0xff]
    %v2895 = vld [vmem:[#allocation12 + $0x500] sm:$0xff]
    %v2896 = vld [vmem:[#allocation12 + $0x508] sm:$0xff]
    %v2897 = vld [vmem:[#allocation12 + $0x510] sm:$0xff]
    %v2898 = vld [vmem:[#allocation12 + $0x518] sm:$0xff]
    %v2899 = vld [vmem:[#allocation12 + $0x520] sm:$0xff]
    %v2900 = vld [vmem:[#allocation12 + $0x528] sm:$0xff]
    %v2901 = vld [vmem:[#allocation12 + $0x530] sm:$0xff]
    %v2902 = vld [vmem:[#allocation12 + $0x538] sm:$0xff]
    %v2903 = vld [vmem:[#allocation12 + $0x540] sm:$0xff]
    %v2904 = vld [vmem:[#allocation12 + $0x548] sm:$0xff]
    %v2905 = vld [vmem:[#allocation12 + $0x550] sm:$0xff]
    %v2906 = vld [vmem:[#allocation12 + $0x558] sm:$0xff]
    %v2907 = vld [vmem:[#allocation12 + $0x560] sm:$0xff]
    %v2908 = vld [vmem:[#allocation12 + $0x568] sm:$0xff]
    %v2909 = vld [vmem:[#allocation12 + $0x570] sm:$0xff]
    %v2910 = vld [vmem:[#allocation12 + $0x578] sm:$0xff]
    %v2911 = vld [vmem:[#allocation12 + $0x580] sm:$0xff]
    %v2912 = vld [vmem:[#allocation12 + $0x588] sm:$0xff]
    %v2913 = vld [vmem:[#allocation12 + $0x590] sm:$0xff]
    %v2914 = vld [vmem:[#allocation12 + $0x598] sm:$0xff]
    %v2915 = vld [vmem:[#allocation12 + $0x5a0] sm:$0xff]
    %v2916 = vld [vmem:[#allocation12 + $0x5a8] sm:$0xff]
    %v2917 = vld [vmem:[#allocation12 + $0x5b0] sm:$0xff]
    %v2918 = vld [vmem:[#allocation12 + $0x5b8] sm:$0xff]
    %v2919 = vld [vmem:[#allocation12 + $0x5c0] sm:$0xff]
    %v2920 = vld [vmem:[#allocation12 + $0x5c8] sm:$0xff]
    %v2921 = vld [vmem:[#allocation12 + $0x5d0] sm:$0xff]
    %v2922 = vld [vmem:[#allocation12 + $0x5d8] sm:$0xff]
    %v2923 = vld [vmem:[#allocation12 + $0x5e0] sm:$0xff]
    %v2924 = vld [vmem:[#allocation12 + $0x5e8] sm:$0xff]
    %v2925 = vld [vmem:[#allocation12 + $0x5f0] sm:$0xff]
    %v2926 = vld [vmem:[#allocation12 + $0x5f8] sm:$0xff]
    %v2927 = vld [vmem:[#allocation12 + $0x600] sm:$0xff]
    %v2928 = vld [vmem:[#allocation12 + $0x608] sm:$0xff]
    %v2929 = vld [vmem:[#allocation12 + $0x610] sm:$0xff]
    %v2930 = vld [vmem:[#allocation12 + $0x618] sm:$0xff]
    %v2931 = vld [vmem:[#allocation12 + $0x620] sm:$0xff]
    %v2932 = vld [vmem:[#allocation12 + $0x628] sm:$0xff]
    %v2933 = vld [vmem:[#allocation12 + $0x630] sm:$0xff]
    %v2934 = vld [vmem:[#allocation12 + $0x638] sm:$0xff]
    %v2935 = vld [vmem:[#allocation12 + $0x640] sm:$0xff]
    %v2936 = vld [vmem:[#allocation12 + $0x648] sm:$0xff]
    %v2937 = vld [vmem:[#allocation12 + $0x650] sm:$0xff]
    %v2938 = vld [vmem:[#allocation12 + $0x658] sm:$0xff]
    %v2939 = vld [vmem:[#allocation12 + $0x660] sm:$0xff]
    %v2940 = vld [vmem:[#allocation12 + $0x668] sm:$0xff]
    %v2941 = vld [vmem:[#allocation12 + $0x670] sm:$0xff]
    %v2942 = vld [vmem:[#allocation12 + $0x678] sm:$0xff]
    %v2943 = vld [vmem:[#allocation12 + $0x680] sm:$0xff]
    %v2944 = vld [vmem:[#allocation12 + $0x688] sm:$0xff]
    %v2945 = vld [vmem:[#allocation12 + $0x690] sm:$0xff]
    %v2946 = vld [vmem:[#allocation12 + $0x698] sm:$0xff]
    %v2947 = vld [vmem:[#allocation12 + $0x6a0] sm:$0xff]
    %v2948 = vld [vmem:[#allocation12 + $0x6a8] sm:$0xff]
    %v2949 = vld [vmem:[#allocation12 + $0x6b0] sm:$0xff]
    %v2950 = vld [vmem:[#allocation12 + $0x6b8] sm:$0xff]
    %v2951 = vld [vmem:[#allocation12 + $0x6c0] sm:$0xff]
    %v2952 = vld [vmem:[#allocation12 + $0x6c8] sm:$0xff]
    %v2953 = vld [vmem:[#allocation12 + $0x6d0] sm:$0xff]
    %v2954 = vld [vmem:[#allocation12 + $0x6d8] sm:$0xff]
    %v2955 = vld [vmem:[#allocation12 + $0x6e0] sm:$0xff]
    %v2956 = vld [vmem:[#allocation12 + $0x6e8] sm:$0xff]
    %v2957 = vld [vmem:[#allocation12 + $0x6f0] sm:$0xff]
    %v2958 = vld [vmem:[#allocation12 + $0x6f8] sm:$0xff]
    %v2959 = vld [vmem:[#allocation12 + $0x700] sm:$0xff]
    %v2960 = vld [vmem:[#allocation12 + $0x708] sm:$0xff]
    %v2961 = vld [vmem:[#allocation12 + $0x710] sm:$0xff]
    %v2962 = vld [vmem:[#allocation12 + $0x718] sm:$0xff]
    %v2963 = vld [vmem:[#allocation12 + $0x720] sm:$0xff]
    %v2964 = vld [vmem:[#allocation12 + $0x728] sm:$0xff]
    %v2965 = vld [vmem:[#allocation12 + $0x730] sm:$0xff]
    %v2966 = vld [vmem:[#allocation12 + $0x738] sm:$0xff]
    %v2967 = vld [vmem:[#allocation12 + $0x740] sm:$0xff]
    %v2968 = vld [vmem:[#allocation12 + $0x748] sm:$0xff]
    %v2969 = vld [vmem:[#allocation12 + $0x750] sm:$0xff]
    %v2970 = vld [vmem:[#allocation12 + $0x758] sm:$0xff]
    %v2971 = vld [vmem:[#allocation12 + $0x760] sm:$0xff]
    %v2972 = vld [vmem:[#allocation12 + $0x768] sm:$0xff]
    %v2973 = vld [vmem:[#allocation12 + $0x770] sm:$0xff]
    %v2974 = vld [vmem:[#allocation12 + $0x778] sm:$0xff]
    %v2975 = vld [vmem:[#allocation12 + $0x780] sm:$0xff]
    %v2976 = vld [vmem:[#allocation12 + $0x788] sm:$0xff]
    %v2977 = vld [vmem:[#allocation12 + $0x790] sm:$0xff]
    %v2978 = vld [vmem:[#allocation12 + $0x798] sm:$0xff]
    %v2979 = vld [vmem:[#allocation12 + $0x7a0] sm:$0xff]
    %v2980 = vld [vmem:[#allocation12 + $0x7a8] sm:$0xff]
    %v2981 = vld [vmem:[#allocation12 + $0x7b0] sm:$0xff]
    %v2982 = vld [vmem:[#allocation12 + $0x7b8] sm:$0xff]
    %v2983 = vld [vmem:[#allocation12 + $0x7c0] sm:$0xff]
    %v2984 = vld [vmem:[#allocation12 + $0x7c8] sm:$0xff]
    %v2985 = vld [vmem:[#allocation12 + $0x7d0] sm:$0xff]
    %v2986 = vld [vmem:[#allocation12 + $0x7d8] sm:$0xff]
    %v2987 = vld [vmem:[#allocation12 + $0x7e0] sm:$0xff]
    %v2988 = vld [vmem:[#allocation12 + $0x7e8] sm:$0xff]
    %v2989 = vld [vmem:[#allocation12 + $0x7f0] sm:$0xff]
    %v2990 = vld [vmem:[#allocation12 + $0x7f8] sm:$0xff]
    %v2991 = vld [vmem:[#allocation12 + $0x800] sm:$0xff]
    %v2992 = vld [vmem:[#allocation12 + $0x808] sm:$0xff]
    %v2993 = vld [vmem:[#allocation12 + $0x810] sm:$0xff]
    %v2994 = vld [vmem:[#allocation12 + $0x818] sm:$0xff]
    %v2995 = vld [vmem:[#allocation12 + $0x820] sm:$0xff]
    %v2996 = vld [vmem:[#allocation12 + $0x828] sm:$0xff]
    %v2997 = vld [vmem:[#allocation12 + $0x830] sm:$0xff]
    %v2998 = vld [vmem:[#allocation12 + $0x838] sm:$0xff]
    %v2999 = vld [vmem:[#allocation12 + $0x840] sm:$0xff]
    %v3000 = vld [vmem:[#allocation12 + $0x848] sm:$0xff]
    %v3001 = vld [vmem:[#allocation12 + $0x850] sm:$0xff]
    %v3002 = vld [vmem:[#allocation12 + $0x858] sm:$0xff]
    %v3003 = vld [vmem:[#allocation12 + $0x860] sm:$0xff]
    %v3004 = vld [vmem:[#allocation12 + $0x868] sm:$0xff]
    %v3005 = vld [vmem:[#allocation12 + $0x870] sm:$0xff]
    %v3006 = vld [vmem:[#allocation12 + $0x878] sm:$0xff]
    %v3007 = vld [vmem:[#allocation12 + $0x880] sm:$0xff]
    %v3008 = vld [vmem:[#allocation12 + $0x888] sm:$0xff]
    %v3009 = vld [vmem:[#allocation12 + $0x890] sm:$0xff]
    %v3010 = vld [vmem:[#allocation12 + $0x898] sm:$0xff]
    %v3011 = vld [vmem:[#allocation12 + $0x8a0] sm:$0xff]
    %v3012 = vld [vmem:[#allocation12 + $0x8a8] sm:$0xff]
    %v3013 = vld [vmem:[#allocation12 + $0x8b0] sm:$0xff]
    %v3014 = vld [vmem:[#allocation12 + $0x8b8] sm:$0xff]
    %v3015 = vld [vmem:[#allocation12 + $0x8c0] sm:$0xff]
    %v3016 = vld [vmem:[#allocation12 + $0x8c8] sm:$0xff]
    %v3017 = vld [vmem:[#allocation12 + $0x8d0] sm:$0xff]
    %v3018 = vld [vmem:[#allocation12 + $0x8d8] sm:$0xff]
    %v3019 = vld [vmem:[#allocation12 + $0x8e0] sm:$0xff]
    %v3020 = vld [vmem:[#allocation12 + $0x8e8] sm:$0xff]
    %v3021 = vld [vmem:[#allocation12 + $0x8f0] sm:$0xff]
    %v3022 = vld [vmem:[#allocation12 + $0x8f8] sm:$0xff]
    %v3023 = vld [vmem:[#allocation12 + $0x900] sm:$0xff]
    %v3024 = vld [vmem:[#allocation12 + $0x908] sm:$0xff]
    %v3025 = vld [vmem:[#allocation12 + $0x910] sm:$0xff]
    %v3026 = vld [vmem:[#allocation12 + $0x918] sm:$0xff]
    %v3027 = vld [vmem:[#allocation12 + $0x920] sm:$0xff]
    %v3028 = vld [vmem:[#allocation12 + $0x928] sm:$0xff]
    %v3029 = vld [vmem:[#allocation12 + $0x930] sm:$0xff]
    %v3030 = vld [vmem:[#allocation12 + $0x938] sm:$0xff]
    %v3031 = vld [vmem:[#allocation12 + $0x940] sm:$0xff]
    %v3032 = vld [vmem:[#allocation12 + $0x948] sm:$0xff]
    %v3033 = vld [vmem:[#allocation12 + $0x950] sm:$0xff]
    %v3034 = vld [vmem:[#allocation12 + $0x958] sm:$0xff]
    %v3035 = vld [vmem:[#allocation12 + $0x960] sm:$0xff]
    %v3036 = vld [vmem:[#allocation12 + $0x968] sm:$0xff]
    %v3037 = vld [vmem:[#allocation12 + $0x970] sm:$0xff]
    %v3038 = vld [vmem:[#allocation12 + $0x978] sm:$0xff]
    %v3039 = vld [vmem:[#allocation12 + $0x980] sm:$0xff]
    %v3040 = vld [vmem:[#allocation12 + $0x988] sm:$0xff]
    %v3041 = vld [vmem:[#allocation12 + $0x990] sm:$0xff]
    %v3042 = vld [vmem:[#allocation12 + $0x998] sm:$0xff]
    %v3043 = vld [vmem:[#allocation12 + $0x9a0] sm:$0xff]
    %v3044 = vld [vmem:[#allocation12 + $0x9a8] sm:$0xff]
    %v3045 = vld [vmem:[#allocation12 + $0x9b0] sm:$0xff]
    %v3046 = vld [vmem:[#allocation12 + $0x9b8] sm:$0xff]
    %v3047 = vld [vmem:[#allocation12 + $0x9c0] sm:$0xff]
    %v3048 = vld [vmem:[#allocation12 + $0x9c8] sm:$0xff]
    %v3049 = vld [vmem:[#allocation12 + $0x9d0] sm:$0xff]
    %v3050 = vld [vmem:[#allocation12 + $0x9d8] sm:$0xff]
    %v3051 = vld [vmem:[#allocation12 + $0x9e0] sm:$0xff]
    %v3052 = vld [vmem:[#allocation12 + $0x9e8] sm:$0xff]
    %v3053 = vld [vmem:[#allocation12 + $0x9f0] sm:$0xff]
    %v3054 = vld [vmem:[#allocation12 + $0x9f8] sm:$0xff]
    %v3055 = vld [vmem:[#allocation12 + $0xa00] sm:$0xff]
    %v3056 = vld [vmem:[#allocation12 + $0xa08] sm:$0xff]
    %v3057 = vld [vmem:[#allocation12 + $0xa10] sm:$0xff]
    %v3058 = vld [vmem:[#allocation12 + $0xa18] sm:$0xff]
    %v3059 = vld [vmem:[#allocation12 + $0xa20] sm:$0xff]
    %v3060 = vld [vmem:[#allocation12 + $0xa28] sm:$0xff]
    %v3061 = vld [vmem:[#allocation12 + $0xa30] sm:$0xff]
    %v3062 = vld [vmem:[#allocation12 + $0xa38] sm:$0xff]
    %v3063 = vld [vmem:[#allocation12 + $0xa40] sm:$0xff]
    %v3064 = vld [vmem:[#allocation12 + $0xa48] sm:$0xff]
    %v3065 = vld [vmem:[#allocation12 + $0xa50] sm:$0xff]
    %v3066 = vld [vmem:[#allocation12 + $0xa58] sm:$0xff]
    %v3067 = vld [vmem:[#allocation12 + $0xa60] sm:$0xff]
    %v3068 = vld [vmem:[#allocation12 + $0xa68] sm:$0xff]
    %v3069 = vld [vmem:[#allocation12 + $0xa70] sm:$0xff]
    %v3070 = vld [vmem:[#allocation12 + $0xa78] sm:$0xff]
    %v3071 = vld [vmem:[#allocation12 + $0xa80] sm:$0xff]
    %v3072 = vld [vmem:[#allocation12 + $0xa88] sm:$0xff]
    %v3073 = vld [vmem:[#allocation12 + $0xa90] sm:$0xff]
    %v3074 = vld [vmem:[#allocation12 + $0xa98] sm:$0xff]
    %v3075 = vld [vmem:[#allocation12 + $0xaa0] sm:$0xff]
    %v3076 = vld [vmem:[#allocation12 + $0xaa8] sm:$0xff]
    %v3077 = vld [vmem:[#allocation12 + $0xab0] sm:$0xff]
    %v3078 = vld [vmem:[#allocation12 + $0xab8] sm:$0xff]
    %v3079 = vld [vmem:[#allocation12 + $0xac0] sm:$0xff]
    %v3080 = vld [vmem:[#allocation12 + $0xac8] sm:$0xff]
    %v3081 = vld [vmem:[#allocation12 + $0xad0] sm:$0xff]
    %v3082 = vld [vmem:[#allocation12 + $0xad8] sm:$0xff]
    %v3083 = vld [vmem:[#allocation12 + $0xae0] sm:$0xff]
    %v3084 = vld [vmem:[#allocation12 + $0xae8] sm:$0xff]
    %v3085 = vld [vmem:[#allocation12 + $0xaf0] sm:$0xff]
    %v3086 = vld [vmem:[#allocation12 + $0xaf8] sm:$0xff]
    %v3087 = vld [vmem:[#allocation12 + $0xb00] sm:$0xff]
    %v3088 = vld [vmem:[#allocation12 + $0xb08] sm:$0xff]
    %v3089 = vld [vmem:[#allocation12 + $0xb10] sm:$0xff]
    %v3090 = vld [vmem:[#allocation12 + $0xb18] sm:$0xff]
    %v3091 = vld [vmem:[#allocation12 + $0xb20] sm:$0xff]
    %v3092 = vld [vmem:[#allocation12 + $0xb28] sm:$0xff]
    %v3093 = vld [vmem:[#allocation12 + $0xb30] sm:$0xff]
    %v3094 = vld [vmem:[#allocation12 + $0xb38] sm:$0xff]
    %v3095 = vld [vmem:[#allocation12 + $0xb40] sm:$0xff]
    %v3096 = vld [vmem:[#allocation12 + $0xb48] sm:$0xff]
    %v3097 = vld [vmem:[#allocation12 + $0xb50] sm:$0xff]
    %v3098 = vld [vmem:[#allocation12 + $0xb58] sm:$0xff]
    %v3099 = vld [vmem:[#allocation12 + $0xb60] sm:$0xff]
    %v3100 = vld [vmem:[#allocation12 + $0xb68] sm:$0xff]
    %v3101 = vld [vmem:[#allocation12 + $0xb70] sm:$0xff]
    %v3102 = vld [vmem:[#allocation12 + $0xb78] sm:$0xff]
    %v3103 = vld [vmem:[#allocation12 + $0xb80] sm:$0xff]
    %v3104 = vld [vmem:[#allocation12 + $0xb88] sm:$0xff]
    %v3105 = vld [vmem:[#allocation12 + $0xb90] sm:$0xff]
    %v3106 = vld [vmem:[#allocation12 + $0xb98] sm:$0xff]
    %v3107 = vld [vmem:[#allocation12 + $0xba0] sm:$0xff]
    %v3108 = vld [vmem:[#allocation12 + $0xba8] sm:$0xff]
    %v3109 = vld [vmem:[#allocation12 + $0xbb0] sm:$0xff]
    %v3110 = vld [vmem:[#allocation12 + $0xbb8] sm:$0xff]
    %v3111 = vld [vmem:[#allocation12 + $0xbc0] sm:$0xff]
    %v3112 = vld [vmem:[#allocation12 + $0xbc8] sm:$0xff]
    %v3113 = vld [vmem:[#allocation12 + $0xbd0] sm:$0xff]
    %v3114 = vld [vmem:[#allocation12 + $0xbd8] sm:$0xff]
    %v3115 = vld [vmem:[#allocation12 + $0xbe0] sm:$0xff]
    %v3116 = vld [vmem:[#allocation12 + $0xbe8] sm:$0xff]
    %v3117 = vld [vmem:[#allocation12 + $0xbf0] sm:$0xff]
    %v3118 = vld [vmem:[#allocation12 + $0xbf8] sm:$0xff]
    %v3119 = vld [vmem:[#allocation12 + $0xc00] sm:$0xff]
    %v3120 = vld [vmem:[#allocation12 + $0xc08] sm:$0xff]
    %v3121 = vld [vmem:[#allocation12 + $0xc10] sm:$0xff]
    %v3122 = vld [vmem:[#allocation12 + $0xc18] sm:$0xff]
    %v3123 = vld [vmem:[#allocation12 + $0xc20] sm:$0xff]
    %v3124 = vld [vmem:[#allocation12 + $0xc28] sm:$0xff]
    %v3125 = vld [vmem:[#allocation12 + $0xc30] sm:$0xff]
    %v3126 = vld [vmem:[#allocation12 + $0xc38] sm:$0xff]
    %v3127 = vld [vmem:[#allocation12 + $0xc40] sm:$0xff]
    %v3128 = vld [vmem:[#allocation12 + $0xc48] sm:$0xff]
    %v3129 = vld [vmem:[#allocation12 + $0xc50] sm:$0xff]
    %v3130 = vld [vmem:[#allocation12 + $0xc58] sm:$0xff]
    %v3131 = vld [vmem:[#allocation12 + $0xc60] sm:$0xff]
    %v3132 = vld [vmem:[#allocation12 + $0xc68] sm:$0xff]
    %v3133 = vld [vmem:[#allocation12 + $0xc70] sm:$0xff]
    %v3134 = vld [vmem:[#allocation12 + $0xc78] sm:$0xff]
    %v3135 = vld [vmem:[#allocation12 + $0xc80] sm:$0xff]
    %v3136 = vld [vmem:[#allocation12 + $0xc88] sm:$0xff]
    %v3137 = vld [vmem:[#allocation12 + $0xc90] sm:$0xff]
    %v3138 = vld [vmem:[#allocation12 + $0xc98] sm:$0xff]
    %v3139 = vld [vmem:[#allocation12 + $0xca0] sm:$0xff]
    %v3140 = vld [vmem:[#allocation12 + $0xca8] sm:$0xff]
    %v3141 = vld [vmem:[#allocation12 + $0xcb0] sm:$0xff]
    %v3142 = vld [vmem:[#allocation12 + $0xcb8] sm:$0xff]
    %v3143 = vld [vmem:[#allocation12 + $0xcc0] sm:$0xff]
    %v3144 = vld [vmem:[#allocation12 + $0xcc8] sm:$0xff]
    %v3145 = vld [vmem:[#allocation12 + $0xcd0] sm:$0xff]
    %v3146 = vld [vmem:[#allocation12 + $0xcd8] sm:$0xff]
    %v3147 = vld [vmem:[#allocation12 + $0xce0] sm:$0xff]
    %v3148 = vld [vmem:[#allocation12 + $0xce8] sm:$0xff]
    %v3149 = vld [vmem:[#allocation12 + $0xcf0] sm:$0xff]
    %v3150 = vld [vmem:[#allocation12 + $0xcf8] sm:$0xff]
    %v3151 = vld [vmem:[#allocation12 + $0xd00] sm:$0xff]
    %v3152 = vld [vmem:[#allocation12 + $0xd08] sm:$0xff]
    %v3153 = vld [vmem:[#allocation12 + $0xd10] sm:$0xff]
    %v3154 = vld [vmem:[#allocation12 + $0xd18] sm:$0xff]
    %v3155 = vld [vmem:[#allocation12 + $0xd20] sm:$0xff]
    %v3156 = vld [vmem:[#allocation12 + $0xd28] sm:$0xff]
    %v3157 = vld [vmem:[#allocation12 + $0xd30] sm:$0xff]
    %v3158 = vld [vmem:[#allocation12 + $0xd38] sm:$0xff]
    %v3159 = vld [vmem:[#allocation12 + $0xd40] sm:$0xff]
    %v3160 = vld [vmem:[#allocation12 + $0xd48] sm:$0xff]
    %v3161 = vld [vmem:[#allocation12 + $0xd50] sm:$0xff]
    %v3162 = vld [vmem:[#allocation12 + $0xd58] sm:$0xff]
    %v3163 = vld [vmem:[#allocation12 + $0xd60] sm:$0xff]
    %v3164 = vld [vmem:[#allocation12 + $0xd68] sm:$0xff]
    %v3165 = vld [vmem:[#allocation12 + $0xd70] sm:$0xff]
    %v3166 = vld [vmem:[#allocation12 + $0xd78] sm:$0xff]
    %v3167 = vld [vmem:[#allocation12 + $0xd80] sm:$0xff]
    %v3168 = vld [vmem:[#allocation12 + $0xd88] sm:$0xff]
    %v3169 = vld [vmem:[#allocation12 + $0xd90] sm:$0xff]
    %v3170 = vld [vmem:[#allocation12 + $0xd98] sm:$0xff]
    %v3171 = vld [vmem:[#allocation12 + $0xda0] sm:$0xff]
    %v3172 = vld [vmem:[#allocation12 + $0xda8] sm:$0xff]
    %v3173 = vld [vmem:[#allocation12 + $0xdb0] sm:$0xff]
    %v3174 = vld [vmem:[#allocation12 + $0xdb8] sm:$0xff]
    %v3175 = vld [vmem:[#allocation12 + $0xdc0] sm:$0xff]
    %v3176 = vld [vmem:[#allocation12 + $0xdc8] sm:$0xff]
    %v3177 = vld [vmem:[#allocation12 + $0xdd0] sm:$0xff]
    %v3178 = vld [vmem:[#allocation12 + $0xdd8] sm:$0xff]
    %v3179 = vld [vmem:[#allocation12 + $0xde0] sm:$0xff]
    %v3180 = vld [vmem:[#allocation12 + $0xde8] sm:$0xff]
    %v3181 = vld [vmem:[#allocation12 + $0xdf0] sm:$0xff]
    %v3182 = vld [vmem:[#allocation12 + $0xdf8] sm:$0xff]
    %v3183 = vld [vmem:[#allocation12 + $0xe00] sm:$0xff]
    %v3184 = vld [vmem:[#allocation12 + $0xe08] sm:$0xff]
    %v3185 = vld [vmem:[#allocation12 + $0xe10] sm:$0xff]
    %v3186 = vld [vmem:[#allocation12 + $0xe18] sm:$0xff]
    %v3187 = vld [vmem:[#allocation12 + $0xe20] sm:$0xff]
    %v3188 = vld [vmem:[#allocation12 + $0xe28] sm:$0xff]
    %v3189 = vld [vmem:[#allocation12 + $0xe30] sm:$0xff]
    %v3190 = vld [vmem:[#allocation12 + $0xe38] sm:$0xff]
    %v3191 = vld [vmem:[#allocation12 + $0xe40] sm:$0xff]
    %v3192 = vld [vmem:[#allocation12 + $0xe48] sm:$0xff]
    %v3193 = vld [vmem:[#allocation12 + $0xe50] sm:$0xff]
    %v3194 = vld [vmem:[#allocation12 + $0xe58] sm:$0xff]
    %v3195 = vld [vmem:[#allocation12 + $0xe60] sm:$0xff]
    %v3196 = vld [vmem:[#allocation12 + $0xe68] sm:$0xff]
    %v3197 = vld [vmem:[#allocation12 + $0xe70] sm:$0xff]
    %v3198 = vld [vmem:[#allocation12 + $0xe78] sm:$0xff]
    %v3199 = vld [vmem:[#allocation12 + $0xe80] sm:$0xff]
    %v3200 = vld [vmem:[#allocation12 + $0xe88] sm:$0xff]
    %v3201 = vld [vmem:[#allocation12 + $0xe90] sm:$0xff]
    %v3202 = vld [vmem:[#allocation12 + $0xe98] sm:$0xff]
    %v3203 = vld [vmem:[#allocation12 + $0xea0] sm:$0xff]
    %v3204 = vld [vmem:[#allocation12 + $0xea8] sm:$0xff]
    %v3205 = vld [vmem:[#allocation12 + $0xeb0] sm:$0xff]
    %v3206 = vld [vmem:[#allocation12 + $0xeb8] sm:$0xff]
    %v3207 = vld [vmem:[#allocation12 + $0xec0] sm:$0xff]
    %v3208 = vld [vmem:[#allocation12 + $0xec8] sm:$0xff]
    %v3209 = vld [vmem:[#allocation12 + $0xed0] sm:$0xff]
    %v3210 = vld [vmem:[#allocation12 + $0xed8] sm:$0xff]
    %v3211 = vld [vmem:[#allocation12 + $0xee0] sm:$0xff]
    %v3212 = vld [vmem:[#allocation12 + $0xee8] sm:$0xff]
    %v3213 = vld [vmem:[#allocation12 + $0xef0] sm:$0xff]
    %v3214 = vld [vmem:[#allocation12 + $0xef8] sm:$0xff]
    %v3215 = vld [vmem:[#allocation12 + $0xf00] sm:$0xff]
    %v3216 = vld [vmem:[#allocation12 + $0xf08] sm:$0xff]
    %v3217 = vld [vmem:[#allocation12 + $0xf10] sm:$0xff]
    %v3218 = vld [vmem:[#allocation12 + $0xf18] sm:$0xff]
    %v3219 = vld [vmem:[#allocation12 + $0xf20] sm:$0xff]
    %v3220 = vld [vmem:[#allocation12 + $0xf28] sm:$0xff]
    %v3221 = vld [vmem:[#allocation12 + $0xf30] sm:$0xff]
    %v3222 = vld [vmem:[#allocation12 + $0xf38] sm:$0xff]
    %v3223 = vld [vmem:[#allocation12 + $0xf40] sm:$0xff]
    %v3224 = vld [vmem:[#allocation12 + $0xf48] sm:$0xff]
    %v3225 = vld [vmem:[#allocation12 + $0xf50] sm:$0xff]
    %v3226 = vld [vmem:[#allocation12 + $0xf58] sm:$0xff]
    %v3227 = vld [vmem:[#allocation12 + $0xf60] sm:$0xff]
    %v3228 = vld [vmem:[#allocation12 + $0xf68] sm:$0xff]
    %v3229 = vld [vmem:[#allocation12 + $0xf70] sm:$0xff]
    %v3230 = vld [vmem:[#allocation12 + $0xf78] sm:$0xff]
    %v3231 = vld [vmem:[#allocation12 + $0xf80] sm:$0xff]
    %v3232 = vld [vmem:[#allocation12 + $0xf88] sm:$0xff]
    %v3233 = vld [vmem:[#allocation12 + $0xf90] sm:$0xff]
    %v3234 = vld [vmem:[#allocation12 + $0xf98] sm:$0xff]
    %v3235 = vld [vmem:[#allocation12 + $0xfa0] sm:$0xff]
    %v3236 = vld [vmem:[#allocation12 + $0xfa8] sm:$0xff]
    %v3237 = vld [vmem:[#allocation12 + $0xfb0] sm:$0xff]
    %v3238 = vld [vmem:[#allocation12 + $0xfb8] sm:$0xff]
    %v3239 = vld [vmem:[#allocation12 + $0xfc0] sm:$0xff]
    %v3240 = vld [vmem:[#allocation12 + $0xfc8] sm:$0xff]
    %v3241 = vld [vmem:[#allocation12 + $0xfd0] sm:$0xff]
    %v3242 = vld [vmem:[#allocation12 + $0xfd8] sm:$0xff]
    %v3243 = vld [vmem:[#allocation12 + $0xfe0] sm:$0xff]
    %v3244 = vld [vmem:[#allocation12 + $0xfe8] sm:$0xff]
    %v3245 = vld [vmem:[#allocation12 + $0xff0] sm:$0xff]
    %v3246 = vld [vmem:[#allocation12 + $0xff8] sm:$0xff]
    %v3247 = vld [vmem:[#allocation13] sm:$0xff]
    %v3249 = vlaneseq
    %v3250 = vshrl.u32 %v3249, 7
    %v3251 = vsub.s32 0, %v3250
    %v3252 = vrot.slane %v3247, %v3251
    %v3253 = vlaneseq
    %v3254 = vshrl.u32 %v3253, 7
    %v3255 = vsub.s32 1, %v3254
    %v3256 = vrot.slane %v3247, %v3255
    %v3257 = vlaneseq
    %v3258 = vshrl.u32 %v3257, 7
    %v3259 = vsub.s32 2, %v3258
    %v3260 = vrot.slane %v3247, %v3259
    %v3261 = vlaneseq
    %v3262 = vshrl.u32 %v3261, 7
    %v3263 = vsub.s32 3, %v3262
    %v3264 = vrot.slane %v3247, %v3263
    %v3265 = vlaneseq
    %v3266 = vshrl.u32 %v3265, 7
    %v3267 = vsub.s32 4, %v3266
    %v3268 = vrot.slane %v3247, %v3267
    %v3269 = vlaneseq
    %v3270 = vshrl.u32 %v3269, 7
    %v3271 = vsub.s32 5, %v3270
    %v3272 = vrot.slane %v3247, %v3271
    %v3273 = vlaneseq
    %v3274 = vshrl.u32 %v3273, 7
    %v3275 = vsub.s32 6, %v3274
    %v3276 = vrot.slane %v3247, %v3275
    %v3277 = vlaneseq
    %v3278 = vshrl.u32 %v3277, 7
    %v3279 = vsub.s32 7, %v3278
    %v3280 = vrot.slane %v3247, %v3279
    %v3801 = vunpack.c.l.b16 %v2735
    %v3802 = vunpack.c.h.b16 %v2735
    %v3803 = vunpack.c.l.b16 %v2736
    %v3804 = vunpack.c.h.b16 %v2736
    %v3805 = vunpack.c.l.b16 %v2737
    %v3806 = vunpack.c.h.b16 %v2737
    %v3807 = vunpack.c.l.b16 %v2738
    %v3808 = vunpack.c.h.b16 %v2738
    %v3809 = vunpack.c.l.b16 %v2739
    %v3810 = vunpack.c.h.b16 %v2739
    %v3811 = vunpack.c.l.b16 %v2740
    %v3812 = vunpack.c.h.b16 %v2740
    %v3813 = vunpack.c.l.b16 %v2741
    %v3814 = vunpack.c.h.b16 %v2741
    %v3815 = vunpack.c.l.b16 %v2742
    %v3816 = vunpack.c.h.b16 %v2742
    %v3817 = vunpack.c.l.b16 %v2743
    %v3818 = vunpack.c.h.b16 %v2743
    %v3819 = vunpack.c.l.b16 %v2744
    %v3820 = vunpack.c.h.b16 %v2744
    %v3821 = vunpack.c.l.b16 %v2745
    %v3822 = vunpack.c.h.b16 %v2745
    %v3823 = vunpack.c.l.b16 %v2746
    %v3824 = vunpack.c.h.b16 %v2746
    %v3825 = vunpack.c.l.b16 %v2747
    %v3826 = vunpack.c.h.b16 %v2747
    %v3827 = vunpack.c.l.b16 %v2748
    %v3828 = vunpack.c.h.b16 %v2748
    %v3829 = vunpack.c.l.b16 %v2749
    %v3830 = vunpack.c.h.b16 %v2749
    %v3831 = vunpack.c.l.b16 %v2750
    %v3832 = vunpack.c.h.b16 %v2750
    %v3833 = vunpack.c.l.b16 %v2751
    %v3834 = vunpack.c.h.b16 %v2751
    %v3835 = vunpack.c.l.b16 %v2752
    %v3836 = vunpack.c.h.b16 %v2752
    %v3837 = vunpack.c.l.b16 %v2753
    %v3838 = vunpack.c.h.b16 %v2753
    %v3839 = vunpack.c.l.b16 %v2754
    %v3840 = vunpack.c.h.b16 %v2754
    %v3841 = vunpack.c.l.b16 %v2755
    %v3842 = vunpack.c.h.b16 %v2755
    %v3843 = vunpack.c.l.b16 %v2756
    %v3844 = vunpack.c.h.b16 %v2756
    %v3845 = vunpack.c.l.b16 %v2757
    %v3846 = vunpack.c.h.b16 %v2757
    %v3847 = vunpack.c.l.b16 %v2758
    %v3848 = vunpack.c.h.b16 %v2758
    %v3849 = vunpack.c.l.b16 %v2759
    %v3850 = vunpack.c.h.b16 %v2759
    %v3851 = vunpack.c.l.b16 %v2760
    %v3852 = vunpack.c.h.b16 %v2760
    %v3853 = vunpack.c.l.b16 %v2761
    %v3854 = vunpack.c.h.b16 %v2761
    %v3855 = vunpack.c.l.b16 %v2762
    %v3856 = vunpack.c.h.b16 %v2762
    %v3857 = vunpack.c.l.b16 %v2763
    %v3858 = vunpack.c.h.b16 %v2763
    %v3859 = vunpack.c.l.b16 %v2764
    %v3860 = vunpack.c.h.b16 %v2764
    %v3861 = vunpack.c.l.b16 %v2765
    %v3862 = vunpack.c.h.b16 %v2765
    %v3863 = vunpack.c.l.b16 %v2766
    %v3864 = vunpack.c.h.b16 %v2766
    %v3865 = vunpack.c.l.b16 %v2767
    %v3866 = vunpack.c.h.b16 %v2767
    %v3867 = vunpack.c.l.b16 %v2768
    %v3868 = vunpack.c.h.b16 %v2768
    %v3869 = vunpack.c.l.b16 %v2769
    %v3870 = vunpack.c.h.b16 %v2769
    %v3871 = vunpack.c.l.b16 %v2770
    %v3872 = vunpack.c.h.b16 %v2770
    %v3873 = vunpack.c.l.b16 %v2771
    %v3874 = vunpack.c.h.b16 %v2771
    %v3875 = vunpack.c.l.b16 %v2772
    %v3876 = vunpack.c.h.b16 %v2772
    %v3877 = vunpack.c.l.b16 %v2773
    %v3878 = vunpack.c.h.b16 %v2773
    %v3879 = vunpack.c.l.b16 %v2774
    %v3880 = vunpack.c.h.b16 %v2774
    %v3881 = vunpack.c.l.b16 %v2775
    %v3882 = vunpack.c.h.b16 %v2775
    %v3883 = vunpack.c.l.b16 %v2776
    %v3884 = vunpack.c.h.b16 %v2776
    %v3885 = vunpack.c.l.b16 %v2777
    %v3886 = vunpack.c.h.b16 %v2777
    %v3887 = vunpack.c.l.b16 %v2778
    %v3888 = vunpack.c.h.b16 %v2778
    %v3889 = vunpack.c.l.b16 %v2779
    %v3890 = vunpack.c.h.b16 %v2779
    %v3891 = vunpack.c.l.b16 %v2780
    %v3892 = vunpack.c.h.b16 %v2780
    %v3893 = vunpack.c.l.b16 %v2781
    %v3894 = vunpack.c.h.b16 %v2781
    %v3895 = vunpack.c.l.b16 %v2782
    %v3896 = vunpack.c.h.b16 %v2782
    %v3897 = vunpack.c.l.b16 %v2783
    %v3898 = vunpack.c.h.b16 %v2783
    %v3899 = vunpack.c.l.b16 %v2784
    %v3900 = vunpack.c.h.b16 %v2784
    %v3901 = vunpack.c.l.b16 %v2785
    %v3902 = vunpack.c.h.b16 %v2785
    %v3903 = vunpack.c.l.b16 %v2786
    %v3904 = vunpack.c.h.b16 %v2786
    %v3905 = vunpack.c.l.b16 %v2787
    %v3906 = vunpack.c.h.b16 %v2787
    %v3907 = vunpack.c.l.b16 %v2788
    %v3908 = vunpack.c.h.b16 %v2788
    %v3909 = vunpack.c.l.b16 %v2789
    %v3910 = vunpack.c.h.b16 %v2789
    %v3911 = vunpack.c.l.b16 %v2790
    %v3912 = vunpack.c.h.b16 %v2790
    %v3913 = vunpack.c.l.b16 %v2791
    %v3914 = vunpack.c.h.b16 %v2791
    %v3915 = vunpack.c.l.b16 %v2792
    %v3916 = vunpack.c.h.b16 %v2792
    %v3917 = vunpack.c.l.b16 %v2793
    %v3918 = vunpack.c.h.b16 %v2793
    %v3919 = vunpack.c.l.b16 %v2794
    %v3920 = vunpack.c.h.b16 %v2794
    %v3921 = vunpack.c.l.b16 %v2795
    %v3922 = vunpack.c.h.b16 %v2795
    %v3923 = vunpack.c.l.b16 %v2796
    %v3924 = vunpack.c.h.b16 %v2796
    %v3925 = vunpack.c.l.b16 %v2797
    %v3926 = vunpack.c.h.b16 %v2797
    %v3927 = vunpack.c.l.b16 %v2798
    %v3928 = vunpack.c.h.b16 %v2798
    %v3929 = vunpack.c.l.b16 %v2799
    %v3930 = vunpack.c.h.b16 %v2799
    %v3931 = vunpack.c.l.b16 %v2800
    %v3932 = vunpack.c.h.b16 %v2800
    %v3933 = vunpack.c.l.b16 %v2801
    %v3934 = vunpack.c.h.b16 %v2801
    %v3935 = vunpack.c.l.b16 %v2802
    %v3936 = vunpack.c.h.b16 %v2802
    %v3937 = vunpack.c.l.b16 %v2803
    %v3938 = vunpack.c.h.b16 %v2803
    %v3939 = vunpack.c.l.b16 %v2804
    %v3940 = vunpack.c.h.b16 %v2804
    %v3941 = vunpack.c.l.b16 %v2805
    %v3942 = vunpack.c.h.b16 %v2805
    %v3943 = vunpack.c.l.b16 %v2806
    %v3944 = vunpack.c.h.b16 %v2806
    %v3945 = vunpack.c.l.b16 %v2807
    %v3946 = vunpack.c.h.b16 %v2807
    %v3947 = vunpack.c.l.b16 %v2808
    %v3948 = vunpack.c.h.b16 %v2808
    %v3949 = vunpack.c.l.b16 %v2809
    %v3950 = vunpack.c.h.b16 %v2809
    %v3951 = vunpack.c.l.b16 %v2810
    %v3952 = vunpack.c.h.b16 %v2810
    %v3953 = vunpack.c.l.b16 %v2811
    %v3954 = vunpack.c.h.b16 %v2811
    %v3955 = vunpack.c.l.b16 %v2812
    %v3956 = vunpack.c.h.b16 %v2812
    %v3957 = vunpack.c.l.b16 %v2813
    %v3958 = vunpack.c.h.b16 %v2813
    %v3959 = vunpack.c.l.b16 %v2814
    %v3960 = vunpack.c.h.b16 %v2814
    %v3961 = vunpack.c.l.b16 %v2815
    %v3962 = vunpack.c.h.b16 %v2815
    %v3963 = vunpack.c.l.b16 %v2816
    %v3964 = vunpack.c.h.b16 %v2816
    %v3965 = vunpack.c.l.b16 %v2817
    %v3966 = vunpack.c.h.b16 %v2817
    %v3967 = vunpack.c.l.b16 %v2818
    %v3968 = vunpack.c.h.b16 %v2818
    %v3969 = vunpack.c.l.b16 %v2819
    %v3970 = vunpack.c.h.b16 %v2819
    %v3971 = vunpack.c.l.b16 %v2820
    %v3972 = vunpack.c.h.b16 %v2820
    %v3973 = vunpack.c.l.b16 %v2821
    %v3974 = vunpack.c.h.b16 %v2821
    %v3975 = vunpack.c.l.b16 %v2822
    %v3976 = vunpack.c.h.b16 %v2822
    %v3977 = vunpack.c.l.b16 %v2823
    %v3978 = vunpack.c.h.b16 %v2823
    %v3979 = vunpack.c.l.b16 %v2824
    %v3980 = vunpack.c.h.b16 %v2824
    %v3981 = vunpack.c.l.b16 %v2825
    %v3982 = vunpack.c.h.b16 %v2825
    %v3983 = vunpack.c.l.b16 %v2826
    %v3984 = vunpack.c.h.b16 %v2826
    %v3985 = vunpack.c.l.b16 %v2827
    %v3986 = vunpack.c.h.b16 %v2827
    %v3987 = vunpack.c.l.b16 %v2828
    %v3988 = vunpack.c.h.b16 %v2828
    %v3989 = vunpack.c.l.b16 %v2829
    %v3990 = vunpack.c.h.b16 %v2829
    %v3991 = vunpack.c.l.b16 %v2830
    %v3992 = vunpack.c.h.b16 %v2830
    %v3993 = vunpack.c.l.b16 %v2831
    %v3994 = vunpack.c.h.b16 %v2831
    %v3995 = vunpack.c.l.b16 %v2832
    %v3996 = vunpack.c.h.b16 %v2832
    %v3997 = vunpack.c.l.b16 %v2833
    %v3998 = vunpack.c.h.b16 %v2833
    %v3999 = vunpack.c.l.b16 %v2834
    %v4000 = vunpack.c.h.b16 %v2834
    %v4001 = vunpack.c.l.b16 %v2835
    %v4002 = vunpack.c.h.b16 %v2835
    %v4003 = vunpack.c.l.b16 %v2836
    %v4004 = vunpack.c.h.b16 %v2836
    %v4005 = vunpack.c.l.b16 %v2837
    %v4006 = vunpack.c.h.b16 %v2837
    %v4007 = vunpack.c.l.b16 %v2838
    %v4008 = vunpack.c.h.b16 %v2838
    %v4009 = vunpack.c.l.b16 %v2839
    %v4010 = vunpack.c.h.b16 %v2839
    %v4011 = vunpack.c.l.b16 %v2840
    %v4012 = vunpack.c.h.b16 %v2840
    %v4013 = vunpack.c.l.b16 %v2841
    %v4014 = vunpack.c.h.b16 %v2841
    %v4015 = vunpack.c.l.b16 %v2842
    %v4016 = vunpack.c.h.b16 %v2842
    %v4017 = vunpack.c.l.b16 %v2843
    %v4018 = vunpack.c.h.b16 %v2843
    %v4019 = vunpack.c.l.b16 %v2844
    %v4020 = vunpack.c.h.b16 %v2844
    %v4021 = vunpack.c.l.b16 %v2845
    %v4022 = vunpack.c.h.b16 %v2845
    %v4023 = vunpack.c.l.b16 %v2846
    %v4024 = vunpack.c.h.b16 %v2846
    %v4025 = vunpack.c.l.b16 %v2847
    %v4026 = vunpack.c.h.b16 %v2847
    %v4027 = vunpack.c.l.b16 %v2848
    %v4028 = vunpack.c.h.b16 %v2848
    %v4029 = vunpack.c.l.b16 %v2849
    %v4030 = vunpack.c.h.b16 %v2849
    %v4031 = vunpack.c.l.b16 %v2850
    %v4032 = vunpack.c.h.b16 %v2850
    %v4033 = vunpack.c.l.b16 %v2851
    %v4034 = vunpack.c.h.b16 %v2851
    %v4035 = vunpack.c.l.b16 %v2852
    %v4036 = vunpack.c.h.b16 %v2852
    %v4037 = vunpack.c.l.b16 %v2853
    %v4038 = vunpack.c.h.b16 %v2853
    %v4039 = vunpack.c.l.b16 %v2854
    %v4040 = vunpack.c.h.b16 %v2854
    %v4041 = vunpack.c.l.b16 %v2855
    %v4042 = vunpack.c.h.b16 %v2855
    %v4043 = vunpack.c.l.b16 %v2856
    %v4044 = vunpack.c.h.b16 %v2856
    %v4045 = vunpack.c.l.b16 %v2857
    %v4046 = vunpack.c.h.b16 %v2857
    %v4047 = vunpack.c.l.b16 %v2858
    %v4048 = vunpack.c.h.b16 %v2858
    %v4049 = vunpack.c.l.b16 %v2859
    %v4050 = vunpack.c.h.b16 %v2859
    %v4051 = vunpack.c.l.b16 %v2860
    %v4052 = vunpack.c.h.b16 %v2860
    %v4053 = vunpack.c.l.b16 %v2861
    %v4054 = vunpack.c.h.b16 %v2861
    %v4055 = vunpack.c.l.b16 %v2862
    %v4056 = vunpack.c.h.b16 %v2862
    %v4057 = vunpack.c.l.b16 %v2863
    %v4058 = vunpack.c.h.b16 %v2863
    %v4059 = vunpack.c.l.b16 %v2864
    %v4060 = vunpack.c.h.b16 %v2864
    %v4061 = vunpack.c.l.b16 %v2865
    %v4062 = vunpack.c.h.b16 %v2865
    %v4063 = vunpack.c.l.b16 %v2866
    %v4064 = vunpack.c.h.b16 %v2866
    %v4065 = vunpack.c.l.b16 %v2867
    %v4066 = vunpack.c.h.b16 %v2867
    %v4067 = vunpack.c.l.b16 %v2868
    %v4068 = vunpack.c.h.b16 %v2868
    %v4069 = vunpack.c.l.b16 %v2869
    %v4070 = vunpack.c.h.b16 %v2869
    %v4071 = vunpack.c.l.b16 %v2870
    %v4072 = vunpack.c.h.b16 %v2870
    %v4073 = vunpack.c.l.b16 %v2871
    %v4074 = vunpack.c.h.b16 %v2871
    %v4075 = vunpack.c.l.b16 %v2872
    %v4076 = vunpack.c.h.b16 %v2872
    %v4077 = vunpack.c.l.b16 %v2873
    %v4078 = vunpack.c.h.b16 %v2873
    %v4079 = vunpack.c.l.b16 %v2874
    %v4080 = vunpack.c.h.b16 %v2874
    %v4081 = vunpack.c.l.b16 %v2875
    %v4082 = vunpack.c.h.b16 %v2875
    %v4083 = vunpack.c.l.b16 %v2876
    %v4084 = vunpack.c.h.b16 %v2876
    %v4085 = vunpack.c.l.b16 %v2877
    %v4086 = vunpack.c.h.b16 %v2877
    %v4087 = vunpack.c.l.b16 %v2878
    %v4088 = vunpack.c.h.b16 %v2878
    %v4089 = vunpack.c.l.b16 %v2879
    %v4090 = vunpack.c.h.b16 %v2879
    %v4091 = vunpack.c.l.b16 %v2880
    %v4092 = vunpack.c.h.b16 %v2880
    %v4093 = vunpack.c.l.b16 %v2881
    %v4094 = vunpack.c.h.b16 %v2881
    %v4095 = vunpack.c.l.b16 %v2882
    %v4096 = vunpack.c.h.b16 %v2882
    %v4097 = vunpack.c.l.b16 %v2883
    %v4098 = vunpack.c.h.b16 %v2883
    %v4099 = vunpack.c.l.b16 %v2884
    %v4100 = vunpack.c.h.b16 %v2884
    %v4101 = vunpack.c.l.b16 %v2885
    %v4102 = vunpack.c.h.b16 %v2885
    %v4103 = vunpack.c.l.b16 %v2886
    %v4104 = vunpack.c.h.b16 %v2886
    %v4105 = vunpack.c.l.b16 %v2887
    %v4106 = vunpack.c.h.b16 %v2887
    %v4107 = vunpack.c.l.b16 %v2888
    %v4108 = vunpack.c.h.b16 %v2888
    %v4109 = vunpack.c.l.b16 %v2889
    %v4110 = vunpack.c.h.b16 %v2889
    %v4111 = vunpack.c.l.b16 %v2890
    %v4112 = vunpack.c.h.b16 %v2890
    %v4113 = vunpack.c.l.b16 %v2891
    %v4114 = vunpack.c.h.b16 %v2891
    %v4115 = vunpack.c.l.b16 %v2892
    %v4116 = vunpack.c.h.b16 %v2892
    %v4117 = vunpack.c.l.b16 %v2893
    %v4118 = vunpack.c.h.b16 %v2893
    %v4119 = vunpack.c.l.b16 %v2894
    %v4120 = vunpack.c.h.b16 %v2894
    %v4121 = vunpack.c.l.b16 %v2895
    %v4122 = vunpack.c.h.b16 %v2895
    %v4123 = vunpack.c.l.b16 %v2896
    %v4124 = vunpack.c.h.b16 %v2896
    %v4125 = vunpack.c.l.b16 %v2897
    %v4126 = vunpack.c.h.b16 %v2897
    %v4127 = vunpack.c.l.b16 %v2898
    %v4128 = vunpack.c.h.b16 %v2898
    %v4129 = vunpack.c.l.b16 %v2899
    %v4130 = vunpack.c.h.b16 %v2899
    %v4131 = vunpack.c.l.b16 %v2900
    %v4132 = vunpack.c.h.b16 %v2900
    %v4133 = vunpack.c.l.b16 %v2901
    %v4134 = vunpack.c.h.b16 %v2901
    %v4135 = vunpack.c.l.b16 %v2902
    %v4136 = vunpack.c.h.b16 %v2902
    %v4137 = vunpack.c.l.b16 %v2903
    %v4138 = vunpack.c.h.b16 %v2903
    %v4139 = vunpack.c.l.b16 %v2904
    %v4140 = vunpack.c.h.b16 %v2904
    %v4141 = vunpack.c.l.b16 %v2905
    %v4142 = vunpack.c.h.b16 %v2905
    %v4143 = vunpack.c.l.b16 %v2906
    %v4144 = vunpack.c.h.b16 %v2906
    %v4145 = vunpack.c.l.b16 %v2907
    %v4146 = vunpack.c.h.b16 %v2907
    %v4147 = vunpack.c.l.b16 %v2908
    %v4148 = vunpack.c.h.b16 %v2908
    %v4149 = vunpack.c.l.b16 %v2909
    %v4150 = vunpack.c.h.b16 %v2909
    %v4151 = vunpack.c.l.b16 %v2910
    %v4152 = vunpack.c.h.b16 %v2910
    %v4153 = vunpack.c.l.b16 %v2911
    %v4154 = vunpack.c.h.b16 %v2911
    %v4155 = vunpack.c.l.b16 %v2912
    %v4156 = vunpack.c.h.b16 %v2912
    %v4157 = vunpack.c.l.b16 %v2913
    %v4158 = vunpack.c.h.b16 %v2913
    %v4159 = vunpack.c.l.b16 %v2914
    %v4160 = vunpack.c.h.b16 %v2914
    %v4161 = vunpack.c.l.b16 %v2915
    %v4162 = vunpack.c.h.b16 %v2915
    %v4163 = vunpack.c.l.b16 %v2916
    %v4164 = vunpack.c.h.b16 %v2916
    %v4165 = vunpack.c.l.b16 %v2917
    %v4166 = vunpack.c.h.b16 %v2917
    %v4167 = vunpack.c.l.b16 %v2918
    %v4168 = vunpack.c.h.b16 %v2918
    %v4169 = vunpack.c.l.b16 %v2919
    %v4170 = vunpack.c.h.b16 %v2919
    %v4171 = vunpack.c.l.b16 %v2920
    %v4172 = vunpack.c.h.b16 %v2920
    %v4173 = vunpack.c.l.b16 %v2921
    %v4174 = vunpack.c.h.b16 %v2921
    %v4175 = vunpack.c.l.b16 %v2922
    %v4176 = vunpack.c.h.b16 %v2922
    %v4177 = vunpack.c.l.b16 %v2923
    %v4178 = vunpack.c.h.b16 %v2923
    %v4179 = vunpack.c.l.b16 %v2924
    %v4180 = vunpack.c.h.b16 %v2924
    %v4181 = vunpack.c.l.b16 %v2925
    %v4182 = vunpack.c.h.b16 %v2925
    %v4183 = vunpack.c.l.b16 %v2926
    %v4184 = vunpack.c.h.b16 %v2926
    %v4185 = vunpack.c.l.b16 %v2927
    %v4186 = vunpack.c.h.b16 %v2927
    %v4187 = vunpack.c.l.b16 %v2928
    %v4188 = vunpack.c.h.b16 %v2928
    %v4189 = vunpack.c.l.b16 %v2929
    %v4190 = vunpack.c.h.b16 %v2929
    %v4191 = vunpack.c.l.b16 %v2930
    %v4192 = vunpack.c.h.b16 %v2930
    %v4193 = vunpack.c.l.b16 %v2931
    %v4194 = vunpack.c.h.b16 %v2931
    %v4195 = vunpack.c.l.b16 %v2932
    %v4196 = vunpack.c.h.b16 %v2932
    %v4197 = vunpack.c.l.b16 %v2933
    %v4198 = vunpack.c.h.b16 %v2933
    %v4199 = vunpack.c.l.b16 %v2934
    %v4200 = vunpack.c.h.b16 %v2934
    %v4201 = vunpack.c.l.b16 %v2935
    %v4202 = vunpack.c.h.b16 %v2935
    %v4203 = vunpack.c.l.b16 %v2936
    %v4204 = vunpack.c.h.b16 %v2936
    %v4205 = vunpack.c.l.b16 %v2937
    %v4206 = vunpack.c.h.b16 %v2937
    %v4207 = vunpack.c.l.b16 %v2938
    %v4208 = vunpack.c.h.b16 %v2938
    %v4209 = vunpack.c.l.b16 %v2939
    %v4210 = vunpack.c.h.b16 %v2939
    %v4211 = vunpack.c.l.b16 %v2940
    %v4212 = vunpack.c.h.b16 %v2940
    %v4213 = vunpack.c.l.b16 %v2941
    %v4214 = vunpack.c.h.b16 %v2941
    %v4215 = vunpack.c.l.b16 %v2942
    %v4216 = vunpack.c.h.b16 %v2942
    %v4217 = vunpack.c.l.b16 %v2943
    %v4218 = vunpack.c.h.b16 %v2943
    %v4219 = vunpack.c.l.b16 %v2944
    %v4220 = vunpack.c.h.b16 %v2944
    %v4221 = vunpack.c.l.b16 %v2945
    %v4222 = vunpack.c.h.b16 %v2945
    %v4223 = vunpack.c.l.b16 %v2946
    %v4224 = vunpack.c.h.b16 %v2946
    %v4225 = vunpack.c.l.b16 %v2947
    %v4226 = vunpack.c.h.b16 %v2947
    %v4227 = vunpack.c.l.b16 %v2948
    %v4228 = vunpack.c.h.b16 %v2948
    %v4229 = vunpack.c.l.b16 %v2949
    %v4230 = vunpack.c.h.b16 %v2949
    %v4231 = vunpack.c.l.b16 %v2950
    %v4232 = vunpack.c.h.b16 %v2950
    %v4233 = vunpack.c.l.b16 %v2951
    %v4234 = vunpack.c.h.b16 %v2951
    %v4235 = vunpack.c.l.b16 %v2952
    %v4236 = vunpack.c.h.b16 %v2952
    %v4237 = vunpack.c.l.b16 %v2953
    %v4238 = vunpack.c.h.b16 %v2953
    %v4239 = vunpack.c.l.b16 %v2954
    %v4240 = vunpack.c.h.b16 %v2954
    %v4241 = vunpack.c.l.b16 %v2955
    %v4242 = vunpack.c.h.b16 %v2955
    %v4243 = vunpack.c.l.b16 %v2956
    %v4244 = vunpack.c.h.b16 %v2956
    %v4245 = vunpack.c.l.b16 %v2957
    %v4246 = vunpack.c.h.b16 %v2957
    %v4247 = vunpack.c.l.b16 %v2958
    %v4248 = vunpack.c.h.b16 %v2958
    %v4249 = vunpack.c.l.b16 %v2959
    %v4250 = vunpack.c.h.b16 %v2959
    %v4251 = vunpack.c.l.b16 %v2960
    %v4252 = vunpack.c.h.b16 %v2960
    %v4253 = vunpack.c.l.b16 %v2961
    %v4254 = vunpack.c.h.b16 %v2961
    %v4255 = vunpack.c.l.b16 %v2962
    %v4256 = vunpack.c.h.b16 %v2962
    %v4257 = vunpack.c.l.b16 %v2963
    %v4258 = vunpack.c.h.b16 %v2963
    %v4259 = vunpack.c.l.b16 %v2964
    %v4260 = vunpack.c.h.b16 %v2964
    %v4261 = vunpack.c.l.b16 %v2965
    %v4262 = vunpack.c.h.b16 %v2965
    %v4263 = vunpack.c.l.b16 %v2966
    %v4264 = vunpack.c.h.b16 %v2966
    %v4265 = vunpack.c.l.b16 %v2967
    %v4266 = vunpack.c.h.b16 %v2967
    %v4267 = vunpack.c.l.b16 %v2968
    %v4268 = vunpack.c.h.b16 %v2968
    %v4269 = vunpack.c.l.b16 %v2969
    %v4270 = vunpack.c.h.b16 %v2969
    %v4271 = vunpack.c.l.b16 %v2970
    %v4272 = vunpack.c.h.b16 %v2970
    %v4273 = vunpack.c.l.b16 %v2971
    %v4274 = vunpack.c.h.b16 %v2971
    %v4275 = vunpack.c.l.b16 %v2972
    %v4276 = vunpack.c.h.b16 %v2972
    %v4277 = vunpack.c.l.b16 %v2973
    %v4278 = vunpack.c.h.b16 %v2973
    %v4279 = vunpack.c.l.b16 %v2974
    %v4280 = vunpack.c.h.b16 %v2974
    %v4281 = vunpack.c.l.b16 %v2975
    %v4282 = vunpack.c.h.b16 %v2975
    %v4283 = vunpack.c.l.b16 %v2976
    %v4284 = vunpack.c.h.b16 %v2976
    %v4285 = vunpack.c.l.b16 %v2977
    %v4286 = vunpack.c.h.b16 %v2977
    %v4287 = vunpack.c.l.b16 %v2978
    %v4288 = vunpack.c.h.b16 %v2978
    %v4289 = vunpack.c.l.b16 %v2979
    %v4290 = vunpack.c.h.b16 %v2979
    %v4291 = vunpack.c.l.b16 %v2980
    %v4292 = vunpack.c.h.b16 %v2980
    %v4293 = vunpack.c.l.b16 %v2981
    %v4294 = vunpack.c.h.b16 %v2981
    %v4295 = vunpack.c.l.b16 %v2982
    %v4296 = vunpack.c.h.b16 %v2982
    %v4297 = vunpack.c.l.b16 %v2983
    %v4298 = vunpack.c.h.b16 %v2983
    %v4299 = vunpack.c.l.b16 %v2984
    %v4300 = vunpack.c.h.b16 %v2984
    %v4301 = vunpack.c.l.b16 %v2985
    %v4302 = vunpack.c.h.b16 %v2985
    %v4303 = vunpack.c.l.b16 %v2986
    %v4304 = vunpack.c.h.b16 %v2986
    %v4305 = vunpack.c.l.b16 %v2987
    %v4306 = vunpack.c.h.b16 %v2987
    %v4307 = vunpack.c.l.b16 %v2988
    %v4308 = vunpack.c.h.b16 %v2988
    %v4309 = vunpack.c.l.b16 %v2989
    %v4310 = vunpack.c.h.b16 %v2989
    %v4311 = vunpack.c.l.b16 %v2990
    %v4312 = vunpack.c.h.b16 %v2990
    %v4313 = vunpack.c.l.b16 %v2991
    %v4314 = vunpack.c.h.b16 %v2991
    %v4315 = vunpack.c.l.b16 %v2992
    %v4316 = vunpack.c.h.b16 %v2992
    %v4317 = vunpack.c.l.b16 %v2993
    %v4318 = vunpack.c.h.b16 %v2993
    %v4319 = vunpack.c.l.b16 %v2994
    %v4320 = vunpack.c.h.b16 %v2994
    %v4321 = vunpack.c.l.b16 %v2995
    %v4322 = vunpack.c.h.b16 %v2995
    %v4323 = vunpack.c.l.b16 %v2996
    %v4324 = vunpack.c.h.b16 %v2996
    %v4325 = vunpack.c.l.b16 %v2997
    %v4326 = vunpack.c.h.b16 %v2997
    %v4327 = vunpack.c.l.b16 %v2998
    %v4328 = vunpack.c.h.b16 %v2998
    %v4329 = vunpack.c.l.b16 %v2999
    %v4330 = vunpack.c.h.b16 %v2999
    %v4331 = vunpack.c.l.b16 %v3000
    %v4332 = vunpack.c.h.b16 %v3000
    %v4333 = vunpack.c.l.b16 %v3001
    %v4334 = vunpack.c.h.b16 %v3001
    %v4335 = vunpack.c.l.b16 %v3002
    %v4336 = vunpack.c.h.b16 %v3002
    %v4337 = vunpack.c.l.b16 %v3003
    %v4338 = vunpack.c.h.b16 %v3003
    %v4339 = vunpack.c.l.b16 %v3004
    %v4340 = vunpack.c.h.b16 %v3004
    %v4341 = vunpack.c.l.b16 %v3005
    %v4342 = vunpack.c.h.b16 %v3005
    %v4343 = vunpack.c.l.b16 %v3006
    %v4344 = vunpack.c.h.b16 %v3006
    %v4345 = vunpack.c.l.b16 %v3007
    %v4346 = vunpack.c.h.b16 %v3007
    %v4347 = vunpack.c.l.b16 %v3008
    %v4348 = vunpack.c.h.b16 %v3008
    %v4349 = vunpack.c.l.b16 %v3009
    %v4350 = vunpack.c.h.b16 %v3009
    %v4351 = vunpack.c.l.b16 %v3010
    %v4352 = vunpack.c.h.b16 %v3010
    %v4353 = vunpack.c.l.b16 %v3011
    %v4354 = vunpack.c.h.b16 %v3011
    %v4355 = vunpack.c.l.b16 %v3012
    %v4356 = vunpack.c.h.b16 %v3012
    %v4357 = vunpack.c.l.b16 %v3013
    %v4358 = vunpack.c.h.b16 %v3013
    %v4359 = vunpack.c.l.b16 %v3014
    %v4360 = vunpack.c.h.b16 %v3014
    %v4361 = vunpack.c.l.b16 %v3015
    %v4362 = vunpack.c.h.b16 %v3015
    %v4363 = vunpack.c.l.b16 %v3016
    %v4364 = vunpack.c.h.b16 %v3016
    %v4365 = vunpack.c.l.b16 %v3017
    %v4366 = vunpack.c.h.b16 %v3017
    %v4367 = vunpack.c.l.b16 %v3018
    %v4368 = vunpack.c.h.b16 %v3018
    %v4369 = vunpack.c.l.b16 %v3019
    %v4370 = vunpack.c.h.b16 %v3019
    %v4371 = vunpack.c.l.b16 %v3020
    %v4372 = vunpack.c.h.b16 %v3020
    %v4373 = vunpack.c.l.b16 %v3021
    %v4374 = vunpack.c.h.b16 %v3021
    %v4375 = vunpack.c.l.b16 %v3022
    %v4376 = vunpack.c.h.b16 %v3022
    %v4377 = vunpack.c.l.b16 %v3023
    %v4378 = vunpack.c.h.b16 %v3023
    %v4379 = vunpack.c.l.b16 %v3024
    %v4380 = vunpack.c.h.b16 %v3024
    %v4381 = vunpack.c.l.b16 %v3025
    %v4382 = vunpack.c.h.b16 %v3025
    %v4383 = vunpack.c.l.b16 %v3026
    %v4384 = vunpack.c.h.b16 %v3026
    %v4385 = vunpack.c.l.b16 %v3027
    %v4386 = vunpack.c.h.b16 %v3027
    %v4387 = vunpack.c.l.b16 %v3028
    %v4388 = vunpack.c.h.b16 %v3028
    %v4389 = vunpack.c.l.b16 %v3029
    %v4390 = vunpack.c.h.b16 %v3029
    %v4391 = vunpack.c.l.b16 %v3030
    %v4392 = vunpack.c.h.b16 %v3030
    %v4393 = vunpack.c.l.b16 %v3031
    %v4394 = vunpack.c.h.b16 %v3031
    %v4395 = vunpack.c.l.b16 %v3032
    %v4396 = vunpack.c.h.b16 %v3032
    %v4397 = vunpack.c.l.b16 %v3033
    %v4398 = vunpack.c.h.b16 %v3033
    %v4399 = vunpack.c.l.b16 %v3034
    %v4400 = vunpack.c.h.b16 %v3034
    %v4401 = vunpack.c.l.b16 %v3035
    %v4402 = vunpack.c.h.b16 %v3035
    %v4403 = vunpack.c.l.b16 %v3036
    %v4404 = vunpack.c.h.b16 %v3036
    %v4405 = vunpack.c.l.b16 %v3037
    %v4406 = vunpack.c.h.b16 %v3037
    %v4407 = vunpack.c.l.b16 %v3038
    %v4408 = vunpack.c.h.b16 %v3038
    %v4409 = vunpack.c.l.b16 %v3039
    %v4410 = vunpack.c.h.b16 %v3039
    %v4411 = vunpack.c.l.b16 %v3040
    %v4412 = vunpack.c.h.b16 %v3040
    %v4413 = vunpack.c.l.b16 %v3041
    %v4414 = vunpack.c.h.b16 %v3041
    %v4415 = vunpack.c.l.b16 %v3042
    %v4416 = vunpack.c.h.b16 %v3042
    %v4417 = vunpack.c.l.b16 %v3043
    %v4418 = vunpack.c.h.b16 %v3043
    %v4419 = vunpack.c.l.b16 %v3044
    %v4420 = vunpack.c.h.b16 %v3044
    %v4421 = vunpack.c.l.b16 %v3045
    %v4422 = vunpack.c.h.b16 %v3045
    %v4423 = vunpack.c.l.b16 %v3046
    %v4424 = vunpack.c.h.b16 %v3046
    %v4425 = vunpack.c.l.b16 %v3047
    %v4426 = vunpack.c.h.b16 %v3047
    %v4427 = vunpack.c.l.b16 %v3048
    %v4428 = vunpack.c.h.b16 %v3048
    %v4429 = vunpack.c.l.b16 %v3049
    %v4430 = vunpack.c.h.b16 %v3049
    %v4431 = vunpack.c.l.b16 %v3050
    %v4432 = vunpack.c.h.b16 %v3050
    %v4433 = vunpack.c.l.b16 %v3051
    %v4434 = vunpack.c.h.b16 %v3051
    %v4435 = vunpack.c.l.b16 %v3052
    %v4436 = vunpack.c.h.b16 %v3052
    %v4437 = vunpack.c.l.b16 %v3053
    %v4438 = vunpack.c.h.b16 %v3053
    %v4439 = vunpack.c.l.b16 %v3054
    %v4440 = vunpack.c.h.b16 %v3054
    %v4441 = vunpack.c.l.b16 %v3055
    %v4442 = vunpack.c.h.b16 %v3055
    %v4443 = vunpack.c.l.b16 %v3056
    %v4444 = vunpack.c.h.b16 %v3056
    %v4445 = vunpack.c.l.b16 %v3057
    %v4446 = vunpack.c.h.b16 %v3057
    %v4447 = vunpack.c.l.b16 %v3058
    %v4448 = vunpack.c.h.b16 %v3058
    %v4449 = vunpack.c.l.b16 %v3059
    %v4450 = vunpack.c.h.b16 %v3059
    %v4451 = vunpack.c.l.b16 %v3060
    %v4452 = vunpack.c.h.b16 %v3060
    %v4453 = vunpack.c.l.b16 %v3061
    %v4454 = vunpack.c.h.b16 %v3061
    %v4455 = vunpack.c.l.b16 %v3062
    %v4456 = vunpack.c.h.b16 %v3062
    %v4457 = vunpack.c.l.b16 %v3063
    %v4458 = vunpack.c.h.b16 %v3063
    %v4459 = vunpack.c.l.b16 %v3064
    %v4460 = vunpack.c.h.b16 %v3064
    %v4461 = vunpack.c.l.b16 %v3065
    %v4462 = vunpack.c.h.b16 %v3065
    %v4463 = vunpack.c.l.b16 %v3066
    %v4464 = vunpack.c.h.b16 %v3066
    %v4465 = vunpack.c.l.b16 %v3067
    %v4466 = vunpack.c.h.b16 %v3067
    %v4467 = vunpack.c.l.b16 %v3068
    %v4468 = vunpack.c.h.b16 %v3068
    %v4469 = vunpack.c.l.b16 %v3069
    %v4470 = vunpack.c.h.b16 %v3069
    %v4471 = vunpack.c.l.b16 %v3070
    %v4472 = vunpack.c.h.b16 %v3070
    %v4473 = vunpack.c.l.b16 %v3071
    %v4474 = vunpack.c.h.b16 %v3071
    %v4475 = vunpack.c.l.b16 %v3072
    %v4476 = vunpack.c.h.b16 %v3072
    %v4477 = vunpack.c.l.b16 %v3073
    %v4478 = vunpack.c.h.b16 %v3073
    %v4479 = vunpack.c.l.b16 %v3074
    %v4480 = vunpack.c.h.b16 %v3074
    %v4481 = vunpack.c.l.b16 %v3075
    %v4482 = vunpack.c.h.b16 %v3075
    %v4483 = vunpack.c.l.b16 %v3076
    %v4484 = vunpack.c.h.b16 %v3076
    %v4485 = vunpack.c.l.b16 %v3077
    %v4486 = vunpack.c.h.b16 %v3077
    %v4487 = vunpack.c.l.b16 %v3078
    %v4488 = vunpack.c.h.b16 %v3078
    %v4489 = vunpack.c.l.b16 %v3079
    %v4490 = vunpack.c.h.b16 %v3079
    %v4491 = vunpack.c.l.b16 %v3080
    %v4492 = vunpack.c.h.b16 %v3080
    %v4493 = vunpack.c.l.b16 %v3081
    %v4494 = vunpack.c.h.b16 %v3081
    %v4495 = vunpack.c.l.b16 %v3082
    %v4496 = vunpack.c.h.b16 %v3082
    %v4497 = vunpack.c.l.b16 %v3083
    %v4498 = vunpack.c.h.b16 %v3083
    %v4499 = vunpack.c.l.b16 %v3084
    %v4500 = vunpack.c.h.b16 %v3084
    %v4501 = vunpack.c.l.b16 %v3085
    %v4502 = vunpack.c.h.b16 %v3085
    %v4503 = vunpack.c.l.b16 %v3086
    %v4504 = vunpack.c.h.b16 %v3086
    %v4505 = vunpack.c.l.b16 %v3087
    %v4506 = vunpack.c.h.b16 %v3087
    %v4507 = vunpack.c.l.b16 %v3088
    %v4508 = vunpack.c.h.b16 %v3088
    %v4509 = vunpack.c.l.b16 %v3089
    %v4510 = vunpack.c.h.b16 %v3089
    %v4511 = vunpack.c.l.b16 %v3090
    %v4512 = vunpack.c.h.b16 %v3090
    %v4513 = vunpack.c.l.b16 %v3091
    %v4514 = vunpack.c.h.b16 %v3091
    %v4515 = vunpack.c.l.b16 %v3092
    %v4516 = vunpack.c.h.b16 %v3092
    %v4517 = vunpack.c.l.b16 %v3093
    %v4518 = vunpack.c.h.b16 %v3093
    %v4519 = vunpack.c.l.b16 %v3094
    %v4520 = vunpack.c.h.b16 %v3094
    %v4521 = vunpack.c.l.b16 %v3095
    %v4522 = vunpack.c.h.b16 %v3095
    %v4523 = vunpack.c.l.b16 %v3096
    %v4524 = vunpack.c.h.b16 %v3096
    %v4525 = vunpack.c.l.b16 %v3097
    %v4526 = vunpack.c.h.b16 %v3097
    %v4527 = vunpack.c.l.b16 %v3098
    %v4528 = vunpack.c.h.b16 %v3098
    %v4529 = vunpack.c.l.b16 %v3099
    %v4530 = vunpack.c.h.b16 %v3099
    %v4531 = vunpack.c.l.b16 %v3100
    %v4532 = vunpack.c.h.b16 %v3100
    %v4533 = vunpack.c.l.b16 %v3101
    %v4534 = vunpack.c.h.b16 %v3101
    %v4535 = vunpack.c.l.b16 %v3102
    %v4536 = vunpack.c.h.b16 %v3102
    %v4537 = vunpack.c.l.b16 %v3103
    %v4538 = vunpack.c.h.b16 %v3103
    %v4539 = vunpack.c.l.b16 %v3104
    %v4540 = vunpack.c.h.b16 %v3104
    %v4541 = vunpack.c.l.b16 %v3105
    %v4542 = vunpack.c.h.b16 %v3105
    %v4543 = vunpack.c.l.b16 %v3106
    %v4544 = vunpack.c.h.b16 %v3106
    %v4545 = vunpack.c.l.b16 %v3107
    %v4546 = vunpack.c.h.b16 %v3107
    %v4547 = vunpack.c.l.b16 %v3108
    %v4548 = vunpack.c.h.b16 %v3108
    %v4549 = vunpack.c.l.b16 %v3109
    %v4550 = vunpack.c.h.b16 %v3109
    %v4551 = vunpack.c.l.b16 %v3110
    %v4552 = vunpack.c.h.b16 %v3110
    %v4553 = vunpack.c.l.b16 %v3111
    %v4554 = vunpack.c.h.b16 %v3111
    %v4555 = vunpack.c.l.b16 %v3112
    %v4556 = vunpack.c.h.b16 %v3112
    %v4557 = vunpack.c.l.b16 %v3113
    %v4558 = vunpack.c.h.b16 %v3113
    %v4559 = vunpack.c.l.b16 %v3114
    %v4560 = vunpack.c.h.b16 %v3114
    %v4561 = vunpack.c.l.b16 %v3115
    %v4562 = vunpack.c.h.b16 %v3115
    %v4563 = vunpack.c.l.b16 %v3116
    %v4564 = vunpack.c.h.b16 %v3116
    %v4565 = vunpack.c.l.b16 %v3117
    %v4566 = vunpack.c.h.b16 %v3117
    %v4567 = vunpack.c.l.b16 %v3118
    %v4568 = vunpack.c.h.b16 %v3118
    %v4569 = vunpack.c.l.b16 %v3119
    %v4570 = vunpack.c.h.b16 %v3119
    %v4571 = vunpack.c.l.b16 %v3120
    %v4572 = vunpack.c.h.b16 %v3120
    %v4573 = vunpack.c.l.b16 %v3121
    %v4574 = vunpack.c.h.b16 %v3121
    %v4575 = vunpack.c.l.b16 %v3122
    %v4576 = vunpack.c.h.b16 %v3122
    %v4577 = vunpack.c.l.b16 %v3123
    %v4578 = vunpack.c.h.b16 %v3123
    %v4579 = vunpack.c.l.b16 %v3124
    %v4580 = vunpack.c.h.b16 %v3124
    %v4581 = vunpack.c.l.b16 %v3125
    %v4582 = vunpack.c.h.b16 %v3125
    %v4583 = vunpack.c.l.b16 %v3126
    %v4584 = vunpack.c.h.b16 %v3126
    %v4585 = vunpack.c.l.b16 %v3127
    %v4586 = vunpack.c.h.b16 %v3127
    %v4587 = vunpack.c.l.b16 %v3128
    %v4588 = vunpack.c.h.b16 %v3128
    %v4589 = vunpack.c.l.b16 %v3129
    %v4590 = vunpack.c.h.b16 %v3129
    %v4591 = vunpack.c.l.b16 %v3130
    %v4592 = vunpack.c.h.b16 %v3130
    %v4593 = vunpack.c.l.b16 %v3131
    %v4594 = vunpack.c.h.b16 %v3131
    %v4595 = vunpack.c.l.b16 %v3132
    %v4596 = vunpack.c.h.b16 %v3132
    %v4597 = vunpack.c.l.b16 %v3133
    %v4598 = vunpack.c.h.b16 %v3133
    %v4599 = vunpack.c.l.b16 %v3134
    %v4600 = vunpack.c.h.b16 %v3134
    %v4601 = vunpack.c.l.b16 %v3135
    %v4602 = vunpack.c.h.b16 %v3135
    %v4603 = vunpack.c.l.b16 %v3136
    %v4604 = vunpack.c.h.b16 %v3136
    %v4605 = vunpack.c.l.b16 %v3137
    %v4606 = vunpack.c.h.b16 %v3137
    %v4607 = vunpack.c.l.b16 %v3138
    %v4608 = vunpack.c.h.b16 %v3138
    %v4609 = vunpack.c.l.b16 %v3139
    %v4610 = vunpack.c.h.b16 %v3139
    %v4611 = vunpack.c.l.b16 %v3140
    %v4612 = vunpack.c.h.b16 %v3140
    %v4613 = vunpack.c.l.b16 %v3141
    %v4614 = vunpack.c.h.b16 %v3141
    %v4615 = vunpack.c.l.b16 %v3142
    %v4616 = vunpack.c.h.b16 %v3142
    %v4617 = vunpack.c.l.b16 %v3143
    %v4618 = vunpack.c.h.b16 %v3143
    %v4619 = vunpack.c.l.b16 %v3144
    %v4620 = vunpack.c.h.b16 %v3144
    %v4621 = vunpack.c.l.b16 %v3145
    %v4622 = vunpack.c.h.b16 %v3145
    %v4623 = vunpack.c.l.b16 %v3146
    %v4624 = vunpack.c.h.b16 %v3146
    %v4625 = vunpack.c.l.b16 %v3147
    %v4626 = vunpack.c.h.b16 %v3147
    %v4627 = vunpack.c.l.b16 %v3148
    %v4628 = vunpack.c.h.b16 %v3148
    %v4629 = vunpack.c.l.b16 %v3149
    %v4630 = vunpack.c.h.b16 %v3149
    %v4631 = vunpack.c.l.b16 %v3150
    %v4632 = vunpack.c.h.b16 %v3150
    %v4633 = vunpack.c.l.b16 %v3151
    %v4634 = vunpack.c.h.b16 %v3151
    %v4635 = vunpack.c.l.b16 %v3152
    %v4636 = vunpack.c.h.b16 %v3152
    %v4637 = vunpack.c.l.b16 %v3153
    %v4638 = vunpack.c.h.b16 %v3153
    %v4639 = vunpack.c.l.b16 %v3154
    %v4640 = vunpack.c.h.b16 %v3154
    %v4641 = vunpack.c.l.b16 %v3155
    %v4642 = vunpack.c.h.b16 %v3155
    %v4643 = vunpack.c.l.b16 %v3156
    %v4644 = vunpack.c.h.b16 %v3156
    %v4645 = vunpack.c.l.b16 %v3157
    %v4646 = vunpack.c.h.b16 %v3157
    %v4647 = vunpack.c.l.b16 %v3158
    %v4648 = vunpack.c.h.b16 %v3158
    %v4649 = vunpack.c.l.b16 %v3159
    %v4650 = vunpack.c.h.b16 %v3159
    %v4651 = vunpack.c.l.b16 %v3160
    %v4652 = vunpack.c.h.b16 %v3160
    %v4653 = vunpack.c.l.b16 %v3161
    %v4654 = vunpack.c.h.b16 %v3161
    %v4655 = vunpack.c.l.b16 %v3162
    %v4656 = vunpack.c.h.b16 %v3162
    %v4657 = vunpack.c.l.b16 %v3163
    %v4658 = vunpack.c.h.b16 %v3163
    %v4659 = vunpack.c.l.b16 %v3164
    %v4660 = vunpack.c.h.b16 %v3164
    %v4661 = vunpack.c.l.b16 %v3165
    %v4662 = vunpack.c.h.b16 %v3165
    %v4663 = vunpack.c.l.b16 %v3166
    %v4664 = vunpack.c.h.b16 %v3166
    %v4665 = vunpack.c.l.b16 %v3167
    %v4666 = vunpack.c.h.b16 %v3167
    %v4667 = vunpack.c.l.b16 %v3168
    %v4668 = vunpack.c.h.b16 %v3168
    %v4669 = vunpack.c.l.b16 %v3169
    %v4670 = vunpack.c.h.b16 %v3169
    %v4671 = vunpack.c.l.b16 %v3170
    %v4672 = vunpack.c.h.b16 %v3170
    %v4673 = vunpack.c.l.b16 %v3171
    %v4674 = vunpack.c.h.b16 %v3171
    %v4675 = vunpack.c.l.b16 %v3172
    %v4676 = vunpack.c.h.b16 %v3172
    %v4677 = vunpack.c.l.b16 %v3173
    %v4678 = vunpack.c.h.b16 %v3173
    %v4679 = vunpack.c.l.b16 %v3174
    %v4680 = vunpack.c.h.b16 %v3174
    %v4681 = vunpack.c.l.b16 %v3175
    %v4682 = vunpack.c.h.b16 %v3175
    %v4683 = vunpack.c.l.b16 %v3176
    %v4684 = vunpack.c.h.b16 %v3176
    %v4685 = vunpack.c.l.b16 %v3177
    %v4686 = vunpack.c.h.b16 %v3177
    %v4687 = vunpack.c.l.b16 %v3178
    %v4688 = vunpack.c.h.b16 %v3178
    %v4689 = vunpack.c.l.b16 %v3179
    %v4690 = vunpack.c.h.b16 %v3179
    %v4691 = vunpack.c.l.b16 %v3180
    %v4692 = vunpack.c.h.b16 %v3180
    %v4693 = vunpack.c.l.b16 %v3181
    %v4694 = vunpack.c.h.b16 %v3181
    %v4695 = vunpack.c.l.b16 %v3182
    %v4696 = vunpack.c.h.b16 %v3182
    %v4697 = vunpack.c.l.b16 %v3183
    %v4698 = vunpack.c.h.b16 %v3183
    %v4699 = vunpack.c.l.b16 %v3184
    %v4700 = vunpack.c.h.b16 %v3184
    %v4701 = vunpack.c.l.b16 %v3185
    %v4702 = vunpack.c.h.b16 %v3185
    %v4703 = vunpack.c.l.b16 %v3186
    %v4704 = vunpack.c.h.b16 %v3186
    %v4705 = vunpack.c.l.b16 %v3187
    %v4706 = vunpack.c.h.b16 %v3187
    %v4707 = vunpack.c.l.b16 %v3188
    %v4708 = vunpack.c.h.b16 %v3188
    %v4709 = vunpack.c.l.b16 %v3189
    %v4710 = vunpack.c.h.b16 %v3189
    %v4711 = vunpack.c.l.b16 %v3190
    %v4712 = vunpack.c.h.b16 %v3190
    %v4713 = vunpack.c.l.b16 %v3191
    %v4714 = vunpack.c.h.b16 %v3191
    %v4715 = vunpack.c.l.b16 %v3192
    %v4716 = vunpack.c.h.b16 %v3192
    %v4717 = vunpack.c.l.b16 %v3193
    %v4718 = vunpack.c.h.b16 %v3193
    %v4719 = vunpack.c.l.b16 %v3194
    %v4720 = vunpack.c.h.b16 %v3194
    %v4721 = vunpack.c.l.b16 %v3195
    %v4722 = vunpack.c.h.b16 %v3195
    %v4723 = vunpack.c.l.b16 %v3196
    %v4724 = vunpack.c.h.b16 %v3196
    %v4725 = vunpack.c.l.b16 %v3197
    %v4726 = vunpack.c.h.b16 %v3197
    %v4727 = vunpack.c.l.b16 %v3198
    %v4728 = vunpack.c.h.b16 %v3198
    %v4729 = vunpack.c.l.b16 %v3199
    %v4730 = vunpack.c.h.b16 %v3199
    %v4731 = vunpack.c.l.b16 %v3200
    %v4732 = vunpack.c.h.b16 %v3200
    %v4733 = vunpack.c.l.b16 %v3201
    %v4734 = vunpack.c.h.b16 %v3201
    %v4735 = vunpack.c.l.b16 %v3202
    %v4736 = vunpack.c.h.b16 %v3202
    %v4737 = vunpack.c.l.b16 %v3203
    %v4738 = vunpack.c.h.b16 %v3203
    %v4739 = vunpack.c.l.b16 %v3204
    %v4740 = vunpack.c.h.b16 %v3204
    %v4741 = vunpack.c.l.b16 %v3205
    %v4742 = vunpack.c.h.b16 %v3205
    %v4743 = vunpack.c.l.b16 %v3206
    %v4744 = vunpack.c.h.b16 %v3206
    %v4745 = vunpack.c.l.b16 %v3207
    %v4746 = vunpack.c.h.b16 %v3207
    %v4747 = vunpack.c.l.b16 %v3208
    %v4748 = vunpack.c.h.b16 %v3208
    %v4749 = vunpack.c.l.b16 %v3209
    %v4750 = vunpack.c.h.b16 %v3209
    %v4751 = vunpack.c.l.b16 %v3210
    %v4752 = vunpack.c.h.b16 %v3210
    %v4753 = vunpack.c.l.b16 %v3211
    %v4754 = vunpack.c.h.b16 %v3211
    %v4755 = vunpack.c.l.b16 %v3212
    %v4756 = vunpack.c.h.b16 %v3212
    %v4757 = vunpack.c.l.b16 %v3213
    %v4758 = vunpack.c.h.b16 %v3213
    %v4759 = vunpack.c.l.b16 %v3214
    %v4760 = vunpack.c.h.b16 %v3214
    %v4761 = vunpack.c.l.b16 %v3215
    %v4762 = vunpack.c.h.b16 %v3215
    %v4763 = vunpack.c.l.b16 %v3216
    %v4764 = vunpack.c.h.b16 %v3216
    %v4765 = vunpack.c.l.b16 %v3217
    %v4766 = vunpack.c.h.b16 %v3217
    %v4767 = vunpack.c.l.b16 %v3218
    %v4768 = vunpack.c.h.b16 %v3218
    %v4769 = vunpack.c.l.b16 %v3219
    %v4770 = vunpack.c.h.b16 %v3219
    %v4771 = vunpack.c.l.b16 %v3220
    %v4772 = vunpack.c.h.b16 %v3220
    %v4773 = vunpack.c.l.b16 %v3221
    %v4774 = vunpack.c.h.b16 %v3221
    %v4775 = vunpack.c.l.b16 %v3222
    %v4776 = vunpack.c.h.b16 %v3222
    %v4777 = vunpack.c.l.b16 %v3223
    %v4778 = vunpack.c.h.b16 %v3223
    %v4779 = vunpack.c.l.b16 %v3224
    %v4780 = vunpack.c.h.b16 %v3224
    %v4781 = vunpack.c.l.b16 %v3225
    %v4782 = vunpack.c.h.b16 %v3225
    %v4783 = vunpack.c.l.b16 %v3226
    %v4784 = vunpack.c.h.b16 %v3226
    %v4785 = vunpack.c.l.b16 %v3227
    %v4786 = vunpack.c.h.b16 %v3227
    %v4787 = vunpack.c.l.b16 %v3228
    %v4788 = vunpack.c.h.b16 %v3228
    %v4789 = vunpack.c.l.b16 %v3229
    %v4790 = vunpack.c.h.b16 %v3229
    %v4791 = vunpack.c.l.b16 %v3230
    %v4792 = vunpack.c.h.b16 %v3230
    %v4793 = vunpack.c.l.b16 %v3231
    %v4794 = vunpack.c.h.b16 %v3231
    %v4795 = vunpack.c.l.b16 %v3232
    %v4796 = vunpack.c.h.b16 %v3232
    %v4797 = vunpack.c.l.b16 %v3233
    %v4798 = vunpack.c.h.b16 %v3233
    %v4799 = vunpack.c.l.b16 %v3234
    %v4800 = vunpack.c.h.b16 %v3234
    %v4801 = vunpack.c.l.b16 %v3235
    %v4802 = vunpack.c.h.b16 %v3235
    %v4803 = vunpack.c.l.b16 %v3236
    %v4804 = vunpack.c.h.b16 %v3236
    %v4805 = vunpack.c.l.b16 %v3237
    %v4806 = vunpack.c.h.b16 %v3237
    %v4807 = vunpack.c.l.b16 %v3238
    %v4808 = vunpack.c.h.b16 %v3238
    %v4809 = vunpack.c.l.b16 %v3239
    %v4810 = vunpack.c.h.b16 %v3239
    %v4811 = vunpack.c.l.b16 %v3240
    %v4812 = vunpack.c.h.b16 %v3240
    %v4813 = vunpack.c.l.b16 %v3241
    %v4814 = vunpack.c.h.b16 %v3241
    %v4815 = vunpack.c.l.b16 %v3242
    %v4816 = vunpack.c.h.b16 %v3242
    %v4817 = vunpack.c.l.b16 %v3243
    %v4818 = vunpack.c.h.b16 %v3243
    %v4819 = vunpack.c.l.b16 %v3244
    %v4820 = vunpack.c.h.b16 %v3244
    %v4821 = vunpack.c.l.b16 %v3245
    %v4822 = vunpack.c.h.b16 %v3245
    %v4823 = vunpack.c.l.b16 %v3246
    %v4824 = vunpack.c.h.b16 %v3246
    %v4825 = vpack.c.b16 %v3809, %v3801
    %v4826 = vpack.c.b16 %v3810, %v3802
    %v4827 = vpack.c.b16 %v3811, %v3803
    %v4828 = vpack.c.b16 %v3812, %v3804
    %v4829 = vpack.c.b16 %v3813, %v3805
    %v4830 = vpack.c.b16 %v3814, %v3806
    %v4831 = vpack.c.b16 %v3815, %v3807
    %v4832 = vpack.c.b16 %v3816, %v3808
    %v4833 = vpack.c.b16 %v3825, %v3817
    %v4834 = vpack.c.b16 %v3826, %v3818
    %v4835 = vpack.c.b16 %v3827, %v3819
    %v4836 = vpack.c.b16 %v3828, %v3820
    %v4837 = vpack.c.b16 %v3829, %v3821
    %v4838 = vpack.c.b16 %v3830, %v3822
    %v4839 = vpack.c.b16 %v3831, %v3823
    %v4840 = vpack.c.b16 %v3832, %v3824
    %v4841 = vpack.c.b16 %v3841, %v3833
    %v4842 = vpack.c.b16 %v3842, %v3834
    %v4843 = vpack.c.b16 %v3843, %v3835
    %v4844 = vpack.c.b16 %v3844, %v3836
    %v4845 = vpack.c.b16 %v3845, %v3837
    %v4846 = vpack.c.b16 %v3846, %v3838
    %v4847 = vpack.c.b16 %v3847, %v3839
    %v4848 = vpack.c.b16 %v3848, %v3840
    %v4849 = vpack.c.b16 %v3857, %v3849
    %v4850 = vpack.c.b16 %v3858, %v3850
    %v4851 = vpack.c.b16 %v3859, %v3851
    %v4852 = vpack.c.b16 %v3860, %v3852
    %v4853 = vpack.c.b16 %v3861, %v3853
    %v4854 = vpack.c.b16 %v3862, %v3854
    %v4855 = vpack.c.b16 %v3863, %v3855
    %v4856 = vpack.c.b16 %v3864, %v3856
    %v4857 = vpack.c.b16 %v3873, %v3865
    %v4858 = vpack.c.b16 %v3874, %v3866
    %v4859 = vpack.c.b16 %v3875, %v3867
    %v4860 = vpack.c.b16 %v3876, %v3868
    %v4861 = vpack.c.b16 %v3877, %v3869
    %v4862 = vpack.c.b16 %v3878, %v3870
    %v4863 = vpack.c.b16 %v3879, %v3871
    %v4864 = vpack.c.b16 %v3880, %v3872
    %v4865 = vpack.c.b16 %v3889, %v3881
    %v4866 = vpack.c.b16 %v3890, %v3882
    %v4867 = vpack.c.b16 %v3891, %v3883
    %v4868 = vpack.c.b16 %v3892, %v3884
    %v4869 = vpack.c.b16 %v3893, %v3885
    %v4870 = vpack.c.b16 %v3894, %v3886
    %v4871 = vpack.c.b16 %v3895, %v3887
    %v4872 = vpack.c.b16 %v3896, %v3888
    %v4873 = vpack.c.b16 %v3905, %v3897
    %v4874 = vpack.c.b16 %v3906, %v3898
    %v4875 = vpack.c.b16 %v3907, %v3899
    %v4876 = vpack.c.b16 %v3908, %v3900
    %v4877 = vpack.c.b16 %v3909, %v3901
    %v4878 = vpack.c.b16 %v3910, %v3902
    %v4879 = vpack.c.b16 %v3911, %v3903
    %v4880 = vpack.c.b16 %v3912, %v3904
    %v4881 = vpack.c.b16 %v3921, %v3913
    %v4882 = vpack.c.b16 %v3922, %v3914
    %v4883 = vpack.c.b16 %v3923, %v3915
    %v4884 = vpack.c.b16 %v3924, %v3916
    %v4885 = vpack.c.b16 %v3925, %v3917
    %v4886 = vpack.c.b16 %v3926, %v3918
    %v4887 = vpack.c.b16 %v3927, %v3919
    %v4888 = vpack.c.b16 %v3928, %v3920
    %v4889 = vpack.c.b16 %v3937, %v3929
    %v4890 = vpack.c.b16 %v3938, %v3930
    %v4891 = vpack.c.b16 %v3939, %v3931
    %v4892 = vpack.c.b16 %v3940, %v3932
    %v4893 = vpack.c.b16 %v3941, %v3933
    %v4894 = vpack.c.b16 %v3942, %v3934
    %v4895 = vpack.c.b16 %v3943, %v3935
    %v4896 = vpack.c.b16 %v3944, %v3936
    %v4897 = vpack.c.b16 %v3953, %v3945
    %v4898 = vpack.c.b16 %v3954, %v3946
    %v4899 = vpack.c.b16 %v3955, %v3947
    %v4900 = vpack.c.b16 %v3956, %v3948
    %v4901 = vpack.c.b16 %v3957, %v3949
    %v4902 = vpack.c.b16 %v3958, %v3950
    %v4903 = vpack.c.b16 %v3959, %v3951
    %v4904 = vpack.c.b16 %v3960, %v3952
    %v4905 = vpack.c.b16 %v3969, %v3961
    %v4906 = vpack.c.b16 %v3970, %v3962
    %v4907 = vpack.c.b16 %v3971, %v3963
    %v4908 = vpack.c.b16 %v3972, %v3964
    %v4909 = vpack.c.b16 %v3973, %v3965
    %v4910 = vpack.c.b16 %v3974, %v3966
    %v4911 = vpack.c.b16 %v3975, %v3967
    %v4912 = vpack.c.b16 %v3976, %v3968
    %v4913 = vpack.c.b16 %v3985, %v3977
    %v4914 = vpack.c.b16 %v3986, %v3978
    %v4915 = vpack.c.b16 %v3987, %v3979
    %v4916 = vpack.c.b16 %v3988, %v3980
    %v4917 = vpack.c.b16 %v3989, %v3981
    %v4918 = vpack.c.b16 %v3990, %v3982
    %v4919 = vpack.c.b16 %v3991, %v3983
    %v4920 = vpack.c.b16 %v3992, %v3984
    %v4921 = vpack.c.b16 %v4001, %v3993
    %v4922 = vpack.c.b16 %v4002, %v3994
    %v4923 = vpack.c.b16 %v4003, %v3995
    %v4924 = vpack.c.b16 %v4004, %v3996
    %v4925 = vpack.c.b16 %v4005, %v3997
    %v4926 = vpack.c.b16 %v4006, %v3998
    %v4927 = vpack.c.b16 %v4007, %v3999
    %v4928 = vpack.c.b16 %v4008, %v4000
    %v4929 = vpack.c.b16 %v4017, %v4009
    %v4930 = vpack.c.b16 %v4018, %v4010
    %v4931 = vpack.c.b16 %v4019, %v4011
    %v4932 = vpack.c.b16 %v4020, %v4012
    %v4933 = vpack.c.b16 %v4021, %v4013
    %v4934 = vpack.c.b16 %v4022, %v4014
    %v4935 = vpack.c.b16 %v4023, %v4015
    %v4936 = vpack.c.b16 %v4024, %v4016
    %v4937 = vpack.c.b16 %v4033, %v4025
    %v4938 = vpack.c.b16 %v4034, %v4026
    %v4939 = vpack.c.b16 %v4035, %v4027
    %v4940 = vpack.c.b16 %v4036, %v4028
    %v4941 = vpack.c.b16 %v4037, %v4029
    %v4942 = vpack.c.b16 %v4038, %v4030
    %v4943 = vpack.c.b16 %v4039, %v4031
    %v4944 = vpack.c.b16 %v4040, %v4032
    %v4945 = vpack.c.b16 %v4049, %v4041
    %v4946 = vpack.c.b16 %v4050, %v4042
    %v4947 = vpack.c.b16 %v4051, %v4043
    %v4948 = vpack.c.b16 %v4052, %v4044
    %v4949 = vpack.c.b16 %v4053, %v4045
    %v4950 = vpack.c.b16 %v4054, %v4046
    %v4951 = vpack.c.b16 %v4055, %v4047
    %v4952 = vpack.c.b16 %v4056, %v4048
    %v4953 = vpack.c.b16 %v4065, %v4057
    %v4954 = vpack.c.b16 %v4066, %v4058
    %v4955 = vpack.c.b16 %v4067, %v4059
    %v4956 = vpack.c.b16 %v4068, %v4060
    %v4957 = vpack.c.b16 %v4069, %v4061
    %v4958 = vpack.c.b16 %v4070, %v4062
    %v4959 = vpack.c.b16 %v4071, %v4063
    %v4960 = vpack.c.b16 %v4072, %v4064
    %v4961 = vpack.c.b16 %v4081, %v4073
    %v4962 = vpack.c.b16 %v4082, %v4074
    %v4963 = vpack.c.b16 %v4083, %v4075
    %v4964 = vpack.c.b16 %v4084, %v4076
    %v4965 = vpack.c.b16 %v4085, %v4077
    %v4966 = vpack.c.b16 %v4086, %v4078
    %v4967 = vpack.c.b16 %v4087, %v4079
    %v4968 = vpack.c.b16 %v4088, %v4080
    %v4969 = vpack.c.b16 %v4097, %v4089
    %v4970 = vpack.c.b16 %v4098, %v4090
    %v4971 = vpack.c.b16 %v4099, %v4091
    %v4972 = vpack.c.b16 %v4100, %v4092
    %v4973 = vpack.c.b16 %v4101, %v4093
    %v4974 = vpack.c.b16 %v4102, %v4094
    %v4975 = vpack.c.b16 %v4103, %v4095
    %v4976 = vpack.c.b16 %v4104, %v4096
    %v4977 = vpack.c.b16 %v4113, %v4105
    %v4978 = vpack.c.b16 %v4114, %v4106
    %v4979 = vpack.c.b16 %v4115, %v4107
    %v4980 = vpack.c.b16 %v4116, %v4108
    %v4981 = vpack.c.b16 %v4117, %v4109
    %v4982 = vpack.c.b16 %v4118, %v4110
    %v4983 = vpack.c.b16 %v4119, %v4111
    %v4984 = vpack.c.b16 %v4120, %v4112
    %v4985 = vpack.c.b16 %v4129, %v4121
    %v4986 = vpack.c.b16 %v4130, %v4122
    %v4987 = vpack.c.b16 %v4131, %v4123
    %v4988 = vpack.c.b16 %v4132, %v4124
    %v4989 = vpack.c.b16 %v4133, %v4125
    %v4990 = vpack.c.b16 %v4134, %v4126
    %v4991 = vpack.c.b16 %v4135, %v4127
    %v4992 = vpack.c.b16 %v4136, %v4128
    %v4993 = vpack.c.b16 %v4145, %v4137
    %v4994 = vpack.c.b16 %v4146, %v4138
    %v4995 = vpack.c.b16 %v4147, %v4139
    %v4996 = vpack.c.b16 %v4148, %v4140
    %v4997 = vpack.c.b16 %v4149, %v4141
    %v4998 = vpack.c.b16 %v4150, %v4142
    %v4999 = vpack.c.b16 %v4151, %v4143
    %v5000 = vpack.c.b16 %v4152, %v4144
    %v5001 = vpack.c.b16 %v4161, %v4153
    %v5002 = vpack.c.b16 %v4162, %v4154
    %v5003 = vpack.c.b16 %v4163, %v4155
    %v5004 = vpack.c.b16 %v4164, %v4156
    %v5005 = vpack.c.b16 %v4165, %v4157
    %v5006 = vpack.c.b16 %v4166, %v4158
    %v5007 = vpack.c.b16 %v4167, %v4159
    %v5008 = vpack.c.b16 %v4168, %v4160
    %v5009 = vpack.c.b16 %v4177, %v4169
    %v5010 = vpack.c.b16 %v4178, %v4170
    %v5011 = vpack.c.b16 %v4179, %v4171
    %v5012 = vpack.c.b16 %v4180, %v4172
    %v5013 = vpack.c.b16 %v4181, %v4173
    %v5014 = vpack.c.b16 %v4182, %v4174
    %v5015 = vpack.c.b16 %v4183, %v4175
    %v5016 = vpack.c.b16 %v4184, %v4176
    %v5017 = vpack.c.b16 %v4193, %v4185
    %v5018 = vpack.c.b16 %v4194, %v4186
    %v5019 = vpack.c.b16 %v4195, %v4187
    %v5020 = vpack.c.b16 %v4196, %v4188
    %v5021 = vpack.c.b16 %v4197, %v4189
    %v5022 = vpack.c.b16 %v4198, %v4190
    %v5023 = vpack.c.b16 %v4199, %v4191
    %v5024 = vpack.c.b16 %v4200, %v4192
    %v5025 = vpack.c.b16 %v4209, %v4201
    %v5026 = vpack.c.b16 %v4210, %v4202
    %v5027 = vpack.c.b16 %v4211, %v4203
    %v5028 = vpack.c.b16 %v4212, %v4204
    %v5029 = vpack.c.b16 %v4213, %v4205
    %v5030 = vpack.c.b16 %v4214, %v4206
    %v5031 = vpack.c.b16 %v4215, %v4207
    %v5032 = vpack.c.b16 %v4216, %v4208
    %v5033 = vpack.c.b16 %v4225, %v4217
    %v5034 = vpack.c.b16 %v4226, %v4218
    %v5035 = vpack.c.b16 %v4227, %v4219
    %v5036 = vpack.c.b16 %v4228, %v4220
    %v5037 = vpack.c.b16 %v4229, %v4221
    %v5038 = vpack.c.b16 %v4230, %v4222
    %v5039 = vpack.c.b16 %v4231, %v4223
    %v5040 = vpack.c.b16 %v4232, %v4224
    %v5041 = vpack.c.b16 %v4241, %v4233
    %v5042 = vpack.c.b16 %v4242, %v4234
    %v5043 = vpack.c.b16 %v4243, %v4235
    %v5044 = vpack.c.b16 %v4244, %v4236
    %v5045 = vpack.c.b16 %v4245, %v4237
    %v5046 = vpack.c.b16 %v4246, %v4238
    %v5047 = vpack.c.b16 %v4247, %v4239
    %v5048 = vpack.c.b16 %v4248, %v4240
    %v5049 = vpack.c.b16 %v4257, %v4249
    %v5050 = vpack.c.b16 %v4258, %v4250
    %v5051 = vpack.c.b16 %v4259, %v4251
    %v5052 = vpack.c.b16 %v4260, %v4252
    %v5053 = vpack.c.b16 %v4261, %v4253
    %v5054 = vpack.c.b16 %v4262, %v4254
    %v5055 = vpack.c.b16 %v4263, %v4255
    %v5056 = vpack.c.b16 %v4264, %v4256
    %v5057 = vpack.c.b16 %v4273, %v4265
    %v5058 = vpack.c.b16 %v4274, %v4266
    %v5059 = vpack.c.b16 %v4275, %v4267
    %v5060 = vpack.c.b16 %v4276, %v4268
    %v5061 = vpack.c.b16 %v4277, %v4269
    %v5062 = vpack.c.b16 %v4278, %v4270
    %v5063 = vpack.c.b16 %v4279, %v4271
    %v5064 = vpack.c.b16 %v4280, %v4272
    %v5065 = vpack.c.b16 %v4289, %v4281
    %v5066 = vpack.c.b16 %v4290, %v4282
    %v5067 = vpack.c.b16 %v4291, %v4283
    %v5068 = vpack.c.b16 %v4292, %v4284
    %v5069 = vpack.c.b16 %v4293, %v4285
    %v5070 = vpack.c.b16 %v4294, %v4286
    %v5071 = vpack.c.b16 %v4295, %v4287
    %v5072 = vpack.c.b16 %v4296, %v4288
    %v5073 = vpack.c.b16 %v4305, %v4297
    %v5074 = vpack.c.b16 %v4306, %v4298
    %v5075 = vpack.c.b16 %v4307, %v4299
    %v5076 = vpack.c.b16 %v4308, %v4300
    %v5077 = vpack.c.b16 %v4309, %v4301
    %v5078 = vpack.c.b16 %v4310, %v4302
    %v5079 = vpack.c.b16 %v4311, %v4303
    %v5080 = vpack.c.b16 %v4312, %v4304
    %v5081 = vpack.c.b16 %v4321, %v4313
    %v5082 = vpack.c.b16 %v4322, %v4314
    %v5083 = vpack.c.b16 %v4323, %v4315
    %v5084 = vpack.c.b16 %v4324, %v4316
    %v5085 = vpack.c.b16 %v4325, %v4317
    %v5086 = vpack.c.b16 %v4326, %v4318
    %v5087 = vpack.c.b16 %v4327, %v4319
    %v5088 = vpack.c.b16 %v4328, %v4320
    %v5089 = vpack.c.b16 %v4337, %v4329
    %v5090 = vpack.c.b16 %v4338, %v4330
    %v5091 = vpack.c.b16 %v4339, %v4331
    %v5092 = vpack.c.b16 %v4340, %v4332
    %v5093 = vpack.c.b16 %v4341, %v4333
    %v5094 = vpack.c.b16 %v4342, %v4334
    %v5095 = vpack.c.b16 %v4343, %v4335
    %v5096 = vpack.c.b16 %v4344, %v4336
    %v5097 = vpack.c.b16 %v4353, %v4345
    %v5098 = vpack.c.b16 %v4354, %v4346
    %v5099 = vpack.c.b16 %v4355, %v4347
    %v5100 = vpack.c.b16 %v4356, %v4348
    %v5101 = vpack.c.b16 %v4357, %v4349
    %v5102 = vpack.c.b16 %v4358, %v4350
    %v5103 = vpack.c.b16 %v4359, %v4351
    %v5104 = vpack.c.b16 %v4360, %v4352
    %v5105 = vpack.c.b16 %v4369, %v4361
    %v5106 = vpack.c.b16 %v4370, %v4362
    %v5107 = vpack.c.b16 %v4371, %v4363
    %v5108 = vpack.c.b16 %v4372, %v4364
    %v5109 = vpack.c.b16 %v4373, %v4365
    %v5110 = vpack.c.b16 %v4374, %v4366
    %v5111 = vpack.c.b16 %v4375, %v4367
    %v5112 = vpack.c.b16 %v4376, %v4368
    %v5113 = vpack.c.b16 %v4385, %v4377
    %v5114 = vpack.c.b16 %v4386, %v4378
    %v5115 = vpack.c.b16 %v4387, %v4379
    %v5116 = vpack.c.b16 %v4388, %v4380
    %v5117 = vpack.c.b16 %v4389, %v4381
    %v5118 = vpack.c.b16 %v4390, %v4382
    %v5119 = vpack.c.b16 %v4391, %v4383
    %v5120 = vpack.c.b16 %v4392, %v4384
    %v5121 = vpack.c.b16 %v4401, %v4393
    %v5122 = vpack.c.b16 %v4402, %v4394
    %v5123 = vpack.c.b16 %v4403, %v4395
    %v5124 = vpack.c.b16 %v4404, %v4396
    %v5125 = vpack.c.b16 %v4405, %v4397
    %v5126 = vpack.c.b16 %v4406, %v4398
    %v5127 = vpack.c.b16 %v4407, %v4399
    %v5128 = vpack.c.b16 %v4408, %v4400
    %v5129 = vpack.c.b16 %v4417, %v4409
    %v5130 = vpack.c.b16 %v4418, %v4410
    %v5131 = vpack.c.b16 %v4419, %v4411
    %v5132 = vpack.c.b16 %v4420, %v4412
    %v5133 = vpack.c.b16 %v4421, %v4413
    %v5134 = vpack.c.b16 %v4422, %v4414
    %v5135 = vpack.c.b16 %v4423, %v4415
    %v5136 = vpack.c.b16 %v4424, %v4416
    %v5137 = vpack.c.b16 %v4433, %v4425
    %v5138 = vpack.c.b16 %v4434, %v4426
    %v5139 = vpack.c.b16 %v4435, %v4427
    %v5140 = vpack.c.b16 %v4436, %v4428
    %v5141 = vpack.c.b16 %v4437, %v4429
    %v5142 = vpack.c.b16 %v4438, %v4430
    %v5143 = vpack.c.b16 %v4439, %v4431
    %v5144 = vpack.c.b16 %v4440, %v4432
    %v5145 = vpack.c.b16 %v4449, %v4441
    %v5146 = vpack.c.b16 %v4450, %v4442
    %v5147 = vpack.c.b16 %v4451, %v4443
    %v5148 = vpack.c.b16 %v4452, %v4444
    %v5149 = vpack.c.b16 %v4453, %v4445
    %v5150 = vpack.c.b16 %v4454, %v4446
    %v5151 = vpack.c.b16 %v4455, %v4447
    %v5152 = vpack.c.b16 %v4456, %v4448
    %v5153 = vpack.c.b16 %v4465, %v4457
    %v5154 = vpack.c.b16 %v4466, %v4458
    %v5155 = vpack.c.b16 %v4467, %v4459
    %v5156 = vpack.c.b16 %v4468, %v4460
    %v5157 = vpack.c.b16 %v4469, %v4461
    %v5158 = vpack.c.b16 %v4470, %v4462
    %v5159 = vpack.c.b16 %v4471, %v4463
    %v5160 = vpack.c.b16 %v4472, %v4464
    %v5161 = vpack.c.b16 %v4481, %v4473
    %v5162 = vpack.c.b16 %v4482, %v4474
    %v5163 = vpack.c.b16 %v4483, %v4475
    %v5164 = vpack.c.b16 %v4484, %v4476
    %v5165 = vpack.c.b16 %v4485, %v4477
    %v5166 = vpack.c.b16 %v4486, %v4478
    %v5167 = vpack.c.b16 %v4487, %v4479
    %v5168 = vpack.c.b16 %v4488, %v4480
    %v5169 = vpack.c.b16 %v4497, %v4489
    %v5170 = vpack.c.b16 %v4498, %v4490
    %v5171 = vpack.c.b16 %v4499, %v4491
    %v5172 = vpack.c.b16 %v4500, %v4492
    %v5173 = vpack.c.b16 %v4501, %v4493
    %v5174 = vpack.c.b16 %v4502, %v4494
    %v5175 = vpack.c.b16 %v4503, %v4495
    %v5176 = vpack.c.b16 %v4504, %v4496
    %v5177 = vpack.c.b16 %v4513, %v4505
    %v5178 = vpack.c.b16 %v4514, %v4506
    %v5179 = vpack.c.b16 %v4515, %v4507
    %v5180 = vpack.c.b16 %v4516, %v4508
    %v5181 = vpack.c.b16 %v4517, %v4509
    %v5182 = vpack.c.b16 %v4518, %v4510
    %v5183 = vpack.c.b16 %v4519, %v4511
    %v5184 = vpack.c.b16 %v4520, %v4512
    %v5185 = vpack.c.b16 %v4529, %v4521
    %v5186 = vpack.c.b16 %v4530, %v4522
    %v5187 = vpack.c.b16 %v4531, %v4523
    %v5188 = vpack.c.b16 %v4532, %v4524
    %v5189 = vpack.c.b16 %v4533, %v4525
    %v5190 = vpack.c.b16 %v4534, %v4526
    %v5191 = vpack.c.b16 %v4535, %v4527
    %v5192 = vpack.c.b16 %v4536, %v4528
    %v5193 = vpack.c.b16 %v4545, %v4537
    %v5194 = vpack.c.b16 %v4546, %v4538
    %v5195 = vpack.c.b16 %v4547, %v4539
    %v5196 = vpack.c.b16 %v4548, %v4540
    %v5197 = vpack.c.b16 %v4549, %v4541
    %v5198 = vpack.c.b16 %v4550, %v4542
    %v5199 = vpack.c.b16 %v4551, %v4543
    %v5200 = vpack.c.b16 %v4552, %v4544
    %v5201 = vpack.c.b16 %v4561, %v4553
    %v5202 = vpack.c.b16 %v4562, %v4554
    %v5203 = vpack.c.b16 %v4563, %v4555
    %v5204 = vpack.c.b16 %v4564, %v4556
    %v5205 = vpack.c.b16 %v4565, %v4557
    %v5206 = vpack.c.b16 %v4566, %v4558
    %v5207 = vpack.c.b16 %v4567, %v4559
    %v5208 = vpack.c.b16 %v4568, %v4560
    %v5209 = vpack.c.b16 %v4577, %v4569
    %v5210 = vpack.c.b16 %v4578, %v4570
    %v5211 = vpack.c.b16 %v4579, %v4571
    %v5212 = vpack.c.b16 %v4580, %v4572
    %v5213 = vpack.c.b16 %v4581, %v4573
    %v5214 = vpack.c.b16 %v4582, %v4574
    %v5215 = vpack.c.b16 %v4583, %v4575
    %v5216 = vpack.c.b16 %v4584, %v4576
    %v5217 = vpack.c.b16 %v4593, %v4585
    %v5218 = vpack.c.b16 %v4594, %v4586
    %v5219 = vpack.c.b16 %v4595, %v4587
    %v5220 = vpack.c.b16 %v4596, %v4588
    %v5221 = vpack.c.b16 %v4597, %v4589
    %v5222 = vpack.c.b16 %v4598, %v4590
    %v5223 = vpack.c.b16 %v4599, %v4591
    %v5224 = vpack.c.b16 %v4600, %v4592
    %v5225 = vpack.c.b16 %v4609, %v4601
    %v5226 = vpack.c.b16 %v4610, %v4602
    %v5227 = vpack.c.b16 %v4611, %v4603
    %v5228 = vpack.c.b16 %v4612, %v4604
    %v5229 = vpack.c.b16 %v4613, %v4605
    %v5230 = vpack.c.b16 %v4614, %v4606
    %v5231 = vpack.c.b16 %v4615, %v4607
    %v5232 = vpack.c.b16 %v4616, %v4608
    %v5233 = vpack.c.b16 %v4625, %v4617
    %v5234 = vpack.c.b16 %v4626, %v4618
    %v5235 = vpack.c.b16 %v4627, %v4619
    %v5236 = vpack.c.b16 %v4628, %v4620
    %v5237 = vpack.c.b16 %v4629, %v4621
    %v5238 = vpack.c.b16 %v4630, %v4622
    %v5239 = vpack.c.b16 %v4631, %v4623
    %v5240 = vpack.c.b16 %v4632, %v4624
    %v5241 = vpack.c.b16 %v4641, %v4633
    %v5242 = vpack.c.b16 %v4642, %v4634
    %v5243 = vpack.c.b16 %v4643, %v4635
    %v5244 = vpack.c.b16 %v4644, %v4636
    %v5245 = vpack.c.b16 %v4645, %v4637
    %v5246 = vpack.c.b16 %v4646, %v4638
    %v5247 = vpack.c.b16 %v4647, %v4639
    %v5248 = vpack.c.b16 %v4648, %v4640
    %v5249 = vpack.c.b16 %v4657, %v4649
    %v5250 = vpack.c.b16 %v4658, %v4650
    %v5251 = vpack.c.b16 %v4659, %v4651
    %v5252 = vpack.c.b16 %v4660, %v4652
    %v5253 = vpack.c.b16 %v4661, %v4653
    %v5254 = vpack.c.b16 %v4662, %v4654
    %v5255 = vpack.c.b16 %v4663, %v4655
    %v5256 = vpack.c.b16 %v4664, %v4656
    %v5257 = vpack.c.b16 %v4673, %v4665
    %v5258 = vpack.c.b16 %v4674, %v4666
    %v5259 = vpack.c.b16 %v4675, %v4667
    %v5260 = vpack.c.b16 %v4676, %v4668
    %v5261 = vpack.c.b16 %v4677, %v4669
    %v5262 = vpack.c.b16 %v4678, %v4670
    %v5263 = vpack.c.b16 %v4679, %v4671
    %v5264 = vpack.c.b16 %v4680, %v4672
    %v5265 = vpack.c.b16 %v4689, %v4681
    %v5266 = vpack.c.b16 %v4690, %v4682
    %v5267 = vpack.c.b16 %v4691, %v4683
    %v5268 = vpack.c.b16 %v4692, %v4684
    %v5269 = vpack.c.b16 %v4693, %v4685
    %v5270 = vpack.c.b16 %v4694, %v4686
    %v5271 = vpack.c.b16 %v4695, %v4687
    %v5272 = vpack.c.b16 %v4696, %v4688
    %v5273 = vpack.c.b16 %v4705, %v4697
    %v5274 = vpack.c.b16 %v4706, %v4698
    %v5275 = vpack.c.b16 %v4707, %v4699
    %v5276 = vpack.c.b16 %v4708, %v4700
    %v5277 = vpack.c.b16 %v4709, %v4701
    %v5278 = vpack.c.b16 %v4710, %v4702
    %v5279 = vpack.c.b16 %v4711, %v4703
    %v5280 = vpack.c.b16 %v4712, %v4704
    %v5281 = vpack.c.b16 %v4721, %v4713
    %v5282 = vpack.c.b16 %v4722, %v4714
    %v5283 = vpack.c.b16 %v4723, %v4715
    %v5284 = vpack.c.b16 %v4724, %v4716
    %v5285 = vpack.c.b16 %v4725, %v4717
    %v5286 = vpack.c.b16 %v4726, %v4718
    %v5287 = vpack.c.b16 %v4727, %v4719
    %v5288 = vpack.c.b16 %v4728, %v4720
    %v5289 = vpack.c.b16 %v4737, %v4729
    %v5290 = vpack.c.b16 %v4738, %v4730
    %v5291 = vpack.c.b16 %v4739, %v4731
    %v5292 = vpack.c.b16 %v4740, %v4732
    %v5293 = vpack.c.b16 %v4741, %v4733
    %v5294 = vpack.c.b16 %v4742, %v4734
    %v5295 = vpack.c.b16 %v4743, %v4735
    %v5296 = vpack.c.b16 %v4744, %v4736
    %v5297 = vpack.c.b16 %v4753, %v4745
    %v5298 = vpack.c.b16 %v4754, %v4746
    %v5299 = vpack.c.b16 %v4755, %v4747
    %v5300 = vpack.c.b16 %v4756, %v4748
    %v5301 = vpack.c.b16 %v4757, %v4749
    %v5302 = vpack.c.b16 %v4758, %v4750
    %v5303 = vpack.c.b16 %v4759, %v4751
    %v5304 = vpack.c.b16 %v4760, %v4752
    %v5305 = vpack.c.b16 %v4769, %v4761
    %v5306 = vpack.c.b16 %v4770, %v4762
    %v5307 = vpack.c.b16 %v4771, %v4763
    %v5308 = vpack.c.b16 %v4772, %v4764
    %v5309 = vpack.c.b16 %v4773, %v4765
    %v5310 = vpack.c.b16 %v4774, %v4766
    %v5311 = vpack.c.b16 %v4775, %v4767
    %v5312 = vpack.c.b16 %v4776, %v4768
    %v5313 = vpack.c.b16 %v4785, %v4777
    %v5314 = vpack.c.b16 %v4786, %v4778
    %v5315 = vpack.c.b16 %v4787, %v4779
    %v5316 = vpack.c.b16 %v4788, %v4780
    %v5317 = vpack.c.b16 %v4789, %v4781
    %v5318 = vpack.c.b16 %v4790, %v4782
    %v5319 = vpack.c.b16 %v4791, %v4783
    %v5320 = vpack.c.b16 %v4792, %v4784
    %v5321 = vpack.c.b16 %v4801, %v4793
    %v5322 = vpack.c.b16 %v4802, %v4794
    %v5323 = vpack.c.b16 %v4803, %v4795
    %v5324 = vpack.c.b16 %v4804, %v4796
    %v5325 = vpack.c.b16 %v4805, %v4797
    %v5326 = vpack.c.b16 %v4806, %v4798
    %v5327 = vpack.c.b16 %v4807, %v4799
    %v5328 = vpack.c.b16 %v4808, %v4800
    %v5329 = vpack.c.b16 %v4817, %v4809
    %v5330 = vpack.c.b16 %v4818, %v4810
    %v5331 = vpack.c.b16 %v4819, %v4811
    %v5332 = vpack.c.b16 %v4820, %v4812
    %v5333 = vpack.c.b16 %v4821, %v4813
    %v5334 = vpack.c.b16 %v4822, %v4814
    %v5335 = vpack.c.b16 %v4823, %v4815
    %v5336 = vpack.c.b16 %v4824, %v4816
    %5849 = vmatprep.subr.bf16.mxu0 %v4826
    %5850 = vmatpush1.bf16.msra.mxu0 %v4825
    %5851 = vmatprep.subr.bf16.mxu0 %v4834
    %5852 = vmatpush1.bf16.msra.mxu0 %v4833
    %5853 = vmatprep.subr.bf16.mxu0 %v4842
    %5854 = vmatpush1.bf16.msra.mxu0 %v4841
    %5855 = vmatprep.subr.bf16.mxu0 %v4850
    %5856 = vmatpush1.bf16.msra.mxu0 %v4849
    %5857 = vmatprep.subr.bf16.mxu0 %v4858
    %5858 = vmatpush1.bf16.msra.mxu0 %v4857
    %5859 = vmatprep.subr.bf16.mxu0 %v4866
    %5860 = vmatpush1.bf16.msra.mxu0 %v4865
    %5861 = vmatprep.subr.bf16.mxu0 %v4874
    %5862 = vmatpush1.bf16.msra.mxu0 %v4873
    %5863 = vmatprep.subr.bf16.mxu0 %v4882
    %5864 = vmatpush1.bf16.msra.mxu0 %v4881
    %5865 = vmatprep.subr.bf16.mxu0 %v4890
    %5866 = vmatpush1.bf16.msra.mxu0 %v4889
    %5867 = vmatprep.subr.bf16.mxu0 %v4898
    %5868 = vmatpush1.bf16.msra.mxu0 %v4897
    %5869 = vmatprep.subr.bf16.mxu0 %v4906
    %5870 = vmatpush1.bf16.msra.mxu0 %v4905
    %5871 = vmatprep.subr.bf16.mxu0 %v4914
    %5872 = vmatpush1.bf16.msra.mxu0 %v4913
    %5873 = vmatprep.subr.bf16.mxu0 %v4922
    %5874 = vmatpush1.bf16.msra.mxu0 %v4921
    %5875 = vmatprep.subr.bf16.mxu0 %v4930
    %5876 = vmatpush1.bf16.msra.mxu0 %v4929
    %5877 = vmatprep.subr.bf16.mxu0 %v4938
    %5878 = vmatpush1.bf16.msra.mxu0 %v4937
    %5879 = vmatprep.subr.bf16.mxu0 %v4946
    %5880 = vmatpush1.bf16.msra.mxu0 %v4945
    %5881 = vmatprep.mubr.bf16.mxu0 %v2728
    %5882 = vmatmul.mubr.bf16.gmra.mrb[0].mxu0 %v2727
    %v5883 = vpop.f32.mrb[0].mxu0
    %v5884 = vadd.f32 %v3252, %v5883
    %v5885 = vpop.f32.mrb[0].mxu0
    %v5886 = vadd.f32 %v3256, %v5885
    %v5887 = vpop.f32.mrb[0].mxu0
    %v5888 = vpop.f32.mrb[0].mxu0
    %5889 = vdwg.mxu0
    %5890 = vmatprep.subr.bf16.mxu0 %v4954
    %5891 = vmatpush1.bf16.msra.mxu0 %v4953
    %5892 = vmatprep.subr.bf16.mxu0 %v4962
    %5893 = vmatpush1.bf16.msra.mxu0 %v4961
    %5894 = vmatprep.subr.bf16.mxu0 %v4970
    %5895 = vmatpush1.bf16.msra.mxu0 %v4969
    %5896 = vmatprep.subr.bf16.mxu0 %v4978
    %5897 = vmatpush1.bf16.msra.mxu0 %v4977
    %5898 = vmatprep.subr.bf16.mxu0 %v4986
    %5899 = vmatpush1.bf16.msra.mxu0 %v4985
    %5900 = vmatprep.subr.bf16.mxu0 %v4994
    %5901 = vmatpush1.bf16.msra.mxu0 %v4993
    %5902 = vmatprep.subr.bf16.mxu0 %v5002
    %5903 = vmatpush1.bf16.msra.mxu0 %v5001
    %5904 = vmatprep.subr.bf16.mxu0 %v5010
    %5905 = vmatpush1.bf16.msra.mxu0 %v5009
    %5906 = vmatprep.subr.bf16.mxu0 %v5018
    %5907 = vmatpush1.bf16.msra.mxu0 %v5017
    %5908 = vmatprep.subr.bf16.mxu0 %v5026
    %5909 = vmatpush1.bf16.msra.mxu0 %v5025
    %5910 = vmatprep.subr.bf16.mxu0 %v5034
    %5911 = vmatpush1.bf16.msra.mxu0 %v5033
    %5912 = vmatprep.subr.bf16.mxu0 %v5042
    %5913 = vmatpush1.bf16.msra.mxu0 %v5041
    %5914 = vmatprep.subr.bf16.mxu0 %v5050
    %5915 = vmatpush1.bf16.msra.mxu0 %v5049
    %5916 = vmatprep.subr.bf16.mxu0 %v5058
    %5917 = vmatpush1.bf16.msra.mxu0 %v5057
    %5918 = vmatprep.subr.bf16.mxu0 %v5066
    %5919 = vmatpush1.bf16.msra.mxu0 %v5065
    %5920 = vmatprep.subr.bf16.mxu0 %v5074
    %5921 = vmatpush1.bf16.msra.mxu0 %v5073
    %5922 = vmatprep.mubr.bf16.mxu0 %v2730
    %5923 = vmatmul.mubr.bf16.gmra.mrb[0].mxu0 %v2729
    %v5924 = vpop.f32.mrb[0].mxu0
    %v5925 = vadd.f32 %v5884, %v5924
    %v5926 = vpop.f32.mrb[0].mxu0
    %v5927 = vadd.f32 %v5886, %v5926
    %v5928 = vpop.f32.mrb[0].mxu0
    %v5929 = vpop.f32.mrb[0].mxu0
    %5930 = vdwg.mxu0
    %5931 = vmatprep.subr.bf16.mxu0 %v5082
    %5932 = vmatpush1.bf16.msra.mxu0 %v5081
    %5933 = vmatprep.subr.bf16.mxu0 %v5090
    %5934 = vmatpush1.bf16.msra.mxu0 %v5089
    %5935 = vmatprep.subr.bf16.mxu0 %v5098
    %5936 = vmatpush1.bf16.msra.mxu0 %v5097
    %5937 = vmatprep.subr.bf16.mxu0 %v5106
    %5938 = vmatpush1.bf16.msra.mxu0 %v5105
    %5939 = vmatprep.subr.bf16.mxu0 %v5114
    %5940 = vmatpush1.bf16.msra.mxu0 %v5113
    %5941 = vmatprep.subr.bf16.mxu0 %v5122
    %5942 = vmatpush1.bf16.msra.mxu0 %v5121
    %5943 = vmatprep.subr.bf16.mxu0 %v5130
    %5944 = vmatpush1.bf16.msra.mxu0 %v5129
    %5945 = vmatprep.subr.bf16.mxu0 %v5138
    %5946 = vmatpush1.bf16.msra.mxu0 %v5137
    %5947 = vmatprep.subr.bf16.mxu0 %v5146
    %5948 = vmatpush1.bf16.msra.mxu0 %v5145
    %5949 = vmatprep.subr.bf16.mxu0 %v5154
    %5950 = vmatpush1.bf16.msra.mxu0 %v5153
    %5951 = vmatprep.subr.bf16.mxu0 %v5162
    %5952 = vmatpush1.bf16.msra.mxu0 %v5161
    %5953 = vmatprep.subr.bf16.mxu0 %v5170
    %5954 = vmatpush1.bf16.msra.mxu0 %v5169
    %5955 = vmatprep.subr.bf16.mxu0 %v5178
    %5956 = vmatpush1.bf16.msra.mxu0 %v5177
    %5957 = vmatprep.subr.bf16.mxu0 %v5186
    %5958 = vmatpush1.bf16.msra.mxu0 %v5185
    %5959 = vmatprep.subr.bf16.mxu0 %v5194
    %5960 = vmatpush1.bf16.msra.mxu0 %v5193
    %5961 = vmatprep.subr.bf16.mxu0 %v5202
    %5962 = vmatpush1.bf16.msra.mxu0 %v5201
    %5963 = vmatprep.mubr.bf16.mxu0 %v2732
    %5964 = vmatmul.mubr.bf16.gmra.mrb[0].mxu0 %v2731
    %v5965 = vpop.f32.mrb[0].mxu0
    %v5966 = vadd.f32 %v5925, %v5965
    %v5967 = vpop.f32.mrb[0].mxu0
    %v5968 = vadd.f32 %v5927, %v5967
    %v5969 = vpop.f32.mrb[0].mxu0
    %v5970 = vpop.f32.mrb[0].mxu0
    %5971 = vdwg.mxu0
    %5972 = vmatprep.subr.bf16.mxu0 %v5210
    %5973 = vmatpush1.bf16.msra.mxu0 %v5209
    %5974 = vmatprep.subr.bf16.mxu0 %v5218
    %5975 = vmatpush1.bf16.msra.mxu0 %v5217
    %5976 = vmatprep.subr.bf16.mxu0 %v5226
    %5977 = vmatpush1.bf16.msra.mxu0 %v5225
    %5978 = vmatprep.subr.bf16.mxu0 %v5234
    %5979 = vmatpush1.bf16.msra.mxu0 %v5233
    %5980 = vmatprep.subr.bf16.mxu0 %v5242
    %5981 = vmatpush1.bf16.msra.mxu0 %v5241
    %5982 = vmatprep.subr.bf16.mxu0 %v5250
    %5983 = vmatpush1.bf16.msra.mxu0 %v5249
    %5984 = vmatprep.subr.bf16.mxu0 %v5258
    %5985 = vmatpush1.bf16.msra.mxu0 %v5257
    %5986 = vmatprep.subr.bf16.mxu0 %v5266
    %5987 = vmatpush1.bf16.msra.mxu0 %v5265
    %5988 = vmatprep.subr.bf16.mxu0 %v5274
    %5989 = vmatpush1.bf16.msra.mxu0 %v5273
    %5990 = vmatprep.subr.bf16.mxu0 %v5282
    %5991 = vmatpush1.bf16.msra.mxu0 %v5281
    %5992 = vmatprep.subr.bf16.mxu0 %v5290
    %5993 = vmatpush1.bf16.msra.mxu0 %v5289
    %5994 = vmatprep.subr.bf16.mxu0 %v5298
    %5995 = vmatpush1.bf16.msra.mxu0 %v5297
    %5996 = vmatprep.subr.bf16.mxu0 %v5306
    %5997 = vmatpush1.bf16.msra.mxu0 %v5305
    %5998 = vmatprep.subr.bf16.mxu0 %v5314
    %5999 = vmatpush1.bf16.msra.mxu0 %v5313
    %6000 = vmatprep.subr.bf16.mxu0 %v5322
    %6001 = vmatpush1.bf16.msra.mxu0 %v5321
    %6002 = vmatprep.subr.bf16.mxu0 %v5330
    %6003 = vmatpush1.bf16.msra.mxu0 %v5329
    %6004 = vmatprep.mubr.bf16.mxu0 %v2734
    %6005 = vmatmul.mubr.bf16.gmra.mrb[0].mxu0 %v2733
    %v6006 = vpop.f32.mrb[0].mxu0
    %v6007 = vadd.f32 %v5966, %v6006
    %v6008 = vpop.f32.mrb[0].mxu0
    %v6009 = vadd.f32 %v5968, %v6008
    %v6010 = vpop.f32.mrb[0].mxu0
    %v6011 = vpop.f32.mrb[0].mxu0
    %6012 = vdwg.mxu0
    %6013 = vmatprep.subr.bf16.mxu0 %v4828
    %6014 = vmatpush1.bf16.msra.mxu0 %v4827
    %6015 = vmatprep.subr.bf16.mxu0 %v4836
    %6016 = vmatpush1.bf16.msra.mxu0 %v4835
    %6017 = vmatprep.subr.bf16.mxu0 %v4844
    %6018 = vmatpush1.bf16.msra.mxu0 %v4843
    %6019 = vmatprep.subr.bf16.mxu0 %v4852
    %6020 = vmatpush1.bf16.msra.mxu0 %v4851
    %6021 = vmatprep.subr.bf16.mxu0 %v4860
    %6022 = vmatpush1.bf16.msra.mxu0 %v4859
    %6023 = vmatprep.subr.bf16.mxu0 %v4868
    %6024 = vmatpush1.bf16.msra.mxu0 %v4867
    %6025 = vmatprep.subr.bf16.mxu0 %v4876
    %6026 = vmatpush1.bf16.msra.mxu0 %v4875
    %6027 = vmatprep.subr.bf16.mxu0 %v4884
    %6028 = vmatpush1.bf16.msra.mxu0 %v4883
    %6029 = vmatprep.subr.bf16.mxu0 %v4892
    %6030 = vmatpush1.bf16.msra.mxu0 %v4891
    %6031 = vmatprep.subr.bf16.mxu0 %v4900
    %6032 = vmatpush1.bf16.msra.mxu0 %v4899
    %6033 = vmatprep.subr.bf16.mxu0 %v4908
    %6034 = vmatpush1.bf16.msra.mxu0 %v4907
    %6035 = vmatprep.subr.bf16.mxu0 %v4916
    %6036 = vmatpush1.bf16.msra.mxu0 %v4915
    %6037 = vmatprep.subr.bf16.mxu0 %v4924
    %6038 = vmatpush1.bf16.msra.mxu0 %v4923
    %6039 = vmatprep.subr.bf16.mxu0 %v4932
    %6040 = vmatpush1.bf16.msra.mxu0 %v4931
    %6041 = vmatprep.subr.bf16.mxu0 %v4940
    %6042 = vmatpush1.bf16.msra.mxu0 %v4939
    %6043 = vmatprep.subr.bf16.mxu0 %v4948
    %6044 = vmatpush1.bf16.msra.mxu0 %v4947
    %6045 = vmatprep.mubr.bf16.mxu0 %v2728
    %6046 = vmatmul.mubr.bf16.gmra.mrb[0].mxu0 %v2727
    %v6047 = vpop.f32.mrb[0].mxu0
    %v6048 = vadd.f32 %v3260, %v6047
    %v6049 = vpop.f32.mrb[0].mxu0
    %v6050 = vadd.f32 %v3264, %v6049
    %v6051 = vpop.f32.mrb[0].mxu0
    %v6052 = vpop.f32.mrb[0].mxu0
    %6053 = vdwg.mxu0
    %6054 = vmatprep.subr.bf16.mxu0 %v4956
    %6055 = vmatpush1.bf16.msra.mxu0 %v4955
    %6056 = vmatprep.subr.bf16.mxu0 %v4964
    %6057 = vmatpush1.bf16.msra.mxu0 %v4963
    %6058 = vmatprep.subr.bf16.mxu0 %v4972
    %6059 = vmatpush1.bf16.msra.mxu0 %v4971
    %6060 = vmatprep.subr.bf16.mxu0 %v4980
    %6061 = vmatpush1.bf16.msra.mxu0 %v4979
    %6062 = vmatprep.subr.bf16.mxu0 %v4988
    %6063 = vmatpush1.bf16.msra.mxu0 %v4987
    %6064 = vmatprep.subr.bf16.mxu0 %v4996
    %6065 = vmatpush1.bf16.msra.mxu0 %v4995
    %6066 = vmatprep.subr.bf16.mxu0 %v5004
    %6067 = vmatpush1.bf16.msra.mxu0 %v5003
    %6068 = vmatprep.subr.bf16.mxu0 %v5012
    %6069 = vmatpush1.bf16.msra.mxu0 %v5011
    %6070 = vmatprep.subr.bf16.mxu0 %v5020
    %6071 = vmatpush1.bf16.msra.mxu0 %v5019
    %6072 = vmatprep.subr.bf16.mxu0 %v5028
    %6073 = vmatpush1.bf16.msra.mxu0 %v5027
    %6074 = vmatprep.subr.bf16.mxu0 %v5036
    %6075 = vmatpush1.bf16.msra.mxu0 %v5035
    %6076 = vmatprep.subr.bf16.mxu0 %v5044
    %6077 = vmatpush1.bf16.msra.mxu0 %v5043
    %6078 = vmatprep.subr.bf16.mxu0 %v5052
    %6079 = vmatpush1.bf16.msra.mxu0 %v5051
    %6080 = vmatprep.subr.bf16.mxu0 %v5060
    %6081 = vmatpush1.bf16.msra.mxu0 %v5059
    %6082 = vmatprep.subr.bf16.mxu0 %v5068
    %6083 = vmatpush1.bf16.msra.mxu0 %v5067
    %6084 = vmatprep.subr.bf16.mxu0 %v5076
    %6085 = vmatpush1.bf16.msra.mxu0 %v5075
    %6086 = vmatprep.mubr.bf16.mxu0 %v2730
    %6087 = vmatmul.mubr.bf16.gmra.mrb[0].mxu0 %v2729
    %v6088 = vpop.f32.mrb[0].mxu0
    %v6089 = vadd.f32 %v6048, %v6088
    %v6090 = vpop.f32.mrb[0].mxu0
    %v6091 = vadd.f32 %v6050, %v6090
    %v6092 = vpop.f32.mrb[0].mxu0
    %v6093 = vpop.f32.mrb[0].mxu0
    %6094 = vdwg.mxu0
    %6095 = vmatprep.subr.bf16.mxu0 %v5084
    %6096 = vmatpush1.bf16.msra.mxu0 %v5083
    %6097 = vmatprep.subr.bf16.mxu0 %v5092
    %6098 = vmatpush1.bf16.msra.mxu0 %v5091
    %6099 = vmatprep.subr.bf16.mxu0 %v5100
    %6100 = vmatpush1.bf16.msra.mxu0 %v5099
    %6101 = vmatprep.subr.bf16.mxu0 %v5108
    %6102 = vmatpush1.bf16.msra.mxu0 %v5107
    %6103 = vmatprep.subr.bf16.mxu0 %v5116
    %6104 = vmatpush1.bf16.msra.mxu0 %v5115
    %6105 = vmatprep.subr.bf16.mxu0 %v5124
    %6106 = vmatpush1.bf16.msra.mxu0 %v5123
    %6107 = vmatprep.subr.bf16.mxu0 %v5132
    %6108 = vmatpush1.bf16.msra.mxu0 %v5131
    %6109 = vmatprep.subr.bf16.mxu0 %v5140
    %6110 = vmatpush1.bf16.msra.mxu0 %v5139
    %6111 = vmatprep.subr.bf16.mxu0 %v5148
    %6112 = vmatpush1.bf16.msra.mxu0 %v5147
    %6113 = vmatprep.subr.bf16.mxu0 %v5156
    %6114 = vmatpush1.bf16.msra.mxu0 %v5155
    %6115 = vmatprep.subr.bf16.mxu0 %v5164
    %6116 = vmatpush1.bf16.msra.mxu0 %v5163
    %6117 = vmatprep.subr.bf16.mxu0 %v5172
    %6118 = vmatpush1.bf16.msra.mxu0 %v5171
    %6119 = vmatprep.subr.bf16.mxu0 %v5180
    %6120 = vmatpush1.bf16.msra.mxu0 %v5179
    %6121 = vmatprep.subr.bf16.mxu0 %v5188
    %6122 = vmatpush1.bf16.msra.mxu0 %v5187
    %6123 = vmatprep.subr.bf16.mxu0 %v5196
    %6124 = vmatpush1.bf16.msra.mxu0 %v5195
    %6125 = vmatprep.subr.bf16.mxu0 %v5204
    %6126 = vmatpush1.bf16.msra.mxu0 %v5203
    %6127 = vmatprep.mubr.bf16.mxu0 %v2732
    %6128 = vmatmul.mubr.bf16.gmra.mrb[0].mxu0 %v2731
    %v6129 = vpop.f32.mrb[0].mxu0
    %v6130 = vadd.f32 %v6089, %v6129
    %v6131 = vpop.f32.mrb[0].mxu0
    %v6132 = vadd.f32 %v6091, %v6131
    %v6133 = vpop.f32.mrb[0].mxu0
    %v6134 = vpop.f32.mrb[0].mxu0
    %6135 = vdwg.mxu0
    %6136 = vmatprep.subr.bf16.mxu0 %v5212
    %6137 = vmatpush1.bf16.msra.mxu0 %v5211
    %6138 = vmatprep.subr.bf16.mxu0 %v5220
    %6139 = vmatpush1.bf16.msra.mxu0 %v5219
    %6140 = vmatprep.subr.bf16.mxu0 %v5228
    %6141 = vmatpush1.bf16.msra.mxu0 %v5227
    %6142 = vmatprep.subr.bf16.mxu0 %v5236
    %6143 = vmatpush1.bf16.msra.mxu0 %v5235
    %6144 = vmatprep.subr.bf16.mxu0 %v5244
    %6145 = vmatpush1.bf16.msra.mxu0 %v5243
    %6146 = vmatprep.subr.bf16.mxu0 %v5252
    %6147 = vmatpush1.bf16.msra.mxu0 %v5251
    %6148 = vmatprep.subr.bf16.mxu0 %v5260
    %6149 = vmatpush1.bf16.msra.mxu0 %v5259
    %6150 = vmatprep.subr.bf16.mxu0 %v5268
    %6151 = vmatpush1.bf16.msra.mxu0 %v5267
    %6152 = vmatprep.subr.bf16.mxu0 %v5276
    %6153 = vmatpush1.bf16.msra.mxu0 %v5275
    %6154 = vmatprep.subr.bf16.mxu0 %v5284
    %6155 = vmatpush1.bf16.msra.mxu0 %v5283
    %6156 = vmatprep.subr.bf16.mxu0 %v5292
    %6157 = vmatpush1.bf16.msra.mxu0 %v5291
    %6158 = vmatprep.subr.bf16.mxu0 %v5300
    %6159 = vmatpush1.bf16.msra.mxu0 %v5299
    %6160 = vmatprep.subr.bf16.mxu0 %v5308
    %6161 = vmatpush1.bf16.msra.mxu0 %v5307
    %6162 = vmatprep.subr.bf16.mxu0 %v5316
    %6163 = vmatpush1.bf16.msra.mxu0 %v5315
    %6164 = vmatprep.subr.bf16.mxu0 %v5324
    %6165 = vmatpush1.bf16.msra.mxu0 %v5323
    %6166 = vmatprep.subr.bf16.mxu0 %v5332
    %6167 = vmatpush1.bf16.msra.mxu0 %v5331
    %6168 = vmatprep.mubr.bf16.mxu0 %v2734
    %6169 = vmatmul.mubr.bf16.gmra.mrb[0].mxu0 %v2733
    %v6170 = vpop.f32.mrb[0].mxu0
    %v6171 = vadd.f32 %v6130, %v6170
    %v6172 = vpop.f32.mrb[0].mxu0
    %v6173 = vadd.f32 %v6132, %v6172
    %v6174 = vpop.f32.mrb[0].mxu0
    %v6175 = vpop.f32.mrb[0].mxu0
    %6176 = vdwg.mxu0
    %6177 = vmatprep.subr.bf16.mxu0 %v4830
    %6178 = vmatpush1.bf16.msra.mxu0 %v4829
    %6179 = vmatprep.subr.bf16.mxu0 %v4838
    %6180 = vmatpush1.bf16.msra.mxu0 %v4837
    %6181 = vmatprep.subr.bf16.mxu0 %v4846
    %6182 = vmatpush1.bf16.msra.mxu0 %v4845
    %6183 = vmatprep.subr.bf16.mxu0 %v4854
    %6184 = vmatpush1.bf16.msra.mxu0 %v4853
    %6185 = vmatprep.subr.bf16.mxu0 %v4862
    %6186 = vmatpush1.bf16.msra.mxu0 %v4861
    %6187 = vmatprep.subr.bf16.mxu0 %v4870
    %6188 = vmatpush1.bf16.msra.mxu0 %v4869
    %6189 = vmatprep.subr.bf16.mxu0 %v4878
    %6190 = vmatpush1.bf16.msra.mxu0 %v4877
    %6191 = vmatprep.subr.bf16.mxu0 %v4886
    %6192 = vmatpush1.bf16.msra.mxu0 %v4885
    %6193 = vmatprep.subr.bf16.mxu0 %v4894
    %6194 = vmatpush1.bf16.msra.mxu0 %v4893
    %6195 = vmatprep.subr.bf16.mxu0 %v4902
    %6196 = vmatpush1.bf16.msra.mxu0 %v4901
    %6197 = vmatprep.subr.bf16.mxu0 %v4910
    %6198 = vmatpush1.bf16.msra.mxu0 %v4909
    %6199 = vmatprep.subr.bf16.mxu0 %v4918
    %6200 = vmatpush1.bf16.msra.mxu0 %v4917
    %6201 = vmatprep.subr.bf16.mxu0 %v4926
    %6202 = vmatpush1.bf16.msra.mxu0 %v4925
    %6203 = vmatprep.subr.bf16.mxu0 %v4934
    %6204 = vmatpush1.bf16.msra.mxu0 %v4933
    %6205 = vmatprep.subr.bf16.mxu0 %v4942
    %6206 = vmatpush1.bf16.msra.mxu0 %v4941
    %6207 = vmatprep.subr.bf16.mxu0 %v4950
    %6208 = vmatpush1.bf16.msra.mxu0 %v4949
    %6209 = vmatprep.mubr.bf16.mxu0 %v2728
    %6210 = vmatmul.mubr.bf16.gmra.mrb[0].mxu0 %v2727
    %v6211 = vpop.f32.mrb[0].mxu0
    %v6212 = vadd.f32 %v3268, %v6211
    %v6213 = vpop.f32.mrb[0].mxu0
    %v6214 = vadd.f32 %v3272, %v6213
    %v6215 = vpop.f32.mrb[0].mxu0
    %v6216 = vpop.f32.mrb[0].mxu0
    %6217 = vdwg.mxu0
    %6218 = vmatprep.subr.bf16.mxu0 %v4958
    %6219 = vmatpush1.bf16.msra.mxu0 %v4957
    %6220 = vmatprep.subr.bf16.mxu0 %v4966
    %6221 = vmatpush1.bf16.msra.mxu0 %v4965
    %6222 = vmatprep.subr.bf16.mxu0 %v4974
    %6223 = vmatpush1.bf16.msra.mxu0 %v4973
    %6224 = vmatprep.subr.bf16.mxu0 %v4982
    %6225 = vmatpush1.bf16.msra.mxu0 %v4981
    %6226 = vmatprep.subr.bf16.mxu0 %v4990
    %6227 = vmatpush1.bf16.msra.mxu0 %v4989
    %6228 = vmatprep.subr.bf16.mxu0 %v4998
    %6229 = vmatpush1.bf16.msra.mxu0 %v4997
    %6230 = vmatprep.subr.bf16.mxu0 %v5006
    %6231 = vmatpush1.bf16.msra.mxu0 %v5005
    %6232 = vmatprep.subr.bf16.mxu0 %v5014
    %6233 = vmatpush1.bf16.msra.mxu0 %v5013
    %6234 = vmatprep.subr.bf16.mxu0 %v5022
    %6235 = vmatpush1.bf16.msra.mxu0 %v5021
    %6236 = vmatprep.subr.bf16.mxu0 %v5030
    %6237 = vmatpush1.bf16.msra.mxu0 %v5029
    %6238 = vmatprep.subr.bf16.mxu0 %v5038
    %6239 = vmatpush1.bf16.msra.mxu0 %v5037
    %6240 = vmatprep.subr.bf16.mxu0 %v5046
    %6241 = vmatpush1.bf16.msra.mxu0 %v5045
    %6242 = vmatprep.subr.bf16.mxu0 %v5054
    %6243 = vmatpush1.bf16.msra.mxu0 %v5053
    %6244 = vmatprep.subr.bf16.mxu0 %v5062
    %6245 = vmatpush1.bf16.msra.mxu0 %v5061
    %6246 = vmatprep.subr.bf16.mxu0 %v5070
    %6247 = vmatpush1.bf16.msra.mxu0 %v5069
    %6248 = vmatprep.subr.bf16.mxu0 %v5078
    %6249 = vmatpush1.bf16.msra.mxu0 %v5077
    %6250 = vmatprep.mubr.bf16.mxu0 %v2730
    %6251 = vmatmul.mubr.bf16.gmra.mrb[0].mxu0 %v2729
    %v6252 = vpop.f32.mrb[0].mxu0
    %v6253 = vadd.f32 %v6212, %v6252
    %v6254 = vpop.f32.mrb[0].mxu0
    %v6255 = vadd.f32 %v6214, %v6254
    %v6256 = vpop.f32.mrb[0].mxu0
    %v6257 = vpop.f32.mrb[0].mxu0
    %6258 = vdwg.mxu0
    %6259 = vmatprep.subr.bf16.mxu0 %v5086
    %6260 = vmatpush1.bf16.msra.mxu0 %v5085
    %6261 = vmatprep.subr.bf16.mxu0 %v5094
    %6262 = vmatpush1.bf16.msra.mxu0 %v5093
    %6263 = vmatprep.subr.bf16.mxu0 %v5102
    %6264 = vmatpush1.bf16.msra.mxu0 %v5101
    %6265 = vmatprep.subr.bf16.mxu0 %v5110
    %6266 = vmatpush1.bf16.msra.mxu0 %v5109
    %6267 = vmatprep.subr.bf16.mxu0 %v5118
    %6268 = vmatpush1.bf16.msra.mxu0 %v5117
    %6269 = vmatprep.subr.bf16.mxu0 %v5126
    %6270 = vmatpush1.bf16.msra.mxu0 %v5125
    %6271 = vmatprep.subr.bf16.mxu0 %v5134
    %6272 = vmatpush1.bf16.msra.mxu0 %v5133
    %6273 = vmatprep.subr.bf16.mxu0 %v5142
    %6274 = vmatpush1.bf16.msra.mxu0 %v5141
    %6275 = vmatprep.subr.bf16.mxu0 %v5150
    %6276 = vmatpush1.bf16.msra.mxu0 %v5149
    %6277 = vmatprep.subr.bf16.mxu0 %v5158
    %6278 = vmatpush1.bf16.msra.mxu0 %v5157
    %6279 = vmatprep.subr.bf16.mxu0 %v5166
    %6280 = vmatpush1.bf16.msra.mxu0 %v5165
    %6281 = vmatprep.subr.bf16.mxu0 %v5174
    %6282 = vmatpush1.bf16.msra.mxu0 %v5173
    %6283 = vmatprep.subr.bf16.mxu0 %v5182
    %6284 = vmatpush1.bf16.msra.mxu0 %v5181
    %6285 = vmatprep.subr.bf16.mxu0 %v5190
    %6286 = vmatpush1.bf16.msra.mxu0 %v5189
    %6287 = vmatprep.subr.bf16.mxu0 %v5198
    %6288 = vmatpush1.bf16.msra.mxu0 %v5197
    %6289 = vmatprep.subr.bf16.mxu0 %v5206
    %6290 = vmatpush1.bf16.msra.mxu0 %v5205
    %6291 = vmatprep.mubr.bf16.mxu0 %v2732
    %6292 = vmatmul.mubr.bf16.gmra.mrb[0].mxu0 %v2731
    %v6293 = vpop.f32.mrb[0].mxu0
    %v6294 = vadd.f32 %v6253, %v6293
    %v6295 = vpop.f32.mrb[0].mxu0
    %v6296 = vadd.f32 %v6255, %v6295
    %v6297 = vpop.f32.mrb[0].mxu0
    %v6298 = vpop.f32.mrb[0].mxu0
    %6299 = vdwg.mxu0
    %6300 = vmatprep.subr.bf16.mxu0 %v5214
    %6301 = vmatpush1.bf16.msra.mxu0 %v5213
    %6302 = vmatprep.subr.bf16.mxu0 %v5222
    %6303 = vmatpush1.bf16.msra.mxu0 %v5221
    %6304 = vmatprep.subr.bf16.mxu0 %v5230
    %6305 = vmatpush1.bf16.msra.mxu0 %v5229
    %6306 = vmatprep.subr.bf16.mxu0 %v5238
    %6307 = vmatpush1.bf16.msra.mxu0 %v5237
    %6308 = vmatprep.subr.bf16.mxu0 %v5246
    %6309 = vmatpush1.bf16.msra.mxu0 %v5245
    %6310 = vmatprep.subr.bf16.mxu0 %v5254
    %6311 = vmatpush1.bf16.msra.mxu0 %v5253
    %6312 = vmatprep.subr.bf16.mxu0 %v5262
    %6313 = vmatpush1.bf16.msra.mxu0 %v5261
    %6314 = vmatprep.subr.bf16.mxu0 %v5270
    %6315 = vmatpush1.bf16.msra.mxu0 %v5269
    %6316 = vmatprep.subr.bf16.mxu0 %v5278
    %6317 = vmatpush1.bf16.msra.mxu0 %v5277
    %6318 = vmatprep.subr.bf16.mxu0 %v5286
    %6319 = vmatpush1.bf16.msra.mxu0 %v5285
    %6320 = vmatprep.subr.bf16.mxu0 %v5294
    %6321 = vmatpush1.bf16.msra.mxu0 %v5293
    %6322 = vmatprep.subr.bf16.mxu0 %v5302
    %6323 = vmatpush1.bf16.msra.mxu0 %v5301
    %6324 = vmatprep.subr.bf16.mxu0 %v5310
    %6325 = vmatpush1.bf16.msra.mxu0 %v5309
    %6326 = vmatprep.subr.bf16.mxu0 %v5318
    %6327 = vmatpush1.bf16.msra.mxu0 %v5317
    %6328 = vmatprep.subr.bf16.mxu0 %v5326
    %6329 = vmatpush1.bf16.msra.mxu0 %v5325
    %6330 = vmatprep.subr.bf16.mxu0 %v5334
    %6331 = vmatpush1.bf16.msra.mxu0 %v5333
    %6332 = vmatprep.mubr.bf16.mxu0 %v2734
    %6333 = vmatmul.mubr.bf16.gmra.mrb[0].mxu0 %v2733
    %v6334 = vpop.f32.mrb[0].mxu0
    %v6335 = vadd.f32 %v6294, %v6334
    %v6336 = vpop.f32.mrb[0].mxu0
    %v6337 = vadd.f32 %v6296, %v6336
    %v6338 = vpop.f32.mrb[0].mxu0
    %v6339 = vpop.f32.mrb[0].mxu0
    %6340 = vdwg.mxu0
    %6341 = vmatprep.subr.bf16.mxu0 %v4832
    %6342 = vmatpush1.bf16.msra.mxu0 %v4831
    %6343 = vmatprep.subr.bf16.mxu0 %v4840
    %6344 = vmatpush1.bf16.msra.mxu0 %v4839
    %6345 = vmatprep.subr.bf16.mxu0 %v4848
    %6346 = vmatpush1.bf16.msra.mxu0 %v4847
    %6347 = vmatprep.subr.bf16.mxu0 %v4856
    %6348 = vmatpush1.bf16.msra.mxu0 %v4855
    %6349 = vmatprep.subr.bf16.mxu0 %v4864
    %6350 = vmatpush1.bf16.msra.mxu0 %v4863
    %6351 = vmatprep.subr.bf16.mxu0 %v4872
    %6352 = vmatpush1.bf16.msra.mxu0 %v4871
    %6353 = vmatprep.subr.bf16.mxu0 %v4880
    %6354 = vmatpush1.bf16.msra.mxu0 %v4879
    %6355 = vmatprep.subr.bf16.mxu0 %v4888
    %6356 = vmatpush1.bf16.msra.mxu0 %v4887
    %6357 = vmatprep.subr.bf16.mxu0 %v4896
    %6358 = vmatpush1.bf16.msra.mxu0 %v4895
    %6359 = vmatprep.subr.bf16.mxu0 %v4904
    %6360 = vmatpush1.bf16.msra.mxu0 %v4903
    %6361 = vmatprep.subr.bf16.mxu0 %v4912
    %6362 = vmatpush1.bf16.msra.mxu0 %v4911
    %6363 = vmatprep.subr.bf16.mxu0 %v4920
    %6364 = vmatpush1.bf16.msra.mxu0 %v4919
    %6365 = vmatprep.subr.bf16.mxu0 %v4928
    %6366 = vmatpush1.bf16.msra.mxu0 %v4927
    %6367 = vmatprep.subr.bf16.mxu0 %v4936
    %6368 = vmatpush1.bf16.msra.mxu0 %v4935
    %6369 = vmatprep.subr.bf16.mxu0 %v4944
    %6370 = vmatpush1.bf16.msra.mxu0 %v4943
    %6371 = vmatprep.subr.bf16.mxu0 %v4952
    %6372 = vmatpush1.bf16.msra.mxu0 %v4951
    %6373 = vmatprep.mubr.bf16.mxu0 %v2728
    %6374 = vmatmul.mubr.bf16.gmra.mrb[0].mxu0 %v2727
    %v6375 = vpop.f32.mrb[0].mxu0
    %v6376 = vadd.f32 %v3276, %v6375
    %v6377 = vpop.f32.mrb[0].mxu0
    %v6378 = vadd.f32 %v3280, %v6377
    %v6379 = vpop.f32.mrb[0].mxu0
    %v6380 = vpop.f32.mrb[0].mxu0
    %6381 = vdwg.mxu0
    %6382 = vmatprep.subr.bf16.mxu0 %v4960
    %6383 = vmatpush1.bf16.msra.mxu0 %v4959
    %6384 = vmatprep.subr.bf16.mxu0 %v4968
    %6385 = vmatpush1.bf16.msra.mxu0 %v4967
    %6386 = vmatprep.subr.bf16.mxu0 %v4976
    %6387 = vmatpush1.bf16.msra.mxu0 %v4975
    %6388 = vmatprep.subr.bf16.mxu0 %v4984
    %6389 = vmatpush1.bf16.msra.mxu0 %v4983
    %6390 = vmatprep.subr.bf16.mxu0 %v4992
    %6391 = vmatpush1.bf16.msra.mxu0 %v4991
    %6392 = vmatprep.subr.bf16.mxu0 %v5000
    %6393 = vmatpush1.bf16.msra.mxu0 %v4999
    %6394 = vmatprep.subr.bf16.mxu0 %v5008
    %6395 = vmatpush1.bf16.msra.mxu0 %v5007
    %6396 = vmatprep.subr.bf16.mxu0 %v5016
    %6397 = vmatpush1.bf16.msra.mxu0 %v5015
    %6398 = vmatprep.subr.bf16.mxu0 %v5024
    %6399 = vmatpush1.bf16.msra.mxu0 %v5023
    %6400 = vmatprep.subr.bf16.mxu0 %v5032
    %6401 = vmatpush1.bf16.msra.mxu0 %v5031
    %6402 = vmatprep.subr.bf16.mxu0 %v5040
    %6403 = vmatpush1.bf16.msra.mxu0 %v5039
    %6404 = vmatprep.subr.bf16.mxu0 %v5048
    %6405 = vmatpush1.bf16.msra.mxu0 %v5047
    %6406 = vmatprep.subr.bf16.mxu0 %v5056
    %6407 = vmatpush1.bf16.msra.mxu0 %v5055
    %6408 = vmatprep.subr.bf16.mxu0 %v5064
    %6409 = vmatpush1.bf16.msra.mxu0 %v5063
    %6410 = vmatprep.subr.bf16.mxu0 %v5072
    %6411 = vmatpush1.bf16.msra.mxu0 %v5071
    %6412 = vmatprep.subr.bf16.mxu0 %v5080
    %6413 = vmatpush1.bf16.msra.mxu0 %v5079
    %6414 = vmatprep.mubr.bf16.mxu0 %v2730
    %6415 = vmatmul.mubr.bf16.gmra.mrb[0].mxu0 %v2729
    %v6416 = vpop.f32.mrb[0].mxu0
    %v6417 = vadd.f32 %v6376, %v6416
    %v6418 = vpop.f32.mrb[0].mxu0
    %v6419 = vadd.f32 %v6378, %v6418
    %v6420 = vpop.f32.mrb[0].mxu0
    %v6421 = vpop.f32.mrb[0].mxu0
    %6422 = vdwg.mxu0
    %6423 = vmatprep.subr.bf16.mxu0 %v5088
    %6424 = vmatpush1.bf16.msra.mxu0 %v5087
    %6425 = vmatprep.subr.bf16.mxu0 %v5096
    %6426 = vmatpush1.bf16.msra.mxu0 %v5095
    %6427 = vmatprep.subr.bf16.mxu0 %v5104
    %6428 = vmatpush1.bf16.msra.mxu0 %v5103
    %6429 = vmatprep.subr.bf16.mxu0 %v5112
    %6430 = vmatpush1.bf16.msra.mxu0 %v5111
    %6431 = vmatprep.subr.bf16.mxu0 %v5120
    %6432 = vmatpush1.bf16.msra.mxu0 %v5119
    %6433 = vmatprep.subr.bf16.mxu0 %v5128
    %6434 = vmatpush1.bf16.msra.mxu0 %v5127
    %6435 = vmatprep.subr.bf16.mxu0 %v5136
    %6436 = vmatpush1.bf16.msra.mxu0 %v5135
    %6437 = vmatprep.subr.bf16.mxu0 %v5144
    %6438 = vmatpush1.bf16.msra.mxu0 %v5143
    %6439 = vmatprep.subr.bf16.mxu0 %v5152
    %6440 = vmatpush1.bf16.msra.mxu0 %v5151
    %6441 = vmatprep.subr.bf16.mxu0 %v5160
    %6442 = vmatpush1.bf16.msra.mxu0 %v5159
    %6443 = vmatprep.subr.bf16.mxu0 %v5168
    %6444 = vmatpush1.bf16.msra.mxu0 %v5167
    %6445 = vmatprep.subr.bf16.mxu0 %v5176
    %6446 = vmatpush1.bf16.msra.mxu0 %v5175
    %6447 = vmatprep.subr.bf16.mxu0 %v5184
    %6448 = vmatpush1.bf16.msra.mxu0 %v5183
    %6449 = vmatprep.subr.bf16.mxu0 %v5192
    %6450 = vmatpush1.bf16.msra.mxu0 %v5191
    %6451 = vmatprep.subr.bf16.mxu0 %v5200
    %6452 = vmatpush1.bf16.msra.mxu0 %v5199
    %6453 = vmatprep.subr.bf16.mxu0 %v5208
    %6454 = vmatpush1.bf16.msra.mxu0 %v5207
    %6455 = vmatprep.mubr.bf16.mxu0 %v2732
    %6456 = vmatmul.mubr.bf16.gmra.mrb[0].mxu0 %v2731
    %v6457 = vpop.f32.mrb[0].mxu0
    %v6458 = vadd.f32 %v6417, %v6457
    %v6459 = vpop.f32.mrb[0].mxu0
    %v6460 = vadd.f32 %v6419, %v6459
    %v6461 = vpop.f32.mrb[0].mxu0
    %v6462 = vpop.f32.mrb[0].mxu0
    %6463 = vdwg.mxu0
    %6464 = vmatprep.subr.bf16.mxu0 %v5216
    %6465 = vmatpush1.bf16.msra.mxu0 %v5215
    %6466 = vmatprep.subr.bf16.mxu0 %v5224
    %6467 = vmatpush1.bf16.msra.mxu0 %v5223
    %6468 = vmatprep.subr.bf16.mxu0 %v5232
    %6469 = vmatpush1.bf16.msra.mxu0 %v5231
    %6470 = vmatprep.subr.bf16.mxu0 %v5240
    %6471 = vmatpush1.bf16.msra.mxu0 %v5239
    %6472 = vmatprep.subr.bf16.mxu0 %v5248
    %6473 = vmatpush1.bf16.msra.mxu0 %v5247
    %6474 = vmatprep.subr.bf16.mxu0 %v5256
    %6475 = vmatpush1.bf16.msra.mxu0 %v5255
    %6476 = vmatprep.subr.bf16.mxu0 %v5264
    %6477 = vmatpush1.bf16.msra.mxu0 %v5263
    %6478 = vmatprep.subr.bf16.mxu0 %v5272
    %6479 = vmatpush1.bf16.msra.mxu0 %v5271
    %6480 = vmatprep.subr.bf16.mxu0 %v5280
    %6481 = vmatpush1.bf16.msra.mxu0 %v5279
    %6482 = vmatprep.subr.bf16.mxu0 %v5288
    %6483 = vmatpush1.bf16.msra.mxu0 %v5287
    %6484 = vmatprep.subr.bf16.mxu0 %v5296
    %6485 = vmatpush1.bf16.msra.mxu0 %v5295
    %6486 = vmatprep.subr.bf16.mxu0 %v5304
    %6487 = vmatpush1.bf16.msra.mxu0 %v5303
    %6488 = vmatprep.subr.bf16.mxu0 %v5312
    %6489 = vmatpush1.bf16.msra.mxu0 %v5311
    %6490 = vmatprep.subr.bf16.mxu0 %v5320
    %6491 = vmatpush1.bf16.msra.mxu0 %v5319
    %6492 = vmatprep.subr.bf16.mxu0 %v5328
    %6493 = vmatpush1.bf16.msra.mxu0 %v5327
    %6494 = vmatprep.subr.bf16.mxu0 %v5336
    %6495 = vmatpush1.bf16.msra.mxu0 %v5335
    %6496 = vmatprep.mubr.bf16.mxu0 %v2734
    %6497 = vmatmul.mubr.bf16.gmra.mrb[0].mxu0 %v2733
    %v6498 = vpop.f32.mrb[0].mxu0
    %v6499 = vadd.f32 %v6458, %v6498
    %v6500 = vpop.f32.mrb[0].mxu0
    %v6501 = vadd.f32 %v6460, %v6500
    %v6502 = vpop.f32.mrb[0].mxu0
    %v6503 = vpop.f32.mrb[0].mxu0
    %6504 = vdwg.mxu0
    %v6505 = vtanh.pop %v6007
    %v6506 = vtanh.pop %v6009
    %v6507 = vtanh.pop %v6171
    %v6508 = vtanh.pop %v6173
    %v6509 = vtanh.pop %v6335
    %v6510 = vtanh.pop %v6337
    %v6511 = vtanh.pop %v6499
    %v6512 = vtanh.pop %v6501
    %6513 = vst [vmem:[%s9] sm:$0xff] %v6505
    %6514 = vst [vmem:[%s9 + $0x8] sm:$0xff] %v6506
    %6515 = vst [vmem:[%s9 + $0x10] sm:$0xff] %v6507
    %6516 = vst [vmem:[%s9 + $0x18] sm:$0xff] %v6508
    %6517 = vst [vmem:[%s9 + $0x20] sm:$0xff] %v6509
    %6518 = vst [vmem:[%s9 + $0x28] sm:$0xff] %v6510
    %6519 = vst [vmem:[%s9 + $0x30] sm:$0xff] %v6511
    %6520 = vst [vmem:[%s9 + $0x38] sm:$0xff] %v6512
    // Predicated region
    $region70: #{generator_forward.1} parent=1 // pred_check
      _
    $region71: #{generator_forward.1} parent=1 // pred_check_branch
      %6522 = sbr.rel (0) target = $region73
    $region72: #{generator_forward.1} parent=1 // pred_region
      _
    $region73: #{generator_forward.1} parent=1 // pred_fallthru
      _
    // Predicated region
    $region74: #{generator_forward.1} parent=1 // pred_check
      _
    $region75: #{generator_forward.1} parent=1 // pred_check_branch
      %6524 = sbr.rel (0) target = $region77
    $region76: #{generator_forward.1} parent=1 // pred_region
      _
    $region77: #{generator_forward.1} parent=1 // pred_fallthru
      _
    %6525 = vsyncpa [#allocation3], 1
    %6526 = vsyncpa [#allocation5], 1
    %6527 = vsyncpa [#allocation8], 1
    %6528 = vsyncpa [#allocation11], 1
    %6529 = vsyncpa [#allocation14], 1

</llo_original>
